<compile_context>
chip_gen: v7x
topology: tpu7x:2x2x1
jax: 0.10.0
libtpu: 0.0.40
codegen_flags: <defaults>
</compile_context>

<pallas_src>
import jax
import jax.numpy as jnp
from jax import lax
from jax.experimental import pallas as pl
from jax.experimental.pallas import tpu as pltpu


def _make_cosine_head_kernel(tb):
    """tb = batch-tile rows per branch (kernel works on 2*tb fused rows)."""

    def kernel(x1_ref, x2_ref, w1_ref, b1_ref, w2_ref, b2_ref, w3_ref, b3_ref,
               out_ref, s_acc):
        j = pl.program_id(1)

        @pl.when(j == 0)
        def _():
            s_acc[...] = jnp.zeros_like(s_acc)

        # Accumulate the sequence sum of both branches into one (2*TB, E)
        # scratch: rows [0, TB) = branch 1, rows [TB, 2*TB) = branch 2.
        # Inputs may arrive as bf16; widen to f32 before the reduction so the
        # accumulator stays full precision.  (1/S mean scale is folded into W1.)
        s_acc[0:tb, :] = s_acc[0:tb, :] + jnp.sum(
            x1_ref[...].astype(jnp.float32), axis=1)
        s_acc[tb:2 * tb, :] = s_acc[tb:2 * tb, :] + jnp.sum(
            x2_ref[...].astype(jnp.float32), axis=1)

        @pl.when(j == pl.num_programs(1) - 1)
        def _():
            # fc1 -> tanh -> (dropout: identity, eval mode) -> fc2 -> tanh
            #     -> (dropout) -> fc3 -> tanh, both branches fused in one matmul.
            # TODO(synk): training-mode Dropout would need pltpu.prng_* masking.
            z = jnp.tanh(jnp.dot(s_acc[...], w1_ref[...],
                                 preferred_element_type=jnp.float32) + b1_ref[...])
            z = jnp.tanh(jnp.dot(z, w2_ref[...],
                                 preferred_element_type=jnp.float32) + b2_ref[...])
            z = jnp.tanh(jnp.dot(z, w3_ref[...],
                                 preferred_element_type=jnp.float32) + b3_ref[...])
            z1 = z[0:tb, :]
            z2 = z[tb:2 * tb, :]

            # cosine_similarity(z1, z2, dim=1, eps=1e-8) then relu,
            # using rsqrt (EUP) instead of sqrt + divide on the VPU path.
            eps_sq = jnp.float32(1e-16)  # eps**2 with eps = 1e-8
            dot = jnp.sum(z1 * z2, axis=-1, keepdims=True)
            n1_sq = jnp.sum(z1 * z1, axis=-1, keepdims=True)
            n2_sq = jnp.sum(z2 * z2, axis=-1, keepdims=True)
            cos = (dot
                   * lax.rsqrt(jnp.maximum(n1_sq, eps_sq))
                   * lax.rsqrt(jnp.maximum(n2_sq, eps_sq)))
            # Output block kept as (tb, 1); lane-dense layout skipped on purpose
            # (needs tb % 128 == 0 and the output is only B floats).
            out_ref[...] = jnp.maximum(cos, 0.0)  # relu

    return kernel


def _pick_tile(total, desired, multiple):
    """Largest divisor of `total` that is <= desired and a multiple of
    `multiple`; falls back to the full extent if no such divisor exists."""
    desired = min(desired, total)
    best = None
    for cand in range(multiple, desired + 1, multiple):
        if total % cand == 0:
            best = cand
    return best if best is not None else total


def _auto_vmem_limit():
    """Chip-aware scoped-VMEM limit: ~75% of physical VMEM, capped at 96 MiB.

    v7x (64 MiB physical)  -> 48 MiB scoped
    v5e/v6e (128 MiB)      -> 96 MiB scoped
    Unknown / query failure -> assume the smallest generation (v7x).
    """
    phys = None
    try:
        info = pltpu.get_tpu_info()
        phys = getattr(info, "vmem_capacity_bytes", None)
    except Exception:
        phys = None
    if not phys:
        phys = 64 * 1024 * 1024
    return min(int(phys) * 3 // 4, 96 * 1024 * 1024)


def _resident_spec(shape):
    """Full-extent, constant-index block: fetched once, resident in VMEM.

    Single-buffered (pl.Buffered(1)) because the block never changes, so the
    default second pipeline buffer would just waste VMEM (~2.2 MiB total)."""
    index_map = lambda i, j: (0,) * len(shape)
    try:
        return pl.BlockSpec(shape, index_map, pipeline_mode=pl.Buffered(1))
    except TypeError:  # older jax without pipeline_mode: default buffering
        return pl.BlockSpec(shape, index_map)


def cosine_head_forward(x1, x2, params, *, tb=None, ts=None,
                        vmem_limit_bytes=None):
    """x1, x2: (B, S, E) float32 or bfloat16. Returns (B,) float32."""
    B, S, E = x1.shape
    assert x2.shape == (B, S, E)
    assert x1.dtype == x2.dtype
    w1, b1, w2, b2, w3, b3 = params
    assert w1.shape[0] == E

    itemsize = int(jnp.dtype(x1.dtype).itemsize)
    if vmem_limit_bytes is None:
        vmem_limit_bytes = _auto_vmem_limit()

    # ---- Batch tile: as large as possible, but force >= 2 tiles when B allows
    # so the "parallel" axis shards across both TensorCores on v7x (free on
    # the single-core v5e/v6e). Must divide B and be a multiple of 8 (or = B).
    desired_tb = 128 if tb is None else tb
    desired_tb = min(desired_tb, B)
    if B >= 16:
        desired_tb = min(desired_tb, B // 2)
    tb = _pick_tile(B, desired_tb, 8)
    assert B % tb == 0 and (tb == B or tb % 8 == 0), (B, tb)

    # ---- Sequence tile: fill the VMEM budget (minus resident weights, the
    # accumulator scratch and headroom for compiler-internal scratch) with the
    # two double-buffered (tb, ts, E) input tiles.  Capped at 64 rows; bf16
    # prefers ts multiples of 16 (sublane packing).
    weights_bytes = sum(int(p.size) * int(jnp.dtype(p.dtype).itemsize)
                        for p in (w1, b1, w2, b2, w3, b3))
    scratch_bytes = 2 * tb * E * 4
    headroom = max(4 * 1024 * 1024, vmem_limit_bytes // 10)
    input_budget = vmem_limit_bytes - weights_bytes - scratch_bytes - headroom
    bytes_per_seq_row = 2 * 2 * tb * E * itemsize  # 2 inputs x double buffer
    ts_mult = 16 if itemsize < 4 else 8
    ts_cap = max(ts_mult, min(64, input_budget // bytes_per_seq_row))
    if ts is None:
        ts = _pick_tile(S, int(ts_cap), ts_mult)
    else:
        ts = min(ts, S)
    assert S % ts == 0 and (ts == S or ts % 8 == 0), (S, ts)
    nb, ns = B // tb, S // ts

    # Fold the 1/S mean scale into W1 (one tiny scale; exact for power-of-2 S),
    # so the kernel only accumulates the raw sequence sum.
    w1 = (w1 * jnp.float32(1.0 / S)).astype(jnp.float32)

    grid_spec = pltpu.PrefetchScalarGridSpec(
        num_scalar_prefetch=0,
        grid=(nb, ns),
        in_specs=[
            # Batch/sequence-tiled inputs (double-buffered by the pipeline).
            pl.BlockSpec((tb, ts, E), lambda i, j: (i, j, 0)),
            pl.BlockSpec((tb, ts, E), lambda i, j: (i, j, 0)),
            # Weights/biases: resident, single-buffered.
            _resident_spec(w1.shape),
            _resident_spec(b1.shape),
            _resident_spec(w2.shape),
            _resident_spec(b2.shape),
            _resident_spec(w3.shape),
            _resident_spec(b3.shape),
        ],
        out_specs=pl.BlockSpec((tb, 1), lambda i, j: (i, 0)),
        scratch_shapes=[pltpu.VMEM((2 * tb, E), jnp.float32)],
    )

    # Advisory cost estimate: this call is a large memory-bound streaming op.
    in_bytes = 2 * B * S * E * itemsize
    mlp_flops = 2 * (2 * B) * (E * 512 + 512 * 256 + 256 * 128)
    red_flops = 2 * B * S * E
    cos_flops = 2 * (2 * B) * 128 * 3
    cost = pl.CostEstimate(
        flops=int(red_flops + mlp_flops + cos_flops),
        transcendentals=int(2 * B * (512 + 256 + 128)),
        bytes_accessed=int(in_bytes + weights_bytes + B * 4),
    )

    out = pl.pallas_call(
        _make_cosine_head_kernel(tb),
        out_shape=jax.ShapeDtypeStruct((B, 1), jnp.float32),
        grid_spec=grid_spec,
        cost_estimate=cost,
        compiler_params=pltpu.CompilerParams(
            # Batch tiles are independent ("parallel" -> sharded across the two
            # TensorCores on v7x); the sequence axis is a reduction.
            dimension_semantics=("parallel", "arbitrary"),
            vmem_limit_bytes=int(vmem_limit_bytes),
        ),
    )(x1, x2, w1, b1, w2, b2, w3, b3)
    return out[:, 0]


def init_params(key, input_size=768):
    """Deterministic synthetic parameters matching nn.Linear shapes.

    PyTorch stores Linear weights as (out, in); here we keep them as
    (in, out) so the kernel computes x @ W + b directly.
    """
    dims = [(input_size, 512), (512, 256), (256, 128)]
    params = []
    for i, (din, dout) in enumerate(dims):
        kw, kb = jax.random.split(jax.random.fold_in(key, i))
        bound = 1.0 / jnp.sqrt(jnp.float32(din))
        w = jax.random.uniform(kw, (din, dout), jnp.float32, -bound, bound)
        b = jax.random.uniform(kb, (1, dout), jnp.float32, -bound, bound)
        params.extend([w, b])
    return tuple(params)


def _reference_forward(x1, x2, params):
    """Plain-JAX reference for correctness checking (matches the PyTorch module)."""
    w1, b1, w2, b2, w3, b3 = params

    def mlp(x):
        s = jnp.mean(x, axis=1)
        h = jnp.tanh(s @ w1 + b1)
        h = jnp.tanh(h @ w2 + b2)
        h = jnp.tanh(h @ w3 + b3)
        return h

    z1, z2 = mlp(x1), mlp(x2)
    eps = 1e-8
    dot = jnp.sum(z1 * z2, axis=-1)
    n1 = jnp.sqrt(jnp.sum(z1 * z1, axis=-1))
    n2 = jnp.sqrt(jnp.sum(z2 * z2, axis=-1))
    cos = dot / (jnp.maximum(n1, eps) * jnp.maximum(n2, eps))
    return jnp.maximum(cos, 0.0)


if __name__ == "__main__":
    key = jax.random.PRNGKey(0)
    k1, k2, kp = jax.random.split(key, 3)

    # Small shapes; embedding must match fc1 input (768).
    B, S, E = 16, 16, 768
    x1 = jax.random.normal(k1, (B, S, E), jnp.float32)
    x2 = jax.random.normal(k2, (B, S, E), jnp.float32)
    params = init_params(kp, input_size=E)
    ref = _reference_forward(x1, x2, params)

    # 1) Auto tiling: chip-aware VMEM budget, batch tile capped at B//2 so the
    #    parallel axis has 2 tiles (grid (2, 1) here).
    out = cosine_head_forward(x1, x2, params)
    jax.block_until_ready(out)
    assert out.shape == (B,), out.shape
    assert jnp.allclose(out, ref, atol=1e-5, rtol=1e-5), (out, ref)

    # 2) Explicit small tiles -> 2x2 grid: exercises the multi-step sequence
    #    reduction / accumulator path.
    out2 = cosine_head_forward(x1, x2, params, tb=8, ts=8)
    jax.block_until_ready(out2)
    assert jnp.allclose(out2, ref, atol=1e-5, rtol=1e-5), (out2, ref)

    # 3) bf16 input streaming (halves HBM traffic); accumulation/MLP stay f32.
    x1b = x1.astype(jnp.bfloat16)
    x2b = x2.astype(jnp.bfloat16)
    refb = _reference_forward(x1b.astype(jnp.float32),
                              x2b.astype(jnp.float32), params)
    outb = cosine_head_forward(x1b, x2b, params)
    jax.block_until_ready(outb)
    assert jnp.allclose(outb, refb, atol=1e-4, rtol=1e-4), (outb, refb)

    print("KERNEL_OK")
</pallas_src>

<mosaic_0001>
module attributes {stable_mosaic.version = 11 : i64} {
  func.func @kernel(%arg0: i32, %arg1: i32, %arg2: memref<8x16x768xf32, #tpu.memory_space<vmem>>, %arg3: memref<8x16x768xf32, #tpu.memory_space<vmem>>, %arg4: memref<768x512xf32, #tpu.memory_space<vmem>>, %arg5: memref<1x512xf32, #tpu.memory_space<vmem>>, %arg6: memref<512x256xf32, #tpu.memory_space<vmem>>, %arg7: memref<1x256xf32, #tpu.memory_space<vmem>>, %arg8: memref<256x128xf32, #tpu.memory_space<vmem>>, %arg9: memref<1x128xf32, #tpu.memory_space<vmem>>, %arg10: memref<8x1xf32, #tpu.memory_space<vmem>>, %arg11: memref<16x768xf32, #tpu.memory_space<vmem>>) attributes {dimension_semantics = [#tpu.dimension_semantics<parallel>, #tpu.dimension_semantics<arbitrary>], iteration_bounds = array<i64: 2, 1>, scalar_prefetch = 0 : i64, scratch_operands = 1 : i64, tpu.core_type = #tpu.core_type<tc>, window_params = [{transform_indices = @transform_0, window_bounds = array<i64: 8, 16, 768>}, {transform_indices = @transform_1, window_bounds = array<i64: 8, 16, 768>}, {pipeline_mode = #tpu.pipeline_mode<synchronous>, transform_indices = @transform_2, window_bounds = array<i64: 768, 512>}, {pipeline_mode = #tpu.pipeline_mode<synchronous>, transform_indices = @transform_3, window_bounds = array<i64: 1, 512>}, {pipeline_mode = #tpu.pipeline_mode<synchronous>, transform_indices = @transform_4, window_bounds = array<i64: 512, 256>}, {pipeline_mode = #tpu.pipeline_mode<synchronous>, transform_indices = @transform_5, window_bounds = array<i64: 1, 256>}, {pipeline_mode = #tpu.pipeline_mode<synchronous>, transform_indices = @transform_6, window_bounds = array<i64: 256, 128>}, {pipeline_mode = #tpu.pipeline_mode<synchronous>, transform_indices = @transform_7, window_bounds = array<i64: 1, 128>}, {transform_indices = @transform_8, window_bounds = array<i64: 8, 1>}]} {
    %c0_i32 = arith.constant 0 : i32
    %0 = arith.cmpi eq, %arg1, %c0_i32 : i32
    %1 = arith.extui %0 : i1 to i32
    %c0_i32_0 = arith.constant 0 : i32
    %2 = arith.cmpi ne, %1, %c0_i32_0 : i32
    scf.if %2 {
      %cst_16 = arith.constant 0.000000e+00 : f32
      %16 = vector.broadcast %cst_16 : f32 to vector<16x768xf32>
      %c0_17 = arith.constant 0 : index
      %c0_18 = arith.constant 0 : index
      %17 = vector.load %arg11[%c0_17, %c0_18] : memref<16x768xf32, #tpu.memory_space<vmem>>, vector<16x768xf32>
      tpu.vector_store %arg11[%c0_17, %c0_18], %16 {strides = array<i32>} : memref<16x768xf32, #tpu.memory_space<vmem>>, vector<16x768xf32>,
    } else {
    }
    %c0 = arith.constant 0 : index
    %c0_1 = arith.constant 0 : index
    %3 = vector.load %arg11[%c0, %c0_1] : memref<16x768xf32, #tpu.memory_space<vmem>>, vector<8x768xf32>
    %c0_2 = arith.constant 0 : index
    %c0_3 = arith.constant 0 : index
    %c0_4 = arith.constant 0 : index
    %4 = vector.load %arg2[%c0_2, %c0_3, %c0_4] : memref<8x16x768xf32, #tpu.memory_space<vmem>>, vector<8x16x768xf32>
    %cst = arith.constant dense<0.000000e+00> : vector<8x768xf32>
    %5 = vector.multi_reduction <add>, %4, %cst [1] : vector<8x16x768xf32> to vector<8x768xf32>
    %6 = arith.addf %3, %5 : vector<8x768xf32>
    %c0_5 = arith.constant 0 : index
    %c0_6 = arith.constant 0 : index
    %7 = vector.load %arg11[%c0_5, %c0_6] : memref<16x768xf32, #tpu.memory_space<vmem>>, vector<8x768xf32>
    tpu.vector_store %arg11[%c0_5, %c0_6], %6 {strides = array<i32>} : memref<16x768xf32, #tpu.memory_space<vmem>>, vector<8x768xf32>,
    %c8 = arith.constant 8 : index
    %c0_7 = arith.constant 0 : index
    %8 = vector.load %arg11[%c8, %c0_7] : memref<16x768xf32, #tpu.memory_space<vmem>>, vector<8x768xf32>
    %c0_8 = arith.constant 0 : index
    %c0_9 = arith.constant 0 : index
    %c0_10 = arith.constant 0 : index
    %9 = vector.load %arg3[%c0_8, %c0_9, %c0_10] : memref<8x16x768xf32, #tpu.memory_space<vmem>>, vector<8x16x768xf32>
    %cst_11 = arith.constant dense<0.000000e+00> : vector<8x768xf32>
    %10 = vector.multi_reduction <add>, %9, %cst_11 [1] : vector<8x16x768xf32> to vector<8x768xf32>
    %11 = arith.addf %8, %10 : vector<8x768xf32>
    %c8_12 = arith.constant 8 : index
    %c0_13 = arith.constant 0 : index
    %12 = vector.load %arg11[%c8_12, %c0_13] : memref<16x768xf32, #tpu.memory_space<vmem>>, vector<8x768xf32>
    tpu.vector_store %arg11[%c8_12, %c0_13], %11 {strides = array<i32>} : memref<16x768xf32, #tpu.memory_space<vmem>>, vector<8x768xf32>,
    %c0_i32_14 = arith.constant 0 : i32
    %13 = arith.cmpi eq, %arg1, %c0_i32_14 : i32
    %14 = arith.extui %13 : i1 to i32
    %c0_i32_15 = arith.constant 0 : i32
    %15 = arith.cmpi ne, %14, %c0_i32_15 : i32
    scf.if %15 {
      %c0_16 = arith.constant 0 : index
      %c0_17 = arith.constant 0 : index
      %16 = vector.load %arg11[%c0_16, %c0_17] : memref<16x768xf32, #tpu.memory_space<vmem>>, vector<16x768xf32>
      %c0_18 = arith.constant 0 : index
      %c0_19 = arith.constant 0 : index
      %17 = vector.load %arg4[%c0_18, %c0_19] : memref<768x512xf32, #tpu.memory_space<vmem>>, vector<768x512xf32>
      %cst_20 = arith.constant dense<0.000000e+00> : vector<16x512xf32>
      %18 = tpu.matmul %16, %17, %cst_20 {dimension_numbers = #tpu.dot_dimension_numbers<[1], [0], [0], [1], [0, 0, 1, 1], [], []>} : vector<16x768xf32>, vector<768x512xf32>, vector<16x512xf32> -> vector<16x512xf32>
      %c0_21 = arith.constant 0 : index
      %c0_22 = arith.constant 0 : index
      %19 = vector.load %arg5[%c0_21, %c0_22] : memref<1x512xf32, #tpu.memory_space<vmem>>, vector<1x512xf32>
      %20 = vector.broadcast %19 : vector<1x512xf32> to vector<16x512xf32>
      %21 = arith.addf %18, %20 : vector<16x512xf32>
      %22 = math.tanh %21 : vector<16x512xf32>
      %c0_23 = arith.constant 0 : index
      %c0_24 = arith.constant 0 : index
      %23 = vector.load %arg6[%c0_23, %c0_24] : memref<512x256xf32, #tpu.memory_space<vmem>>, vector<512x256xf32>
      %cst_25 = arith.constant dense<0.000000e+00> : vector<16x256xf32>
      %24 = tpu.matmul %22, %23, %cst_25 {dimension_numbers = #tpu.dot_dimension_numbers<[1], [0], [0], [1], [0, 0, 1, 1], [], []>} : vector<16x512xf32>, vector<512x256xf32>, vector<16x256xf32> -> vector<16x256xf32>
      %c0_26 = arith.constant 0 : index
      %c0_27 = arith.constant 0 : index
      %25 = vector.load %arg7[%c0_26, %c0_27] : memref<1x256xf32, #tpu.memory_space<vmem>>, vector<1x256xf32>
      %26 = vector.broadcast %25 : vector<1x256xf32> to vector<16x256xf32>
      %27 = arith.addf %24, %26 : vector<16x256xf32>
      %28 = math.tanh %27 : vector<16x256xf32>
      %c0_28 = arith.constant 0 : index
      %c0_29 = arith.constant 0 : index
      %29 = vector.load %arg8[%c0_28, %c0_29] : memref<256x128xf32, #tpu.memory_space<vmem>>, vector<256x128xf32>
      %cst_30 = arith.constant dense<0.000000e+00> : vector<16x128xf32>
      %30 = tpu.matmul %28, %29, %cst_30 {dimension_numbers = #tpu.dot_dimension_numbers<[1], [0], [0], [1], [0, 0, 1, 1], [], []>} : vector<16x256xf32>, vector<256x128xf32>, vector<16x128xf32> -> vector<16x128xf32>
      %c0_31 = arith.constant 0 : index
      %c0_32 = arith.constant 0 : index
      %31 = vector.load %arg9[%c0_31, %c0_32] : memref<1x128xf32, #tpu.memory_space<vmem>>, vector<1x128xf32>
      %32 = vector.broadcast %31 : vector<1x128xf32> to vector<16x128xf32>
      %33 = arith.addf %30, %32 : vector<16x128xf32>
      %34 = math.tanh %33 : vector<16x128xf32>
      %35 = vector.extract_strided_slice %34 {offsets = [0, 0], sizes = [8, 128], strides = [1, 1]} : vector<16x128xf32> to vector<8x128xf32>
      %36 = vector.extract_strided_slice %34 {offsets = [8, 0], sizes = [8, 128], strides = [1, 1]} : vector<16x128xf32> to vector<8x128xf32>
      %37 = arith.mulf %35, %36 : vector<8x128xf32>
      %cst_33 = arith.constant dense<0.000000e+00> : vector<8xf32>
      %38 = vector.multi_reduction <add>, %37, %cst_33 [1] : vector<8x128xf32> to vector<8xf32>
      %39 = vector.shape_cast %38 : vector<8xf32> to vector<8x1xf32>
      %40 = arith.mulf %35, %35 : vector<8x128xf32>
      %cst_34 = arith.constant dense<0.000000e+00> : vector<8xf32>
      %41 = vector.multi_reduction <add>, %40, %cst_34 [1] : vector<8x128xf32> to vector<8xf32>
      %42 = vector.shape_cast %41 : vector<8xf32> to vector<8x1xf32>
      %43 = arith.mulf %36, %36 : vector<8x128xf32>
      %cst_35 = arith.constant dense<0.000000e+00> : vector<8xf32>
      %44 = vector.multi_reduction <add>, %43, %cst_35 [1] : vector<8x128xf32> to vector<8xf32>
      %45 = vector.shape_cast %44 : vector<8xf32> to vector<8x1xf32>
      %cst_36 = arith.constant 1.000000e-16 : f32
      %46 = vector.broadcast %cst_36 : f32 to vector<8x1xf32>
      %47 = arith.maximumf %42, %46 : vector<8x1xf32>
      %48 = math.rsqrt %47 : vector<8x1xf32>
      %49 = arith.mulf %39, %48 : vector<8x1xf32>
      %cst_37 = arith.constant 1.000000e-16 : f32
      %50 = vector.broadcast %cst_37 : f32 to vector<8x1xf32>
      %51 = arith.maximumf %45, %50 : vector<8x1xf32>
      %52 = math.rsqrt %51 : vector<8x1xf32>
      %53 = arith.mulf %49, %52 : vector<8x1xf32>
      %cst_38 = arith.constant 0.000000e+00 : f32
      %54 = vector.broadcast %cst_38 : f32 to vector<8x1xf32>
      %55 = arith.maximumf %53, %54 : vector<8x1xf32>
      %c0_39 = arith.constant 0 : index
      %c0_40 = arith.constant 0 : index
      %56 = vector.load %arg10[%c0_39, %c0_40] : memref<8x1xf32, #tpu.memory_space<vmem>>, vector<8x1xf32>
      tpu.vector_store %arg10[%c0_39, %c0_40], %55 {strides = array<i32>} : memref<8x1xf32, #tpu.memory_space<vmem>>, vector<8x1xf32>,
    } else {
    }
    return
  }
  func.func @transform_0(%arg0: i32, %arg1: i32) -> (i32, i32, i32) {
    %c0_i32 = arith.constant 0 : i32
    %c0_i32_0 = arith.constant 0 : i32
    return %arg0, %arg1, %c0_i32 : i32, i32, i32
  }
  func.func @transform_1(%arg0: i32, %arg1: i32) -> (i32, i32, i32) {
    %c0_i32 = arith.constant 0 : i32
    %c0_i32_0 = arith.constant 0 : i32
    return %arg0, %arg1, %c0_i32 : i32, i32, i32
  }
  func.func @transform_2(%arg0: i32, %arg1: i32) -> (i32, i32) {
    %c0_i32 = arith.constant 0 : i32
    %c0_i32_0 = arith.constant 0 : i32
    %c0_i32_1 = arith.constant 0 : i32
    return %c0_i32, %c0_i32_0 : i32, i32
  }
  func.func @transform_3(%arg0: i32, %arg1: i32) -> (i32, i32) {
    %c0_i32 = arith.constant 0 : i32
    %c0_i32_0 = arith.constant 0 : i32
    %c0_i32_1 = arith.constant 0 : i32
    return %c0_i32, %c0_i32_0 : i32, i32
  }
  func.func @transform_4(%arg0: i32, %arg1: i32) -> (i32, i32) {
    %c0_i32 = arith.constant 0 : i32
    %c0_i32_0 = arith.constant 0 : i32
    %c0_i32_1 = arith.constant 0 : i32
    return %c0_i32, %c0_i32_0 : i32, i32
  }
  func.func @transform_5(%arg0: i32, %arg1: i32) -> (i32, i32) {
    %c0_i32 = arith.constant 0 : i32
    %c0_i32_0 = arith.constant 0 : i32
    %c0_i32_1 = arith.constant 0 : i32
    return %c0_i32, %c0_i32_0 : i32, i32
  }
  func.func @transform_6(%arg0: i32, %arg1: i32) -> (i32, i32) {
    %c0_i32 = arith.constant 0 : i32
    %c0_i32_0 = arith.constant 0 : i32
    %c0_i32_1 = arith.constant 0 : i32
    return %c0_i32, %c0_i32_0 : i32, i32
  }
  func.func @transform_7(%arg0: i32, %arg1: i32) -> (i32, i32) {
    %c0_i32 = arith.constant 0 : i32
    %c0_i32_0 = arith.constant 0 : i32
    %c0_i32_1 = arith.constant 0 : i32
    return %c0_i32, %c0_i32_0 : i32, i32
  }
  func.func @transform_8(%arg0: i32, %arg1: i32) -> (i32, i32) {
    %c0_i32 = arith.constant 0 : i32
    %c0_i32_0 = arith.constant 0 : i32
    return %arg0, %c0_i32 : i32, i32
  }
}

</mosaic_0001>

<llo_original>
// kernel: tpu_custom_call.1
$region0: #{tpu_custom_call.1}
  #allocation0 [shape = 'u32[]', space=smem, size = 0x4, offset = 0x4, fixed_abs, tag = 'smem constant byte address 0x4 - core index']
  #allocation1 [shape = 'u32[144,128]{1,0:T(1,128)}', space=vmem, size = 0x12000, scoped, tag = 'internal scratch']
  #allocation2 [shape = 'f32[16,768]{1,0:T(8,128)}', space=vmem, size = 0xc000, scoped, tag = 'scratch operand']
  %s0 = inlined_call_operand.hbm [shape: f32[16,16,768], index: 0, kind: input, shape index: {}]
  %s1 = inlined_call_operand.hbm [shape: f32[16,16,768], index: 1, kind: input, shape index: {}]
  %s2 = inlined_call_operand.hbm [shape: f32[768,512], index: 2, kind: input, shape index: {}]
  %s3 = inlined_call_operand.hbm [shape: f32[1,512], index: 3, kind: input, shape index: {}]
  %s4 = inlined_call_operand.hbm [shape: f32[512,256], index: 4, kind: input, shape index: {}]
  %s5 = inlined_call_operand.hbm [shape: f32[1,256], index: 5, kind: input, shape index: {}]
  %s6 = inlined_call_operand.hbm [shape: f32[256,128], index: 6, kind: input, shape index: {}]
  %s7 = inlined_call_operand.hbm [shape: f32[1,128], index: 7, kind: input, shape index: {}]
  %s8 = inlined_call_operand.vmem [shape: f32[16,1], index: 8, kind: output, shape index: {}]
  %s9 = sld [smem:[#allocation0]]
  $region105: #{tpu_custom_call.1} parent=0
    _
  %s11 = ssub.s32 1, %s9
  %s12 = scalar_select 0, %s11, %s9
  $region1: #{tpu_custom_call.1} parent=0
    #allocation3 [shape = 'u8[786432]{0}', space=vmem, size = 0xc0000, scoped, tag = 'input window, operand 0']
    #allocation4 [shape = 's32[2]{0}', space=sflag, size = 0x8, scoped, tag = 'scoped memory for tpu_custom_call.1']
    #allocation5 [shape = 'u8[786432]{0}', space=vmem, size = 0xc0000, scoped, tag = 'input window, operand 1']
    #allocation6 [shape = 's32[2]{0}', space=sflag, size = 0x8, scoped, tag = 'scoped memory for tpu_custom_call.1']
    #allocation7 [shape = 'u8[1572864]{0}', space=vmem, size = 0x180000, scoped, tag = 'input window, operand 2, single buffered']
    #allocation8 [shape = 'u8[2048]{0}', space=vmem, size = 0x800, scoped, tag = 'input window, operand 3, single buffered']
    #allocation9 [shape = 's32[1]{0}', space=sflag, size = 0x4, scoped, tag = 'scoped memory for tpu_custom_call.1']
    #allocation10 [shape = 'u8[524288]{0}', space=vmem, size = 0x80000, scoped, tag = 'input window, operand 4, single buffered']
    #allocation11 [shape = 'u8[1024]{0}', space=vmem, size = 0x400, scoped, tag = 'input window, operand 5, single buffered']
    #allocation12 [shape = 's32[1]{0}', space=sflag, size = 0x4, scoped, tag = 'scoped memory for tpu_custom_call.1']
    #allocation13 [shape = 'u8[131072]{0}', space=vmem, size = 0x20000, scoped, tag = 'input window, operand 6, single buffered']
    #allocation14 [shape = 'u8[512]{0}', space=vmem, size = 0x400, scoped, tag = 'input window, operand 7, single buffered']
    #allocation15 [shape = 's32[1]{0}', space=sflag, size = 0x4, scoped, tag = 'scoped memory for tpu_custom_call.1']
    %13 = vsyncpa [#allocation4], 0
    %s14 = scalar_lea.sflag [#allocation4], 1
    %15 = vsyncpa %s14, 0
    %16 = vsyncpa [#allocation6], 0
    %s17 = scalar_lea.sflag [#allocation6], 1
    %18 = vsyncpa %s17, 0
    %19 = vsyncpa [#allocation9], 0
    %20 = vsyncpa [#allocation12], 0
    %21 = vsyncpa [#allocation15], 0
    loop: start=0, step=1, limit=4
    $region2: #{tpu_custom_call.1} parent=1 // loop_pre_header
      _
    $region3: #{tpu_custom_call.1} parent=1 // loop_header
      %s23 = sphi 0, %s27
      %p24 = scmp.ge.s32.totalorder %s23, 4
      %s30 = sphi 0, %s42
      %s31 = sphi 0, %s38
      %s32 = sphi 0, %s30
      %s33 = sphi 0, %s31
      %s34 = sphi 0, %s32
      %s35 = sphi 0, %s33
      %s47 = sphi 0, %s49
      %s50 = sphi 0, %s47
      %s51 = sphi 0, %s50
      %s67 = sphi 0, %s51
      %s75 = sphi 0, %s77
      %s78 = sphi 0, %s75
      %s79 = sphi 0, %s78
      %s95 = sphi 0, %s79
      %s99 = sphi 0, %s99
      %s101 = sphi 0, %s99
      %s102 = sphi 0, %s101
      %s116 = sphi 0, %s102
      %s120 = sphi 0, %s120
      %s122 = sphi 0, %s120
      %s123 = sphi 0, %s122
      %s137 = sphi 0, %s123
      %s141 = sphi 0, %s141
      %s143 = sphi 0, %s141
      %s144 = sphi 0, %s143
      %s158 = sphi 0, %s144
      %s162 = sphi 0, %s162
      %s164 = sphi 0, %s162
      %s165 = sphi 0, %s164
      %s179 = sphi 0, %s165
      %s183 = sphi 0, %s183
      %s185 = sphi 0, %s183
      %s186 = sphi 0, %s185
      %s200 = sphi 0, %s186
      %s204 = sphi 0, %s204
      %s206 = sphi 0, %s204
      %s207 = sphi 0, %s206
      %s221 = sphi 0, %s207
      %s227 = sphi 0, %s229
      %s230 = sphi 0, %s227
      %s231 = sphi 0, %s230
      %s247 = sphi 0, %s231
    $region4: #{tpu_custom_call.1} parent=1 // loop_header_branch
      %26 = sbr.rel (%p24) target = $region8
    $region5: #{tpu_custom_call.1} parent=1 // loop_body
      %s28 = ssub.s32 %s23, 1
      %s29 = ssub.s32 %s23, 2
      %s36 = sadd.s32 1, %s31
      %p37 = scmp.ge.s32.totalorder %s36, 1
      %s38 = scalar_select %p37, 0, %s36
      %s39 = sadd.s32 1, %s30
      %s40 = scalar_select %p37, %s39, %s30
      %p41 = scmp.ge.s32.totalorder %s40, 2
      %s42 = scalar_select %p41, 0, %s40
      %s43 = ssub.s32 %s30, %s42
      %s44 = ssub.s32 %s31, %s38
      %s45 = sor.u32 %s43, %s44
      %p46 = scmp.eq.s32.totalorder %s45, 0
      %s48 = sadd.s32 %s47, 1
      %s49 = scalar_select %p46, %s47, %s48
      %p52 = pneg %p46
      %p53 = scmp.eq.s32.totalorder %s23, 1
      %p54 = por %p52, %p53
      %p55 = scmp.ne.s32.totalorder %s47, %s50
      %p56 = scmp.eq.s32.totalorder %s23, 0
      %p57 = por %p55, %p56
      %p58 = scmp.ne.s32.totalorder %s47, %s50
      %p59 = scmp.eq.s32.totalorder %s28, 1
      %p60 = por %p58, %p59
      %p61 = scmp.ne.s32.totalorder %s50, %s51
      %p62 = scmp.eq.s32.totalorder %s28, 0
      %p63 = por %p61, %p62
      %p64 = scmp.ne.s32.totalorder %s50, %s51
      %p65 = scmp.eq.s32.totalorder %s29, 1
      %p66 = por %p64, %p65
      %p68 = scmp.ne.s32.totalorder %s51, %s67
      %p69 = scmp.eq.s32.totalorder %s29, 0
      %p70 = por %p68, %p69
      %s71 = ssub.s32 %s30, %s42
      %s72 = ssub.s32 %s31, %s38
      %s73 = sor.u32 %s71, %s72
      %p74 = scmp.eq.s32.totalorder %s73, 0
      %s76 = sadd.s32 %s75, 1
      %s77 = scalar_select %p74, %s75, %s76
      %p80 = pneg %p74
      %p81 = scmp.eq.s32.totalorder %s23, 1
      %p82 = por %p80, %p81
      %p83 = scmp.ne.s32.totalorder %s75, %s78
      %p84 = scmp.eq.s32.totalorder %s23, 0
      %p85 = por %p83, %p84
      %p86 = scmp.ne.s32.totalorder %s75, %s78
      %p87 = scmp.eq.s32.totalorder %s28, 1
      %p88 = por %p86, %p87
      %p89 = scmp.ne.s32.totalorder %s78, %s79
      %p90 = scmp.eq.s32.totalorder %s28, 0
      %p91 = por %p89, %p90
      %p92 = scmp.ne.s32.totalorder %s78, %s79
      %p93 = scmp.eq.s32.totalorder %s29, 1
      %p94 = por %p92, %p93
      %p96 = scmp.ne.s32.totalorder %s79, %s95
      %p97 = scmp.eq.s32.totalorder %s29, 0
      %p98 = por %p96, %p97
      %s100 = sadd.s32 %s99, 1
      %p103 = scmp.eq.s32.totalorder %s23, 1
      %p104 = scmp.ne.s32.totalorder %s99, %s101
      %p105 = scmp.eq.s32.totalorder %s23, 0
      %p106 = por %p104, %p105
      %p107 = scmp.ne.s32.totalorder %s99, %s101
      %p108 = scmp.eq.s32.totalorder %s28, 1
      %p109 = por %p107, %p108
      %p110 = scmp.ne.s32.totalorder %s101, %s102
      %p111 = scmp.eq.s32.totalorder %s28, 0
      %p112 = por %p110, %p111
      %p113 = scmp.ne.s32.totalorder %s101, %s102
      %p114 = scmp.eq.s32.totalorder %s29, 1
      %p115 = por %p113, %p114
      %p117 = scmp.ne.s32.totalorder %s102, %s116
      %p118 = scmp.eq.s32.totalorder %s29, 0
      %p119 = por %p117, %p118
      %s121 = sadd.s32 %s120, 1
      %p124 = scmp.eq.s32.totalorder %s23, 1
      %p125 = scmp.ne.s32.totalorder %s120, %s122
      %p126 = scmp.eq.s32.totalorder %s23, 0
      %p127 = por %p125, %p126
      %p128 = scmp.ne.s32.totalorder %s120, %s122
      %p129 = scmp.eq.s32.totalorder %s28, 1
      %p130 = por %p128, %p129
      %p131 = scmp.ne.s32.totalorder %s122, %s123
      %p132 = scmp.eq.s32.totalorder %s28, 0
      %p133 = por %p131, %p132
      %p134 = scmp.ne.s32.totalorder %s122, %s123
      %p135 = scmp.eq.s32.totalorder %s29, 1
      %p136 = por %p134, %p135
      %p138 = scmp.ne.s32.totalorder %s123, %s137
      %p139 = scmp.eq.s32.totalorder %s29, 0
      %p140 = por %p138, %p139
      %s142 = sadd.s32 %s141, 1
      %p145 = scmp.eq.s32.totalorder %s23, 1
      %p146 = scmp.ne.s32.totalorder %s141, %s143
      %p147 = scmp.eq.s32.totalorder %s23, 0
      %p148 = por %p146, %p147
      %p149 = scmp.ne.s32.totalorder %s141, %s143
      %p150 = scmp.eq.s32.totalorder %s28, 1
      %p151 = por %p149, %p150
      %p152 = scmp.ne.s32.totalorder %s143, %s144
      %p153 = scmp.eq.s32.totalorder %s28, 0
      %p154 = por %p152, %p153
      %p155 = scmp.ne.s32.totalorder %s143, %s144
      %p156 = scmp.eq.s32.totalorder %s29, 1
      %p157 = por %p155, %p156
      %p159 = scmp.ne.s32.totalorder %s144, %s158
      %p160 = scmp.eq.s32.totalorder %s29, 0
      %p161 = por %p159, %p160
      %s163 = sadd.s32 %s162, 1
      %p166 = scmp.eq.s32.totalorder %s23, 1
      %p167 = scmp.ne.s32.totalorder %s162, %s164
      %p168 = scmp.eq.s32.totalorder %s23, 0
      %p169 = por %p167, %p168
      %p170 = scmp.ne.s32.totalorder %s162, %s164
      %p171 = scmp.eq.s32.totalorder %s28, 1
      %p172 = por %p170, %p171
      %p173 = scmp.ne.s32.totalorder %s164, %s165
      %p174 = scmp.eq.s32.totalorder %s28, 0
      %p175 = por %p173, %p174
      %p176 = scmp.ne.s32.totalorder %s164, %s165
      %p177 = scmp.eq.s32.totalorder %s29, 1
      %p178 = por %p176, %p177
      %p180 = scmp.ne.s32.totalorder %s165, %s179
      %p181 = scmp.eq.s32.totalorder %s29, 0
      %p182 = por %p180, %p181
      %s184 = sadd.s32 %s183, 1
      %p187 = scmp.eq.s32.totalorder %s23, 1
      %p188 = scmp.ne.s32.totalorder %s183, %s185
      %p189 = scmp.eq.s32.totalorder %s23, 0
      %p190 = por %p188, %p189
      %p191 = scmp.ne.s32.totalorder %s183, %s185
      %p192 = scmp.eq.s32.totalorder %s28, 1
      %p193 = por %p191, %p192
      %p194 = scmp.ne.s32.totalorder %s185, %s186
      %p195 = scmp.eq.s32.totalorder %s28, 0
      %p196 = por %p194, %p195
      %p197 = scmp.ne.s32.totalorder %s185, %s186
      %p198 = scmp.eq.s32.totalorder %s29, 1
      %p199 = por %p197, %p198
      %p201 = scmp.ne.s32.totalorder %s186, %s200
      %p202 = scmp.eq.s32.totalorder %s29, 0
      %p203 = por %p201, %p202
      %s205 = sadd.s32 %s204, 1
      %p208 = scmp.eq.s32.totalorder %s23, 1
      %p209 = scmp.ne.s32.totalorder %s204, %s206
      %p210 = scmp.eq.s32.totalorder %s23, 0
      %p211 = por %p209, %p210
      %p212 = scmp.ne.s32.totalorder %s204, %s206
      %p213 = scmp.eq.s32.totalorder %s28, 1
      %p214 = por %p212, %p213
      %p215 = scmp.ne.s32.totalorder %s206, %s207
      %p216 = scmp.eq.s32.totalorder %s28, 0
      %p217 = por %p215, %p216
      %p218 = scmp.ne.s32.totalorder %s206, %s207
      %p219 = scmp.eq.s32.totalorder %s29, 1
      %p220 = por %p218, %p219
      %p222 = scmp.ne.s32.totalorder %s207, %s221
      %p223 = scmp.eq.s32.totalorder %s29, 0
      %p224 = por %p222, %p223
      %s225 = ssub.s32 %s30, %s42
      %p226 = scmp.eq.s32.totalorder %s225, 0
      %s228 = sadd.s32 %s227, 1
      %s229 = scalar_select %p226, %s227, %s228
      %p232 = pneg %p226
      %p233 = scmp.eq.s32.totalorder %s23, 1
      %p234 = por %p232, %p233
      %p235 = scmp.ne.s32.totalorder %s227, %s230
      %p236 = scmp.eq.s32.totalorder %s23, 0
      %p237 = por %p235, %p236
      %p238 = scmp.ne.s32.totalorder %s227, %s230
      %p239 = scmp.eq.s32.totalorder %s28, 1
      %p240 = por %p238, %p239
      %p241 = scmp.ne.s32.totalorder %s230, %s231
      %p242 = scmp.eq.s32.totalorder %s28, 0
      %p243 = por %p241, %p242
      %p244 = scmp.ne.s32.totalorder %s230, %s231
      %p245 = scmp.eq.s32.totalorder %s29, 1
      %p246 = por %p244, %p245
      %p248 = scmp.ne.s32.totalorder %s231, %s247
      %p249 = scmp.eq.s32.totalorder %s29, 0
      %p250 = por %p248, %p249
      %p251 = scmp.le.s32.totalorder 1, %s23
      %p252 = scmp.lt.s32.totalorder %s23, 3
      %p253 = pnand %p251, %p252
      %p254 = pneg %p253
      // Predicated region
      $region9: #{tpu_custom_call.1} parent=5 // pred_check
        _
      $region10: #{tpu_custom_call.1} parent=5 // pred_check_branch
        %256 = sbr.rel (%p253) target = $region12
      $region11: #{tpu_custom_call.1} parent=5 // pred_region
        %s257 = ssub.s32 %s23, 1
        // Predicated region
        $region13: #{tpu_custom_call.1} parent=11 // pred_check
          %p258 = pneg %p112
        $region14: #{tpu_custom_call.1} parent=11 // pred_check_branch
          %260 = sbr.rel (%p258) target = $region16
        $region15: #{tpu_custom_call.1} parent=11 // pred_region
          %s262 = ssub.s32 49152, 49152
          %263 = vsyncadd [#allocation6], %s262
          %s264 = sshll.u32 [#allocation7], 4
          %s265 = int_to_ptr.vmem [resolvable:$true] %s264
          %270 = dma.hbm_to_vmem [thread:$0]  %s2, 49152, %s265, [#allocation6], 512, 512, 32
        $region16: #{tpu_custom_call.1} parent=11 // pred_fallthru
          _
        // Predicated region
        $region17: #{tpu_custom_call.1} parent=11 // pred_check
          %p271 = pneg %p133
        $region18: #{tpu_custom_call.1} parent=11 // pred_check_branch
          %273 = sbr.rel (%p271) target = $region20
        $region19: #{tpu_custom_call.1} parent=11 // pred_region
          %s275 = ssub.s32 64, 64
          %276 = vsyncadd [#allocation9], %s275
          %s278 = sshll.u32 [#allocation8], 4
          %s279 = int_to_ptr.vmem [resolvable:$true] %s278
          %281 = dma.hbm_to_vmem [thread:$0]  %s3, 64, %s279, [#allocation9]
        $region20: #{tpu_custom_call.1} parent=11 // pred_fallthru
          _
        // Predicated region
        $region21: #{tpu_custom_call.1} parent=11 // pred_check
          %p282 = pneg %p154
        $region22: #{tpu_custom_call.1} parent=11 // pred_check_branch
          %284 = sbr.rel (%p282) target = $region24
        $region23: #{tpu_custom_call.1} parent=11 // pred_region
          %s286 = ssub.s32 16384, 16384
          %287 = vsyncadd [#allocation9], %s286
          %s288 = sshll.u32 [#allocation10], 4
          %s289 = int_to_ptr.vmem [resolvable:$true] %s288
          %294 = dma.hbm_to_vmem [thread:$0]  %s4, 16384, %s289, [#allocation9], 256, 256, 16
        $region24: #{tpu_custom_call.1} parent=11 // pred_fallthru
          _
        // Predicated region
        $region25: #{tpu_custom_call.1} parent=11 // pred_check
          %p295 = pneg %p175
        $region26: #{tpu_custom_call.1} parent=11 // pred_check_branch
          %297 = sbr.rel (%p295) target = $region28
        $region27: #{tpu_custom_call.1} parent=11 // pred_region
          %s299 = ssub.s32 32, 32
          %300 = vsyncadd [#allocation12], %s299
          %s302 = sshll.u32 [#allocation11], 4
          %s303 = int_to_ptr.vmem [resolvable:$true] %s302
          %305 = dma.hbm_to_vmem [thread:$0]  %s5, 32, %s303, [#allocation12]
        $region28: #{tpu_custom_call.1} parent=11 // pred_fallthru
          _
        // Predicated region
        $region29: #{tpu_custom_call.1} parent=11 // pred_check
          %p306 = pneg %p196
        $region30: #{tpu_custom_call.1} parent=11 // pred_check_branch
          %308 = sbr.rel (%p306) target = $region32
        $region31: #{tpu_custom_call.1} parent=11 // pred_region
          %s310 = ssub.s32 4096, 4096
          %311 = vsyncadd [#allocation12], %s310
          %s312 = sshll.u32 [#allocation13], 4
          %s313 = int_to_ptr.vmem [resolvable:$true] %s312
          %318 = dma.hbm_to_vmem [thread:$0]  %s6, 4096, %s313, [#allocation12], 128, 128, 8
        $region32: #{tpu_custom_call.1} parent=11 // pred_fallthru
          _
        // Predicated region
        $region33: #{tpu_custom_call.1} parent=11 // pred_check
          %p319 = pneg %p217
        $region34: #{tpu_custom_call.1} parent=11 // pred_check_branch
          %321 = sbr.rel (%p319) target = $region36
        $region35: #{tpu_custom_call.1} parent=11 // pred_region
          %s323 = ssub.s32 16, 16
          %324 = vsyncadd [#allocation15], %s323
          %s326 = sshll.u32 [#allocation14], 4
          %s327 = int_to_ptr.vmem [resolvable:$true] %s326
          %329 = dma.hbm_to_vmem [thread:$0]  %s7, 16, %s327, [#allocation15]
        $region36: #{tpu_custom_call.1} parent=11 // pred_fallthru
          _
      $region12: #{tpu_custom_call.1} parent=5 // pred_fallthru
        _
      %p330 = scmp.lt.s32.totalorder %s23, 2
      // Predicated region
      $region37: #{tpu_custom_call.1} parent=5 // pred_check
        %p331 = pneg %p330
      $region38: #{tpu_custom_call.1} parent=5 // pred_check_branch
        %333 = sbr.rel (%p331) target = $region40
      $region39: #{tpu_custom_call.1} parent=5 // pred_region
        // Predicated region
        $region41: #{tpu_custom_call.1} parent=39 // pred_check
          %p334 = pneg %p57
        $region42: #{tpu_custom_call.1} parent=39 // pred_check_branch
          %336 = sbr.rel (%p334) target = $region44
        $region43: #{tpu_custom_call.1} parent=39 // pred_region
          %s337 = sand.u32 %s47, 1
          %s338 = scalar_lea.sflag [#allocation4], %s337
          %s339 = sand.u32 %s47, 1
          %s340 = smul.addr %s339, 768
          %s341 = scalar_lea.vmem [#allocation3], %s340
          %s342 = smul.u32 8, %s30
          %s343 = smul.u32 2, %s31
          %s345 = ssub.s32 12288, 12288
          %346 = vsyncadd %s338, %s345
          %s347 = smul.addr %s343, 6
          %s348 = smul.addr %s342, 12
          %s349 = sadd.s32 %s347, %s348
          %s350 = smul.addr %s349, 128
          %s351 = scalar_lea.hbm %s0, %s350
          %s352 = sshll.u32 %s341, 4
          %s353 = int_to_ptr.vmem [resolvable:$true] %s352
          %358 = dma.hbm_to_vmem [thread:$0]  %s351, 12288, %s353, %s338, 768, 768, 48
        $region44: #{tpu_custom_call.1} parent=39 // pred_fallthru
          _
        // Predicated region
        $region45: #{tpu_custom_call.1} parent=39 // pred_check
          %p359 = pneg %p85
        $region46: #{tpu_custom_call.1} parent=39 // pred_check_branch
          %361 = sbr.rel (%p359) target = $region48
        $region47: #{tpu_custom_call.1} parent=39 // pred_region
          %s362 = sand.u32 %s23, 1
          %s363 = scalar_lea.sflag [#allocation6], %s362
          %s364 = sand.u32 %s75, 1
          %s365 = smul.addr %s364, 768
          %s366 = scalar_lea.vmem [#allocation5], %s365
          %s367 = smul.u32 8, %s30
          %s368 = smul.u32 2, %s31
          %s370 = ssub.s32 12288, 12288
          %371 = vsyncadd %s363, %s370
          %s372 = smul.addr %s368, 6
          %s373 = smul.addr %s367, 12
          %s374 = sadd.s32 %s372, %s373
          %s375 = smul.addr %s374, 128
          %s376 = scalar_lea.hbm %s1, %s375
          %s377 = sshll.u32 %s366, 4
          %s378 = int_to_ptr.vmem [resolvable:$true] %s377
          %383 = dma.hbm_to_vmem [thread:$0]  %s376, 12288, %s378, %s363, 768, 768, 48
        $region48: #{tpu_custom_call.1} parent=39 // pred_fallthru
          _
      $region40: #{tpu_custom_call.1} parent=5 // pred_fallthru
        _
      %p384 = scmp.le.s32.totalorder 1, %s23
      %p385 = scmp.lt.s32.totalorder %s23, 3
      %p386 = pnand %p384, %p385
      %p387 = pneg %p386
      // Predicated region
      $region49: #{tpu_custom_call.1} parent=5 // pred_check
        _
      $region50: #{tpu_custom_call.1} parent=5 // pred_check_branch
        %389 = sbr.rel (%p386) target = $region52
      $region51: #{tpu_custom_call.1} parent=5 // pred_region
        %s390 = ssub.s32 %s23, 1
        %s391 = sand.u32 %s50, 1
        %s392 = scalar_lea.sflag [#allocation4], %s391
        %s393 = sand.u32 %s50, 1
        %s394 = smul.addr %s393, 768
        %s395 = scalar_lea.vmem [#allocation3], %s394
        // Predicated region
        $region53: #{tpu_custom_call.1} parent=51 // pred_check
          %p396 = pneg %p63
        $region54: #{tpu_custom_call.1} parent=51 // pred_check_branch
          %398 = sbr.rel (%p396) target = $region56
        $region55: #{tpu_custom_call.1} parent=51 // pred_region
          %399 = dma.done %s392, 12288
        $region56: #{tpu_custom_call.1} parent=51 // pred_fallthru
          _
        %s400 = sand.u32 %s28, 1
        %s401 = scalar_lea.sflag [#allocation6], %s400
        %s402 = sand.u32 %s78, 1
        %s403 = smul.addr %s402, 768
        %s404 = scalar_lea.vmem [#allocation5], %s403
        // Predicated region
        $region57: #{tpu_custom_call.1} parent=51 // pred_check
          %p405 = pneg %p91
        $region58: #{tpu_custom_call.1} parent=51 // pred_check_branch
          %407 = sbr.rel (%p405) target = $region60
        $region59: #{tpu_custom_call.1} parent=51 // pred_region
          %408 = dma.done %s401, 12288
        $region60: #{tpu_custom_call.1} parent=51 // pred_fallthru
          _
        // Predicated region
        $region61: #{tpu_custom_call.1} parent=51 // pred_check
          %p409 = pneg %p112
        $region62: #{tpu_custom_call.1} parent=51 // pred_check_branch
          %411 = sbr.rel (%p409) target = $region64
        $region63: #{tpu_custom_call.1} parent=51 // pred_region
          %412 = dma.done [#allocation6], 49152
        $region64: #{tpu_custom_call.1} parent=51 // pred_fallthru
          _
        // Predicated region
        $region65: #{tpu_custom_call.1} parent=51 // pred_check
          %p413 = pneg %p133
        $region66: #{tpu_custom_call.1} parent=51 // pred_check_branch
          %415 = sbr.rel (%p413) target = $region68
        $region67: #{tpu_custom_call.1} parent=51 // pred_region
          %416 = dma.done [#allocation9], 64
        $region68: #{tpu_custom_call.1} parent=51 // pred_fallthru
          _
        // Predicated region
        $region69: #{tpu_custom_call.1} parent=51 // pred_check
          %p417 = pneg %p154
        $region70: #{tpu_custom_call.1} parent=51 // pred_check_branch
          %419 = sbr.rel (%p417) target = $region72
        $region71: #{tpu_custom_call.1} parent=51 // pred_region
          %420 = dma.done [#allocation9], 16384
        $region72: #{tpu_custom_call.1} parent=51 // pred_fallthru
          _
        // Predicated region
        $region73: #{tpu_custom_call.1} parent=51 // pred_check
          %p421 = pneg %p175
        $region74: #{tpu_custom_call.1} parent=51 // pred_check_branch
          %423 = sbr.rel (%p421) target = $region76
        $region75: #{tpu_custom_call.1} parent=51 // pred_region
          %424 = dma.done [#allocation12], 32
        $region76: #{tpu_custom_call.1} parent=51 // pred_fallthru
          _
        // Predicated region
        $region77: #{tpu_custom_call.1} parent=51 // pred_check
          %p425 = pneg %p196
        $region78: #{tpu_custom_call.1} parent=51 // pred_check_branch
          %427 = sbr.rel (%p425) target = $region80
        $region79: #{tpu_custom_call.1} parent=51 // pred_region
          %428 = dma.done [#allocation12], 4096
        $region80: #{tpu_custom_call.1} parent=51 // pred_fallthru
          _
        // Predicated region
        $region81: #{tpu_custom_call.1} parent=51 // pred_check
          %p429 = pneg %p217
        $region82: #{tpu_custom_call.1} parent=51 // pred_check_branch
          %431 = sbr.rel (%p429) target = $region84
        $region83: #{tpu_custom_call.1} parent=51 // pred_region
          %432 = dma.done [#allocation15], 16
        $region84: #{tpu_custom_call.1} parent=51 // pred_fallthru
          _
        %s433 = sand.u32 %s50, 1
        %s434 = scalar_lea.sflag [#allocation4], %s433
        %s435 = sand.u32 %s50, 1
        %s436 = smul.addr %s435, 768
        %s437 = scalar_lea.vmem [#allocation3], %s436
        %p438 = pneg %p63
        %p439 = pneg %p60
        %s440 = sand.u32 %s28, 1
        %s441 = scalar_lea.sflag [#allocation6], %s440
        %s442 = sand.u32 %s78, 1
        %s443 = smul.addr %s442, 768
        %s444 = scalar_lea.vmem [#allocation5], %s443
        %p445 = pneg %p91
        %p446 = pneg %p88
        %p447 = pneg %p112
        %p448 = pneg %p109
        %p449 = pneg %p133
        %p450 = pneg %p130
        %p451 = pneg %p154
        %p452 = pneg %p151
        %p453 = pneg %p175
        %p454 = pneg %p172
        %p455 = pneg %p196
        %p456 = pneg %p193
        %p457 = pneg %p217
        %p458 = pneg %p214
        %p459 = pneg %p243
        %p460 = pneg %p240
        %p461 = scmp.lt.s32.totalorder %s32, 1
        %s462 = scalar_select %p461, %s32, 1
        %s463 = smul.addr %s462, 8
        %s464 = scalar_lea.vmem %s8, %s463
        %s465 = smul.u32 8, %s32
        %s466 = smul.u32 2, %s33
        %s467 = smul.u32 8, %s32
        %s468 = smul.u32 2, %s33
        %p469 = scmp.lt.s32.totalorder %s32, 1
        %s470 = scalar_select %p469, %s32, 1
        %s471 = smul.addr %s470, 8
        %s472 = scalar_lea.vmem %s8, %s471
        %p473 = scmp.eq.s32.totalorder %s33, 0
        // Predicated region
        $region85: #{tpu_custom_call.1} parent=51 // pred_check
          %p474 = pneg %p473
        $region86: #{tpu_custom_call.1} parent=51 // pred_check_branch
          %476 = sbr.rel (%p474) target = $region88
        $region87: #{tpu_custom_call.1} parent=51 // pred_region
          %477 = vst [vmem:[#allocation2] sm:$0xff] 0.0
          %478 = vst [vmem:[#allocation2 + $0x8] sm:$0xff] 0.0
          %479 = vst [vmem:[#allocation2 + $0x10] sm:$0xff] 0.0
          %480 = vst [vmem:[#allocation2 + $0x18] sm:$0xff] 0.0
          %481 = vst [vmem:[#allocation2 + $0x20] sm:$0xff] 0.0
          %482 = vst [vmem:[#allocation2 + $0x28] sm:$0xff] 0.0
          %483 = vst [vmem:[#allocation2 + $0x30] sm:$0xff] 0.0
          %484 = vst [vmem:[#allocation2 + $0x38] sm:$0xff] 0.0
          %485 = vst [vmem:[#allocation2 + $0x40] sm:$0xff] 0.0
          %486 = vst [vmem:[#allocation2 + $0x48] sm:$0xff] 0.0
          %487 = vst [vmem:[#allocation2 + $0x50] sm:$0xff] 0.0
          %488 = vst [vmem:[#allocation2 + $0x58] sm:$0xff] 0.0
        $region88: #{tpu_custom_call.1} parent=51 // pred_fallthru
          _
        %v489 = vld [vmem:[#allocation2] sm:$0xff]
        %v490 = vld [vmem:[#allocation2 + $0x8] sm:$0xff]
        %v491 = vld [vmem:[#allocation2 + $0x10] sm:$0xff]
        %v492 = vld [vmem:[#allocation2 + $0x18] sm:$0xff]
        %v493 = vld [vmem:[#allocation2 + $0x20] sm:$0xff]
        %v494 = vld [vmem:[#allocation2 + $0x28] sm:$0xff]
        %v495 = vld [vmem:[%s395] sm:$0xff]
        %v496 = vld [vmem:[%s395 + $0x8] sm:$0xff]
        %v497 = vld [vmem:[%s395 + $0x10] sm:$0xff]
        %v498 = vld [vmem:[%s395 + $0x18] sm:$0xff]
        %v499 = vld [vmem:[%s395 + $0x20] sm:$0xff]
        %v500 = vld [vmem:[%s395 + $0x28] sm:$0xff]
        %v501 = vld [vmem:[%s395 + $0x30] sm:$0xff]
        %v502 = vld [vmem:[%s395 + $0x38] sm:$0xff]
        %v503 = vld [vmem:[%s395 + $0x40] sm:$0xff]
        %v504 = vld [vmem:[%s395 + $0x48] sm:$0xff]
        %v505 = vld [vmem:[%s395 + $0x50] sm:$0xff]
        %v506 = vld [vmem:[%s395 + $0x58] sm:$0xff]
        %v507 = vld [vmem:[%s395 + $0x60] sm:$0xff]
        %v508 = vld [vmem:[%s395 + $0x68] sm:$0xff]
        %v509 = vld [vmem:[%s395 + $0x70] sm:$0xff]
        %v510 = vld [vmem:[%s395 + $0x78] sm:$0xff]
        %v511 = vld [vmem:[%s395 + $0x80] sm:$0xff]
        %v512 = vld [vmem:[%s395 + $0x88] sm:$0xff]
        %v513 = vld [vmem:[%s395 + $0x90] sm:$0xff]
        %v514 = vld [vmem:[%s395 + $0x98] sm:$0xff]
        %v515 = vld [vmem:[%s395 + $0xa0] sm:$0xff]
        %v516 = vld [vmem:[%s395 + $0xa8] sm:$0xff]
        %v517 = vld [vmem:[%s395 + $0xb0] sm:$0xff]
        %v518 = vld [vmem:[%s395 + $0xb8] sm:$0xff]
        %v519 = vld [vmem:[%s395 + $0xc0] sm:$0xff]
        %v520 = vld [vmem:[%s395 + $0xc8] sm:$0xff]
        %v521 = vld [vmem:[%s395 + $0xd0] sm:$0xff]
        %v522 = vld [vmem:[%s395 + $0xd8] sm:$0xff]
        %v523 = vld [vmem:[%s395 + $0xe0] sm:$0xff]
        %v524 = vld [vmem:[%s395 + $0xe8] sm:$0xff]
        %v525 = vld [vmem:[%s395 + $0xf0] sm:$0xff]
        %v526 = vld [vmem:[%s395 + $0xf8] sm:$0xff]
        %v527 = vld [vmem:[%s395 + $0x100] sm:$0xff]
        %v528 = vld [vmem:[%s395 + $0x108] sm:$0xff]
        %v529 = vld [vmem:[%s395 + $0x110] sm:$0xff]
        %v530 = vld [vmem:[%s395 + $0x118] sm:$0xff]
        %v531 = vld [vmem:[%s395 + $0x120] sm:$0xff]
        %v532 = vld [vmem:[%s395 + $0x128] sm:$0xff]
        %v533 = vld [vmem:[%s395 + $0x130] sm:$0xff]
        %v534 = vld [vmem:[%s395 + $0x138] sm:$0xff]
        %v535 = vld [vmem:[%s395 + $0x140] sm:$0xff]
        %v536 = vld [vmem:[%s395 + $0x148] sm:$0xff]
        %v537 = vld [vmem:[%s395 + $0x150] sm:$0xff]
        %v538 = vld [vmem:[%s395 + $0x158] sm:$0xff]
        %v539 = vld [vmem:[%s395 + $0x160] sm:$0xff]
        %v540 = vld [vmem:[%s395 + $0x168] sm:$0xff]
        %v541 = vld [vmem:[%s395 + $0x170] sm:$0xff]
        %v542 = vld [vmem:[%s395 + $0x178] sm:$0xff]
        %v543 = vld [vmem:[%s395 + $0x180] sm:$0xff]
        %v544 = vld [vmem:[%s395 + $0x188] sm:$0xff]
        %v545 = vld [vmem:[%s395 + $0x190] sm:$0xff]
        %v546 = vld [vmem:[%s395 + $0x198] sm:$0xff]
        %v547 = vld [vmem:[%s395 + $0x1a0] sm:$0xff]
        %v548 = vld [vmem:[%s395 + $0x1a8] sm:$0xff]
        %v549 = vld [vmem:[%s395 + $0x1b0] sm:$0xff]
        %v550 = vld [vmem:[%s395 + $0x1b8] sm:$0xff]
        %v551 = vld [vmem:[%s395 + $0x1c0] sm:$0xff]
        %v552 = vld [vmem:[%s395 + $0x1c8] sm:$0xff]
        %v553 = vld [vmem:[%s395 + $0x1d0] sm:$0xff]
        %v554 = vld [vmem:[%s395 + $0x1d8] sm:$0xff]
        %v555 = vld [vmem:[%s395 + $0x1e0] sm:$0xff]
        %v556 = vld [vmem:[%s395 + $0x1e8] sm:$0xff]
        %v557 = vld [vmem:[%s395 + $0x1f0] sm:$0xff]
        %v558 = vld [vmem:[%s395 + $0x1f8] sm:$0xff]
        %v559 = vld [vmem:[%s395 + $0x200] sm:$0xff]
        %v560 = vld [vmem:[%s395 + $0x208] sm:$0xff]
        %v561 = vld [vmem:[%s395 + $0x210] sm:$0xff]
        %v562 = vld [vmem:[%s395 + $0x218] sm:$0xff]
        %v563 = vld [vmem:[%s395 + $0x220] sm:$0xff]
        %v564 = vld [vmem:[%s395 + $0x228] sm:$0xff]
        %v565 = vld [vmem:[%s395 + $0x230] sm:$0xff]
        %v566 = vld [vmem:[%s395 + $0x238] sm:$0xff]
        %v567 = vld [vmem:[%s395 + $0x240] sm:$0xff]
        %v568 = vld [vmem:[%s395 + $0x248] sm:$0xff]
        %v569 = vld [vmem:[%s395 + $0x250] sm:$0xff]
        %v570 = vld [vmem:[%s395 + $0x258] sm:$0xff]
        %v571 = vld [vmem:[%s395 + $0x260] sm:$0xff]
        %v572 = vld [vmem:[%s395 + $0x268] sm:$0xff]
        %v573 = vld [vmem:[%s395 + $0x270] sm:$0xff]
        %v574 = vld [vmem:[%s395 + $0x278] sm:$0xff]
        %v575 = vld [vmem:[%s395 + $0x280] sm:$0xff]
        %v576 = vld [vmem:[%s395 + $0x288] sm:$0xff]
        %v577 = vld [vmem:[%s395 + $0x290] sm:$0xff]
        %v578 = vld [vmem:[%s395 + $0x298] sm:$0xff]
        %v579 = vld [vmem:[%s395 + $0x2a0] sm:$0xff]
        %v580 = vld [vmem:[%s395 + $0x2a8] sm:$0xff]
        %v581 = vld [vmem:[%s395 + $0x2b0] sm:$0xff]
        %v582 = vld [vmem:[%s395 + $0x2b8] sm:$0xff]
        %v583 = vld [vmem:[%s395 + $0x2c0] sm:$0xff]
        %v584 = vld [vmem:[%s395 + $0x2c8] sm:$0xff]
        %v585 = vld [vmem:[%s395 + $0x2d0] sm:$0xff]
        %v586 = vld [vmem:[%s395 + $0x2d8] sm:$0xff]
        %v587 = vld [vmem:[%s395 + $0x2e0] sm:$0xff]
        %v588 = vld [vmem:[%s395 + $0x2e8] sm:$0xff]
        %v589 = vld [vmem:[%s395 + $0x2f0] sm:$0xff]
        %v590 = vld [vmem:[%s395 + $0x2f8] sm:$0xff]
        %v591 = vadd.f32 %v495, %v501
        %v592 = vrot.slane %v591, 4
        %v593 = vadd.f32 %v591, %v592
        %v594 = vrot.slane %v593, 2
        %v595 = vadd.f32 %v593, %v594
        %v596 = vrot.slane %v595, 1
        %v597 = vadd.f32 %v595, %v596
        %v598 = vadd.f32 %v496, %v502
        %v599 = vrot.slane %v598, 4
        %v600 = vadd.f32 %v598, %v599
        %v601 = vrot.slane %v600, 2
        %v602 = vadd.f32 %v600, %v601
        %v603 = vrot.slane %v602, 1
        %v604 = vadd.f32 %v602, %v603
        %v605 = vadd.f32 %v497, %v503
        %v606 = vrot.slane %v605, 4
        %v607 = vadd.f32 %v605, %v606
        %v608 = vrot.slane %v607, 2
        %v609 = vadd.f32 %v607, %v608
        %v610 = vrot.slane %v609, 1
        %v611 = vadd.f32 %v609, %v610
        %v612 = vadd.f32 %v498, %v504
        %v613 = vrot.slane %v612, 4
        %v614 = vadd.f32 %v612, %v613
        %v615 = vrot.slane %v614, 2
        %v616 = vadd.f32 %v614, %v615
        %v617 = vrot.slane %v616, 1
        %v618 = vadd.f32 %v616, %v617
        %v619 = vadd.f32 %v499, %v505
        %v620 = vrot.slane %v619, 4
        %v621 = vadd.f32 %v619, %v620
        %v622 = vrot.slane %v621, 2
        %v623 = vadd.f32 %v621, %v622
        %v624 = vrot.slane %v623, 1
        %v625 = vadd.f32 %v623, %v624
        %v626 = vadd.f32 %v500, %v506
        %v627 = vrot.slane %v626, 4
        %v628 = vadd.f32 %v626, %v627
        %v629 = vrot.slane %v628, 2
        %v630 = vadd.f32 %v628, %v629
        %v631 = vrot.slane %v630, 1
        %v632 = vadd.f32 %v630, %v631
        %v633 = vadd.f32 %v507, %v513
        %v634 = vrot.slane %v633, 4
        %v635 = vadd.f32 %v633, %v634
        %v636 = vrot.slane %v635, 2
        %v637 = vadd.f32 %v635, %v636
        %v638 = vrot.slane %v637, 1
        %v639 = vadd.f32 %v637, %v638
        %v640 = vadd.f32 %v508, %v514
        %v641 = vrot.slane %v640, 4
        %v642 = vadd.f32 %v640, %v641
        %v643 = vrot.slane %v642, 2
        %v644 = vadd.f32 %v642, %v643
        %v645 = vrot.slane %v644, 1
        %v646 = vadd.f32 %v644, %v645
        %v647 = vadd.f32 %v509, %v515
        %v648 = vrot.slane %v647, 4
        %v649 = vadd.f32 %v647, %v648
        %v650 = vrot.slane %v649, 2
        %v651 = vadd.f32 %v649, %v650
        %v652 = vrot.slane %v651, 1
        %v653 = vadd.f32 %v651, %v652
        %v654 = vadd.f32 %v510, %v516
        %v655 = vrot.slane %v654, 4
        %v656 = vadd.f32 %v654, %v655
        %v657 = vrot.slane %v656, 2
        %v658 = vadd.f32 %v656, %v657
        %v659 = vrot.slane %v658, 1
        %v660 = vadd.f32 %v658, %v659
        %v661 = vadd.f32 %v511, %v517
        %v662 = vrot.slane %v661, 4
        %v663 = vadd.f32 %v661, %v662
        %v664 = vrot.slane %v663, 2
        %v665 = vadd.f32 %v663, %v664
        %v666 = vrot.slane %v665, 1
        %v667 = vadd.f32 %v665, %v666
        %v668 = vadd.f32 %v512, %v518
        %v669 = vrot.slane %v668, 4
        %v670 = vadd.f32 %v668, %v669
        %v671 = vrot.slane %v670, 2
        %v672 = vadd.f32 %v670, %v671
        %v673 = vrot.slane %v672, 1
        %v674 = vadd.f32 %v672, %v673
        %v675 = vadd.f32 %v519, %v525
        %v676 = vrot.slane %v675, 4
        %v677 = vadd.f32 %v675, %v676
        %v678 = vrot.slane %v677, 2
        %v679 = vadd.f32 %v677, %v678
        %v680 = vrot.slane %v679, 1
        %v681 = vadd.f32 %v679, %v680
        %v682 = vadd.f32 %v520, %v526
        %v683 = vrot.slane %v682, 4
        %v684 = vadd.f32 %v682, %v683
        %v685 = vrot.slane %v684, 2
        %v686 = vadd.f32 %v684, %v685
        %v687 = vrot.slane %v686, 1
        %v688 = vadd.f32 %v686, %v687
        %v689 = vadd.f32 %v521, %v527
        %v690 = vrot.slane %v689, 4
        %v691 = vadd.f32 %v689, %v690
        %v692 = vrot.slane %v691, 2
        %v693 = vadd.f32 %v691, %v692
        %v694 = vrot.slane %v693, 1
        %v695 = vadd.f32 %v693, %v694
        %v696 = vadd.f32 %v522, %v528
        %v697 = vrot.slane %v696, 4
        %v698 = vadd.f32 %v696, %v697
        %v699 = vrot.slane %v698, 2
        %v700 = vadd.f32 %v698, %v699
        %v701 = vrot.slane %v700, 1
        %v702 = vadd.f32 %v700, %v701
        %v703 = vadd.f32 %v523, %v529
        %v704 = vrot.slane %v703, 4
        %v705 = vadd.f32 %v703, %v704
        %v706 = vrot.slane %v705, 2
        %v707 = vadd.f32 %v705, %v706
        %v708 = vrot.slane %v707, 1
        %v709 = vadd.f32 %v707, %v708
        %v710 = vadd.f32 %v524, %v530
        %v711 = vrot.slane %v710, 4
        %v712 = vadd.f32 %v710, %v711
        %v713 = vrot.slane %v712, 2
        %v714 = vadd.f32 %v712, %v713
        %v715 = vrot.slane %v714, 1
        %v716 = vadd.f32 %v714, %v715
        %v717 = vadd.f32 %v531, %v537
        %v718 = vrot.slane %v717, 4
        %v719 = vadd.f32 %v717, %v718
        %v720 = vrot.slane %v719, 2
        %v721 = vadd.f32 %v719, %v720
        %v722 = vrot.slane %v721, 1
        %v723 = vadd.f32 %v721, %v722
        %v724 = vadd.f32 %v532, %v538
        %v725 = vrot.slane %v724, 4
        %v726 = vadd.f32 %v724, %v725
        %v727 = vrot.slane %v726, 2
        %v728 = vadd.f32 %v726, %v727
        %v729 = vrot.slane %v728, 1
        %v730 = vadd.f32 %v728, %v729
        %v731 = vadd.f32 %v533, %v539
        %v732 = vrot.slane %v731, 4
        %v733 = vadd.f32 %v731, %v732
        %v734 = vrot.slane %v733, 2
        %v735 = vadd.f32 %v733, %v734
        %v736 = vrot.slane %v735, 1
        %v737 = vadd.f32 %v735, %v736
        %v738 = vadd.f32 %v534, %v540
        %v739 = vrot.slane %v738, 4
        %v740 = vadd.f32 %v738, %v739
        %v741 = vrot.slane %v740, 2
        %v742 = vadd.f32 %v740, %v741
        %v743 = vrot.slane %v742, 1
        %v744 = vadd.f32 %v742, %v743
        %v745 = vadd.f32 %v535, %v541
        %v746 = vrot.slane %v745, 4
        %v747 = vadd.f32 %v745, %v746
        %v748 = vrot.slane %v747, 2
        %v749 = vadd.f32 %v747, %v748
        %v750 = vrot.slane %v749, 1
        %v751 = vadd.f32 %v749, %v750
        %v752 = vadd.f32 %v536, %v542
        %v753 = vrot.slane %v752, 4
        %v754 = vadd.f32 %v752, %v753
        %v755 = vrot.slane %v754, 2
        %v756 = vadd.f32 %v754, %v755
        %v757 = vrot.slane %v756, 1
        %v758 = vadd.f32 %v756, %v757
        %v759 = vadd.f32 %v543, %v549
        %v760 = vrot.slane %v759, 4
        %v761 = vadd.f32 %v759, %v760
        %v762 = vrot.slane %v761, 2
        %v763 = vadd.f32 %v761, %v762
        %v764 = vrot.slane %v763, 1
        %v765 = vadd.f32 %v763, %v764
        %v766 = vadd.f32 %v544, %v550
        %v767 = vrot.slane %v766, 4
        %v768 = vadd.f32 %v766, %v767
        %v769 = vrot.slane %v768, 2
        %v770 = vadd.f32 %v768, %v769
        %v771 = vrot.slane %v770, 1
        %v772 = vadd.f32 %v770, %v771
        %v773 = vadd.f32 %v545, %v551
        %v774 = vrot.slane %v773, 4
        %v775 = vadd.f32 %v773, %v774
        %v776 = vrot.slane %v775, 2
        %v777 = vadd.f32 %v775, %v776
        %v778 = vrot.slane %v777, 1
        %v779 = vadd.f32 %v777, %v778
        %v780 = vadd.f32 %v546, %v552
        %v781 = vrot.slane %v780, 4
        %v782 = vadd.f32 %v780, %v781
        %v783 = vrot.slane %v782, 2
        %v784 = vadd.f32 %v782, %v783
        %v785 = vrot.slane %v784, 1
        %v786 = vadd.f32 %v784, %v785
        %v787 = vadd.f32 %v547, %v553
        %v788 = vrot.slane %v787, 4
        %v789 = vadd.f32 %v787, %v788
        %v790 = vrot.slane %v789, 2
        %v791 = vadd.f32 %v789, %v790
        %v792 = vrot.slane %v791, 1
        %v793 = vadd.f32 %v791, %v792
        %v794 = vadd.f32 %v548, %v554
        %v795 = vrot.slane %v794, 4
        %v796 = vadd.f32 %v794, %v795
        %v797 = vrot.slane %v796, 2
        %v798 = vadd.f32 %v796, %v797
        %v799 = vrot.slane %v798, 1
        %v800 = vadd.f32 %v798, %v799
        %v801 = vadd.f32 %v555, %v561
        %v802 = vrot.slane %v801, 4
        %v803 = vadd.f32 %v801, %v802
        %v804 = vrot.slane %v803, 2
        %v805 = vadd.f32 %v803, %v804
        %v806 = vrot.slane %v805, 1
        %v807 = vadd.f32 %v805, %v806
        %v808 = vadd.f32 %v556, %v562
        %v809 = vrot.slane %v808, 4
        %v810 = vadd.f32 %v808, %v809
        %v811 = vrot.slane %v810, 2
        %v812 = vadd.f32 %v810, %v811
        %v813 = vrot.slane %v812, 1
        %v814 = vadd.f32 %v812, %v813
        %v815 = vadd.f32 %v557, %v563
        %v816 = vrot.slane %v815, 4
        %v817 = vadd.f32 %v815, %v816
        %v818 = vrot.slane %v817, 2
        %v819 = vadd.f32 %v817, %v818
        %v820 = vrot.slane %v819, 1
        %v821 = vadd.f32 %v819, %v820
        %v822 = vadd.f32 %v558, %v564
        %v823 = vrot.slane %v822, 4
        %v824 = vadd.f32 %v822, %v823
        %v825 = vrot.slane %v824, 2
        %v826 = vadd.f32 %v824, %v825
        %v827 = vrot.slane %v826, 1
        %v828 = vadd.f32 %v826, %v827
        %v829 = vadd.f32 %v559, %v565
        %v830 = vrot.slane %v829, 4
        %v831 = vadd.f32 %v829, %v830
        %v832 = vrot.slane %v831, 2
        %v833 = vadd.f32 %v831, %v832
        %v834 = vrot.slane %v833, 1
        %v835 = vadd.f32 %v833, %v834
        %v836 = vadd.f32 %v560, %v566
        %v837 = vrot.slane %v836, 4
        %v838 = vadd.f32 %v836, %v837
        %v839 = vrot.slane %v838, 2
        %v840 = vadd.f32 %v838, %v839
        %v841 = vrot.slane %v840, 1
        %v842 = vadd.f32 %v840, %v841
        %v843 = vadd.f32 %v567, %v573
        %v844 = vrot.slane %v843, 4
        %v845 = vadd.f32 %v843, %v844
        %v846 = vrot.slane %v845, 2
        %v847 = vadd.f32 %v845, %v846
        %v848 = vrot.slane %v847, 1
        %v849 = vadd.f32 %v847, %v848
        %v850 = vadd.f32 %v568, %v574
        %v851 = vrot.slane %v850, 4
        %v852 = vadd.f32 %v850, %v851
        %v853 = vrot.slane %v852, 2
        %v854 = vadd.f32 %v852, %v853
        %v855 = vrot.slane %v854, 1
        %v856 = vadd.f32 %v854, %v855
        %v857 = vadd.f32 %v569, %v575
        %v858 = vrot.slane %v857, 4
        %v859 = vadd.f32 %v857, %v858
        %v860 = vrot.slane %v859, 2
        %v861 = vadd.f32 %v859, %v860
        %v862 = vrot.slane %v861, 1
        %v863 = vadd.f32 %v861, %v862
        %v864 = vadd.f32 %v570, %v576
        %v865 = vrot.slane %v864, 4
        %v866 = vadd.f32 %v864, %v865
        %v867 = vrot.slane %v866, 2
        %v868 = vadd.f32 %v866, %v867
        %v869 = vrot.slane %v868, 1
        %v870 = vadd.f32 %v868, %v869
        %v871 = vadd.f32 %v571, %v577
        %v872 = vrot.slane %v871, 4
        %v873 = vadd.f32 %v871, %v872
        %v874 = vrot.slane %v873, 2
        %v875 = vadd.f32 %v873, %v874
        %v876 = vrot.slane %v875, 1
        %v877 = vadd.f32 %v875, %v876
        %v878 = vadd.f32 %v572, %v578
        %v879 = vrot.slane %v878, 4
        %v880 = vadd.f32 %v878, %v879
        %v881 = vrot.slane %v880, 2
        %v882 = vadd.f32 %v880, %v881
        %v883 = vrot.slane %v882, 1
        %v884 = vadd.f32 %v882, %v883
        %v885 = vadd.f32 %v579, %v585
        %v886 = vrot.slane %v885, 4
        %v887 = vadd.f32 %v885, %v886
        %v888 = vrot.slane %v887, 2
        %v889 = vadd.f32 %v887, %v888
        %v890 = vrot.slane %v889, 1
        %v891 = vadd.f32 %v889, %v890
        %v892 = vadd.f32 %v580, %v586
        %v893 = vrot.slane %v892, 4
        %v894 = vadd.f32 %v892, %v893
        %v895 = vrot.slane %v894, 2
        %v896 = vadd.f32 %v894, %v895
        %v897 = vrot.slane %v896, 1
        %v898 = vadd.f32 %v896, %v897
        %v899 = vadd.f32 %v581, %v587
        %v900 = vrot.slane %v899, 4
        %v901 = vadd.f32 %v899, %v900
        %v902 = vrot.slane %v901, 2
        %v903 = vadd.f32 %v901, %v902
        %v904 = vrot.slane %v903, 1
        %v905 = vadd.f32 %v903, %v904
        %v906 = vadd.f32 %v582, %v588
        %v907 = vrot.slane %v906, 4
        %v908 = vadd.f32 %v906, %v907
        %v909 = vrot.slane %v908, 2
        %v910 = vadd.f32 %v908, %v909
        %v911 = vrot.slane %v910, 1
        %v912 = vadd.f32 %v910, %v911
        %v913 = vadd.f32 %v583, %v589
        %v914 = vrot.slane %v913, 4
        %v915 = vadd.f32 %v913, %v914
        %v916 = vrot.slane %v915, 2
        %v917 = vadd.f32 %v915, %v916
        %v918 = vrot.slane %v917, 1
        %v919 = vadd.f32 %v917, %v918
        %v920 = vadd.f32 %v584, %v590
        %v921 = vrot.slane %v920, 4
        %v922 = vadd.f32 %v920, %v921
        %v923 = vrot.slane %v922, 2
        %v924 = vadd.f32 %v922, %v923
        %v925 = vrot.slane %v924, 1
        %v926 = vadd.f32 %v924, %v925
        %vm975 = vcmask 1041409
        %v976 = vsel %vm975, %v639, %v597
        %vm977 = vcmask 1042434
        %v978 = vsel %vm977, %v681, %v976
        %vm979 = vcmask 1043459
        %v980 = vsel %vm979, %v723, %v978
        %vm981 = vcmask 1044484
        %v982 = vsel %vm981, %v765, %v980
        %vm983 = vcmask 1045509
        %v984 = vsel %vm983, %v807, %v982
        %vm985 = vcmask 1046534
        %v986 = vsel %vm985, %v849, %v984
        %vm987 = vcmask 1047559
        %v988 = vsel %vm987, %v891, %v986
        %v989 = vsel %vm975, %v646, %v604
        %v990 = vsel %vm977, %v688, %v989
        %v991 = vsel %vm979, %v730, %v990
        %v992 = vsel %vm981, %v772, %v991
        %v993 = vsel %vm983, %v814, %v992
        %v994 = vsel %vm985, %v856, %v993
        %v995 = vsel %vm987, %v898, %v994
        %v996 = vsel %vm975, %v653, %v611
        %v997 = vsel %vm977, %v695, %v996
        %v998 = vsel %vm979, %v737, %v997
        %v999 = vsel %vm981, %v779, %v998
        %v1000 = vsel %vm983, %v821, %v999
        %v1001 = vsel %vm985, %v863, %v1000
        %v1002 = vsel %vm987, %v905, %v1001
        %v1003 = vsel %vm975, %v660, %v618
        %v1004 = vsel %vm977, %v702, %v1003
        %v1005 = vsel %vm979, %v744, %v1004
        %v1006 = vsel %vm981, %v786, %v1005
        %v1007 = vsel %vm983, %v828, %v1006
        %v1008 = vsel %vm985, %v870, %v1007
        %v1009 = vsel %vm987, %v912, %v1008
        %v1010 = vsel %vm975, %v667, %v625
        %v1011 = vsel %vm977, %v709, %v1010
        %v1012 = vsel %vm979, %v751, %v1011
        %v1013 = vsel %vm981, %v793, %v1012
        %v1014 = vsel %vm983, %v835, %v1013
        %v1015 = vsel %vm985, %v877, %v1014
        %v1016 = vsel %vm987, %v919, %v1015
        %v1017 = vsel %vm975, %v674, %v632
        %v1018 = vsel %vm977, %v716, %v1017
        %v1019 = vsel %vm979, %v758, %v1018
        %v1020 = vsel %vm981, %v800, %v1019
        %v1021 = vsel %vm983, %v842, %v1020
        %v1022 = vsel %vm985, %v884, %v1021
        %v1023 = vsel %vm987, %v926, %v1022
        %v1030 = vadd.f32 %v489, %v988
        %v1031 = vadd.f32 %v490, %v995
        %v1032 = vadd.f32 %v491, %v1002
        %v1033 = vadd.f32 %v492, %v1009
        %v1034 = vadd.f32 %v493, %v1016
        %v1035 = vadd.f32 %v494, %v1023
        %1036 = vst [vmem:[#allocation2] sm:$0xff] %v1030
        %1037 = vst [vmem:[#allocation2 + $0x8] sm:$0xff] %v1031
        %1038 = vst [vmem:[#allocation2 + $0x10] sm:$0xff] %v1032
        %1039 = vst [vmem:[#allocation2 + $0x18] sm:$0xff] %v1033
        %1040 = vst [vmem:[#allocation2 + $0x20] sm:$0xff] %v1034
        %1041 = vst [vmem:[#allocation2 + $0x28] sm:$0xff] %v1035
        %v1042 = vld [vmem:[#allocation2 + $0x30] sm:$0xff]
        %v1043 = vld [vmem:[#allocation2 + $0x38] sm:$0xff]
        %v1044 = vld [vmem:[#allocation2 + $0x40] sm:$0xff]
        %v1045 = vld [vmem:[#allocation2 + $0x48] sm:$0xff]
        %v1046 = vld [vmem:[#allocation2 + $0x50] sm:$0xff]
        %v1047 = vld [vmem:[#allocation2 + $0x58] sm:$0xff]
        %v1048 = vld [vmem:[%s404] sm:$0xff]
        %v1049 = vld [vmem:[%s404 + $0x8] sm:$0xff]
        %v1050 = vld [vmem:[%s404 + $0x10] sm:$0xff]
        %v1051 = vld [vmem:[%s404 + $0x18] sm:$0xff]
        %v1052 = vld [vmem:[%s404 + $0x20] sm:$0xff]
        %v1053 = vld [vmem:[%s404 + $0x28] sm:$0xff]
        %v1054 = vld [vmem:[%s404 + $0x30] sm:$0xff]
        %v1055 = vld [vmem:[%s404 + $0x38] sm:$0xff]
        %v1056 = vld [vmem:[%s404 + $0x40] sm:$0xff]
        %v1057 = vld [vmem:[%s404 + $0x48] sm:$0xff]
        %v1058 = vld [vmem:[%s404 + $0x50] sm:$0xff]
        %v1059 = vld [vmem:[%s404 + $0x58] sm:$0xff]
        %v1060 = vld [vmem:[%s404 + $0x60] sm:$0xff]
        %v1061 = vld [vmem:[%s404 + $0x68] sm:$0xff]
        %v1062 = vld [vmem:[%s404 + $0x70] sm:$0xff]
        %v1063 = vld [vmem:[%s404 + $0x78] sm:$0xff]
        %v1064 = vld [vmem:[%s404 + $0x80] sm:$0xff]
        %v1065 = vld [vmem:[%s404 + $0x88] sm:$0xff]
        %v1066 = vld [vmem:[%s404 + $0x90] sm:$0xff]
        %v1067 = vld [vmem:[%s404 + $0x98] sm:$0xff]
        %v1068 = vld [vmem:[%s404 + $0xa0] sm:$0xff]
        %v1069 = vld [vmem:[%s404 + $0xa8] sm:$0xff]
        %v1070 = vld [vmem:[%s404 + $0xb0] sm:$0xff]
        %v1071 = vld [vmem:[%s404 + $0xb8] sm:$0xff]
        %v1072 = vld [vmem:[%s404 + $0xc0] sm:$0xff]
        %v1073 = vld [vmem:[%s404 + $0xc8] sm:$0xff]
        %v1074 = vld [vmem:[%s404 + $0xd0] sm:$0xff]
        %v1075 = vld [vmem:[%s404 + $0xd8] sm:$0xff]
        %v1076 = vld [vmem:[%s404 + $0xe0] sm:$0xff]
        %v1077 = vld [vmem:[%s404 + $0xe8] sm:$0xff]
        %v1078 = vld [vmem:[%s404 + $0xf0] sm:$0xff]
        %v1079 = vld [vmem:[%s404 + $0xf8] sm:$0xff]
        %v1080 = vld [vmem:[%s404 + $0x100] sm:$0xff]
        %v1081 = vld [vmem:[%s404 + $0x108] sm:$0xff]
        %v1082 = vld [vmem:[%s404 + $0x110] sm:$0xff]
        %v1083 = vld [vmem:[%s404 + $0x118] sm:$0xff]
        %v1084 = vld [vmem:[%s404 + $0x120] sm:$0xff]
        %v1085 = vld [vmem:[%s404 + $0x128] sm:$0xff]
        %v1086 = vld [vmem:[%s404 + $0x130] sm:$0xff]
        %v1087 = vld [vmem:[%s404 + $0x138] sm:$0xff]
        %v1088 = vld [vmem:[%s404 + $0x140] sm:$0xff]
        %v1089 = vld [vmem:[%s404 + $0x148] sm:$0xff]
        %v1090 = vld [vmem:[%s404 + $0x150] sm:$0xff]
        %v1091 = vld [vmem:[%s404 + $0x158] sm:$0xff]
        %v1092 = vld [vmem:[%s404 + $0x160] sm:$0xff]
        %v1093 = vld [vmem:[%s404 + $0x168] sm:$0xff]
        %v1094 = vld [vmem:[%s404 + $0x170] sm:$0xff]
        %v1095 = vld [vmem:[%s404 + $0x178] sm:$0xff]
        %v1096 = vld [vmem:[%s404 + $0x180] sm:$0xff]
        %v1097 = vld [vmem:[%s404 + $0x188] sm:$0xff]
        %v1098 = vld [vmem:[%s404 + $0x190] sm:$0xff]
        %v1099 = vld [vmem:[%s404 + $0x198] sm:$0xff]
        %v1100 = vld [vmem:[%s404 + $0x1a0] sm:$0xff]
        %v1101 = vld [vmem:[%s404 + $0x1a8] sm:$0xff]
        %v1102 = vld [vmem:[%s404 + $0x1b0] sm:$0xff]
        %v1103 = vld [vmem:[%s404 + $0x1b8] sm:$0xff]
        %v1104 = vld [vmem:[%s404 + $0x1c0] sm:$0xff]
        %v1105 = vld [vmem:[%s404 + $0x1c8] sm:$0xff]
        %v1106 = vld [vmem:[%s404 + $0x1d0] sm:$0xff]
        %v1107 = vld [vmem:[%s404 + $0x1d8] sm:$0xff]
        %v1108 = vld [vmem:[%s404 + $0x1e0] sm:$0xff]
        %v1109 = vld [vmem:[%s404 + $0x1e8] sm:$0xff]
        %v1110 = vld [vmem:[%s404 + $0x1f0] sm:$0xff]
        %v1111 = vld [vmem:[%s404 + $0x1f8] sm:$0xff]
        %v1112 = vld [vmem:[%s404 + $0x200] sm:$0xff]
        %v1113 = vld [vmem:[%s404 + $0x208] sm:$0xff]
        %v1114 = vld [vmem:[%s404 + $0x210] sm:$0xff]
        %v1115 = vld [vmem:[%s404 + $0x218] sm:$0xff]
        %v1116 = vld [vmem:[%s404 + $0x220] sm:$0xff]
        %v1117 = vld [vmem:[%s404 + $0x228] sm:$0xff]
        %v1118 = vld [vmem:[%s404 + $0x230] sm:$0xff]
        %v1119 = vld [vmem:[%s404 + $0x238] sm:$0xff]
        %v1120 = vld [vmem:[%s404 + $0x240] sm:$0xff]
        %v1121 = vld [vmem:[%s404 + $0x248] sm:$0xff]
        %v1122 = vld [vmem:[%s404 + $0x250] sm:$0xff]
        %v1123 = vld [vmem:[%s404 + $0x258] sm:$0xff]
        %v1124 = vld [vmem:[%s404 + $0x260] sm:$0xff]
        %v1125 = vld [vmem:[%s404 + $0x268] sm:$0xff]
        %v1126 = vld [vmem:[%s404 + $0x270] sm:$0xff]
        %v1127 = vld [vmem:[%s404 + $0x278] sm:$0xff]
        %v1128 = vld [vmem:[%s404 + $0x280] sm:$0xff]
        %v1129 = vld [vmem:[%s404 + $0x288] sm:$0xff]
        %v1130 = vld [vmem:[%s404 + $0x290] sm:$0xff]
        %v1131 = vld [vmem:[%s404 + $0x298] sm:$0xff]
        %v1132 = vld [vmem:[%s404 + $0x2a0] sm:$0xff]
        %v1133 = vld [vmem:[%s404 + $0x2a8] sm:$0xff]
        %v1134 = vld [vmem:[%s404 + $0x2b0] sm:$0xff]
        %v1135 = vld [vmem:[%s404 + $0x2b8] sm:$0xff]
        %v1136 = vld [vmem:[%s404 + $0x2c0] sm:$0xff]
        %v1137 = vld [vmem:[%s404 + $0x2c8] sm:$0xff]
        %v1138 = vld [vmem:[%s404 + $0x2d0] sm:$0xff]
        %v1139 = vld [vmem:[%s404 + $0x2d8] sm:$0xff]
        %v1140 = vld [vmem:[%s404 + $0x2e0] sm:$0xff]
        %v1141 = vld [vmem:[%s404 + $0x2e8] sm:$0xff]
        %v1142 = vld [vmem:[%s404 + $0x2f0] sm:$0xff]
        %v1143 = vld [vmem:[%s404 + $0x2f8] sm:$0xff]
        %v1144 = vadd.f32 %v1048, %v1054
        %v1145 = vrot.slane %v1144, 4
        %v1146 = vadd.f32 %v1144, %v1145
        %v1147 = vrot.slane %v1146, 2
        %v1148 = vadd.f32 %v1146, %v1147
        %v1149 = vrot.slane %v1148, 1
        %v1150 = vadd.f32 %v1148, %v1149
        %v1151 = vadd.f32 %v1049, %v1055
        %v1152 = vrot.slane %v1151, 4
        %v1153 = vadd.f32 %v1151, %v1152
        %v1154 = vrot.slane %v1153, 2
        %v1155 = vadd.f32 %v1153, %v1154
        %v1156 = vrot.slane %v1155, 1
        %v1157 = vadd.f32 %v1155, %v1156
        %v1158 = vadd.f32 %v1050, %v1056
        %v1159 = vrot.slane %v1158, 4
        %v1160 = vadd.f32 %v1158, %v1159
        %v1161 = vrot.slane %v1160, 2
        %v1162 = vadd.f32 %v1160, %v1161
        %v1163 = vrot.slane %v1162, 1
        %v1164 = vadd.f32 %v1162, %v1163
        %v1165 = vadd.f32 %v1051, %v1057
        %v1166 = vrot.slane %v1165, 4
        %v1167 = vadd.f32 %v1165, %v1166
        %v1168 = vrot.slane %v1167, 2
        %v1169 = vadd.f32 %v1167, %v1168
        %v1170 = vrot.slane %v1169, 1
        %v1171 = vadd.f32 %v1169, %v1170
        %v1172 = vadd.f32 %v1052, %v1058
        %v1173 = vrot.slane %v1172, 4
        %v1174 = vadd.f32 %v1172, %v1173
        %v1175 = vrot.slane %v1174, 2
        %v1176 = vadd.f32 %v1174, %v1175
        %v1177 = vrot.slane %v1176, 1
        %v1178 = vadd.f32 %v1176, %v1177
        %v1179 = vadd.f32 %v1053, %v1059
        %v1180 = vrot.slane %v1179, 4
        %v1181 = vadd.f32 %v1179, %v1180
        %v1182 = vrot.slane %v1181, 2
        %v1183 = vadd.f32 %v1181, %v1182
        %v1184 = vrot.slane %v1183, 1
        %v1185 = vadd.f32 %v1183, %v1184
        %v1186 = vadd.f32 %v1060, %v1066
        %v1187 = vrot.slane %v1186, 4
        %v1188 = vadd.f32 %v1186, %v1187
        %v1189 = vrot.slane %v1188, 2
        %v1190 = vadd.f32 %v1188, %v1189
        %v1191 = vrot.slane %v1190, 1
        %v1192 = vadd.f32 %v1190, %v1191
        %v1193 = vadd.f32 %v1061, %v1067
        %v1194 = vrot.slane %v1193, 4
        %v1195 = vadd.f32 %v1193, %v1194
        %v1196 = vrot.slane %v1195, 2
        %v1197 = vadd.f32 %v1195, %v1196
        %v1198 = vrot.slane %v1197, 1
        %v1199 = vadd.f32 %v1197, %v1198
        %v1200 = vadd.f32 %v1062, %v1068
        %v1201 = vrot.slane %v1200, 4
        %v1202 = vadd.f32 %v1200, %v1201
        %v1203 = vrot.slane %v1202, 2
        %v1204 = vadd.f32 %v1202, %v1203
        %v1205 = vrot.slane %v1204, 1
        %v1206 = vadd.f32 %v1204, %v1205
        %v1207 = vadd.f32 %v1063, %v1069
        %v1208 = vrot.slane %v1207, 4
        %v1209 = vadd.f32 %v1207, %v1208
        %v1210 = vrot.slane %v1209, 2
        %v1211 = vadd.f32 %v1209, %v1210
        %v1212 = vrot.slane %v1211, 1
        %v1213 = vadd.f32 %v1211, %v1212
        %v1214 = vadd.f32 %v1064, %v1070
        %v1215 = vrot.slane %v1214, 4
        %v1216 = vadd.f32 %v1214, %v1215
        %v1217 = vrot.slane %v1216, 2
        %v1218 = vadd.f32 %v1216, %v1217
        %v1219 = vrot.slane %v1218, 1
        %v1220 = vadd.f32 %v1218, %v1219
        %v1221 = vadd.f32 %v1065, %v1071
        %v1222 = vrot.slane %v1221, 4
        %v1223 = vadd.f32 %v1221, %v1222
        %v1224 = vrot.slane %v1223, 2
        %v1225 = vadd.f32 %v1223, %v1224
        %v1226 = vrot.slane %v1225, 1
        %v1227 = vadd.f32 %v1225, %v1226
        %v1228 = vadd.f32 %v1072, %v1078
        %v1229 = vrot.slane %v1228, 4
        %v1230 = vadd.f32 %v1228, %v1229
        %v1231 = vrot.slane %v1230, 2
        %v1232 = vadd.f32 %v1230, %v1231
        %v1233 = vrot.slane %v1232, 1
        %v1234 = vadd.f32 %v1232, %v1233
        %v1235 = vadd.f32 %v1073, %v1079
        %v1236 = vrot.slane %v1235, 4
        %v1237 = vadd.f32 %v1235, %v1236
        %v1238 = vrot.slane %v1237, 2
        %v1239 = vadd.f32 %v1237, %v1238
        %v1240 = vrot.slane %v1239, 1
        %v1241 = vadd.f32 %v1239, %v1240
        %v1242 = vadd.f32 %v1074, %v1080
        %v1243 = vrot.slane %v1242, 4
        %v1244 = vadd.f32 %v1242, %v1243
        %v1245 = vrot.slane %v1244, 2
        %v1246 = vadd.f32 %v1244, %v1245
        %v1247 = vrot.slane %v1246, 1
        %v1248 = vadd.f32 %v1246, %v1247
        %v1249 = vadd.f32 %v1075, %v1081
        %v1250 = vrot.slane %v1249, 4
        %v1251 = vadd.f32 %v1249, %v1250
        %v1252 = vrot.slane %v1251, 2
        %v1253 = vadd.f32 %v1251, %v1252
        %v1254 = vrot.slane %v1253, 1
        %v1255 = vadd.f32 %v1253, %v1254
        %v1256 = vadd.f32 %v1076, %v1082
        %v1257 = vrot.slane %v1256, 4
        %v1258 = vadd.f32 %v1256, %v1257
        %v1259 = vrot.slane %v1258, 2
        %v1260 = vadd.f32 %v1258, %v1259
        %v1261 = vrot.slane %v1260, 1
        %v1262 = vadd.f32 %v1260, %v1261
        %v1263 = vadd.f32 %v1077, %v1083
        %v1264 = vrot.slane %v1263, 4
        %v1265 = vadd.f32 %v1263, %v1264
        %v1266 = vrot.slane %v1265, 2
        %v1267 = vadd.f32 %v1265, %v1266
        %v1268 = vrot.slane %v1267, 1
        %v1269 = vadd.f32 %v1267, %v1268
        %v1270 = vadd.f32 %v1084, %v1090
        %v1271 = vrot.slane %v1270, 4
        %v1272 = vadd.f32 %v1270, %v1271
        %v1273 = vrot.slane %v1272, 2
        %v1274 = vadd.f32 %v1272, %v1273
        %v1275 = vrot.slane %v1274, 1
        %v1276 = vadd.f32 %v1274, %v1275
        %v1277 = vadd.f32 %v1085, %v1091
        %v1278 = vrot.slane %v1277, 4
        %v1279 = vadd.f32 %v1277, %v1278
        %v1280 = vrot.slane %v1279, 2
        %v1281 = vadd.f32 %v1279, %v1280
        %v1282 = vrot.slane %v1281, 1
        %v1283 = vadd.f32 %v1281, %v1282
        %v1284 = vadd.f32 %v1086, %v1092
        %v1285 = vrot.slane %v1284, 4
        %v1286 = vadd.f32 %v1284, %v1285
        %v1287 = vrot.slane %v1286, 2
        %v1288 = vadd.f32 %v1286, %v1287
        %v1289 = vrot.slane %v1288, 1
        %v1290 = vadd.f32 %v1288, %v1289
        %v1291 = vadd.f32 %v1087, %v1093
        %v1292 = vrot.slane %v1291, 4
        %v1293 = vadd.f32 %v1291, %v1292
        %v1294 = vrot.slane %v1293, 2
        %v1295 = vadd.f32 %v1293, %v1294
        %v1296 = vrot.slane %v1295, 1
        %v1297 = vadd.f32 %v1295, %v1296
        %v1298 = vadd.f32 %v1088, %v1094
        %v1299 = vrot.slane %v1298, 4
        %v1300 = vadd.f32 %v1298, %v1299
        %v1301 = vrot.slane %v1300, 2
        %v1302 = vadd.f32 %v1300, %v1301
        %v1303 = vrot.slane %v1302, 1
        %v1304 = vadd.f32 %v1302, %v1303
        %v1305 = vadd.f32 %v1089, %v1095
        %v1306 = vrot.slane %v1305, 4
        %v1307 = vadd.f32 %v1305, %v1306
        %v1308 = vrot.slane %v1307, 2
        %v1309 = vadd.f32 %v1307, %v1308
        %v1310 = vrot.slane %v1309, 1
        %v1311 = vadd.f32 %v1309, %v1310
        %v1312 = vadd.f32 %v1096, %v1102
        %v1313 = vrot.slane %v1312, 4
        %v1314 = vadd.f32 %v1312, %v1313
        %v1315 = vrot.slane %v1314, 2
        %v1316 = vadd.f32 %v1314, %v1315
        %v1317 = vrot.slane %v1316, 1
        %v1318 = vadd.f32 %v1316, %v1317
        %v1319 = vadd.f32 %v1097, %v1103
        %v1320 = vrot.slane %v1319, 4
        %v1321 = vadd.f32 %v1319, %v1320
        %v1322 = vrot.slane %v1321, 2
        %v1323 = vadd.f32 %v1321, %v1322
        %v1324 = vrot.slane %v1323, 1
        %v1325 = vadd.f32 %v1323, %v1324
        %v1326 = vadd.f32 %v1098, %v1104
        %v1327 = vrot.slane %v1326, 4
        %v1328 = vadd.f32 %v1326, %v1327
        %v1329 = vrot.slane %v1328, 2
        %v1330 = vadd.f32 %v1328, %v1329
        %v1331 = vrot.slane %v1330, 1
        %v1332 = vadd.f32 %v1330, %v1331
        %v1333 = vadd.f32 %v1099, %v1105
        %v1334 = vrot.slane %v1333, 4
        %v1335 = vadd.f32 %v1333, %v1334
        %v1336 = vrot.slane %v1335, 2
        %v1337 = vadd.f32 %v1335, %v1336
        %v1338 = vrot.slane %v1337, 1
        %v1339 = vadd.f32 %v1337, %v1338
        %v1340 = vadd.f32 %v1100, %v1106
        %v1341 = vrot.slane %v1340, 4
        %v1342 = vadd.f32 %v1340, %v1341
        %v1343 = vrot.slane %v1342, 2
        %v1344 = vadd.f32 %v1342, %v1343
        %v1345 = vrot.slane %v1344, 1
        %v1346 = vadd.f32 %v1344, %v1345
        %v1347 = vadd.f32 %v1101, %v1107
        %v1348 = vrot.slane %v1347, 4
        %v1349 = vadd.f32 %v1347, %v1348
        %v1350 = vrot.slane %v1349, 2
        %v1351 = vadd.f32 %v1349, %v1350
        %v1352 = vrot.slane %v1351, 1
        %v1353 = vadd.f32 %v1351, %v1352
        %v1354 = vadd.f32 %v1108, %v1114
        %v1355 = vrot.slane %v1354, 4
        %v1356 = vadd.f32 %v1354, %v1355
        %v1357 = vrot.slane %v1356, 2
        %v1358 = vadd.f32 %v1356, %v1357
        %v1359 = vrot.slane %v1358, 1
        %v1360 = vadd.f32 %v1358, %v1359
        %v1361 = vadd.f32 %v1109, %v1115
        %v1362 = vrot.slane %v1361, 4
        %v1363 = vadd.f32 %v1361, %v1362
        %v1364 = vrot.slane %v1363, 2
        %v1365 = vadd.f32 %v1363, %v1364
        %v1366 = vrot.slane %v1365, 1
        %v1367 = vadd.f32 %v1365, %v1366
        %v1368 = vadd.f32 %v1110, %v1116
        %v1369 = vrot.slane %v1368, 4
        %v1370 = vadd.f32 %v1368, %v1369
        %v1371 = vrot.slane %v1370, 2
        %v1372 = vadd.f32 %v1370, %v1371
        %v1373 = vrot.slane %v1372, 1
        %v1374 = vadd.f32 %v1372, %v1373
        %v1375 = vadd.f32 %v1111, %v1117
        %v1376 = vrot.slane %v1375, 4
        %v1377 = vadd.f32 %v1375, %v1376
        %v1378 = vrot.slane %v1377, 2
        %v1379 = vadd.f32 %v1377, %v1378
        %v1380 = vrot.slane %v1379, 1
        %v1381 = vadd.f32 %v1379, %v1380
        %v1382 = vadd.f32 %v1112, %v1118
        %v1383 = vrot.slane %v1382, 4
        %v1384 = vadd.f32 %v1382, %v1383
        %v1385 = vrot.slane %v1384, 2
        %v1386 = vadd.f32 %v1384, %v1385
        %v1387 = vrot.slane %v1386, 1
        %v1388 = vadd.f32 %v1386, %v1387
        %v1389 = vadd.f32 %v1113, %v1119
        %v1390 = vrot.slane %v1389, 4
        %v1391 = vadd.f32 %v1389, %v1390
        %v1392 = vrot.slane %v1391, 2
        %v1393 = vadd.f32 %v1391, %v1392
        %v1394 = vrot.slane %v1393, 1
        %v1395 = vadd.f32 %v1393, %v1394
        %v1396 = vadd.f32 %v1120, %v1126
        %v1397 = vrot.slane %v1396, 4
        %v1398 = vadd.f32 %v1396, %v1397
        %v1399 = vrot.slane %v1398, 2
        %v1400 = vadd.f32 %v1398, %v1399
        %v1401 = vrot.slane %v1400, 1
        %v1402 = vadd.f32 %v1400, %v1401
        %v1403 = vadd.f32 %v1121, %v1127
        %v1404 = vrot.slane %v1403, 4
        %v1405 = vadd.f32 %v1403, %v1404
        %v1406 = vrot.slane %v1405, 2
        %v1407 = vadd.f32 %v1405, %v1406
        %v1408 = vrot.slane %v1407, 1
        %v1409 = vadd.f32 %v1407, %v1408
        %v1410 = vadd.f32 %v1122, %v1128
        %v1411 = vrot.slane %v1410, 4
        %v1412 = vadd.f32 %v1410, %v1411
        %v1413 = vrot.slane %v1412, 2
        %v1414 = vadd.f32 %v1412, %v1413
        %v1415 = vrot.slane %v1414, 1
        %v1416 = vadd.f32 %v1414, %v1415
        %v1417 = vadd.f32 %v1123, %v1129
        %v1418 = vrot.slane %v1417, 4
        %v1419 = vadd.f32 %v1417, %v1418
        %v1420 = vrot.slane %v1419, 2
        %v1421 = vadd.f32 %v1419, %v1420
        %v1422 = vrot.slane %v1421, 1
        %v1423 = vadd.f32 %v1421, %v1422
        %v1424 = vadd.f32 %v1124, %v1130
        %v1425 = vrot.slane %v1424, 4
        %v1426 = vadd.f32 %v1424, %v1425
        %v1427 = vrot.slane %v1426, 2
        %v1428 = vadd.f32 %v1426, %v1427
        %v1429 = vrot.slane %v1428, 1
        %v1430 = vadd.f32 %v1428, %v1429
        %v1431 = vadd.f32 %v1125, %v1131
        %v1432 = vrot.slane %v1431, 4
        %v1433 = vadd.f32 %v1431, %v1432
        %v1434 = vrot.slane %v1433, 2
        %v1435 = vadd.f32 %v1433, %v1434
        %v1436 = vrot.slane %v1435, 1
        %v1437 = vadd.f32 %v1435, %v1436
        %v1438 = vadd.f32 %v1132, %v1138
        %v1439 = vrot.slane %v1438, 4
        %v1440 = vadd.f32 %v1438, %v1439
        %v1441 = vrot.slane %v1440, 2
        %v1442 = vadd.f32 %v1440, %v1441
        %v1443 = vrot.slane %v1442, 1
        %v1444 = vadd.f32 %v1442, %v1443
        %v1445 = vadd.f32 %v1133, %v1139
        %v1446 = vrot.slane %v1445, 4
        %v1447 = vadd.f32 %v1445, %v1446
        %v1448 = vrot.slane %v1447, 2
        %v1449 = vadd.f32 %v1447, %v1448
        %v1450 = vrot.slane %v1449, 1
        %v1451 = vadd.f32 %v1449, %v1450
        %v1452 = vadd.f32 %v1134, %v1140
        %v1453 = vrot.slane %v1452, 4
        %v1454 = vadd.f32 %v1452, %v1453
        %v1455 = vrot.slane %v1454, 2
        %v1456 = vadd.f32 %v1454, %v1455
        %v1457 = vrot.slane %v1456, 1
        %v1458 = vadd.f32 %v1456, %v1457
        %v1459 = vadd.f32 %v1135, %v1141
        %v1460 = vrot.slane %v1459, 4
        %v1461 = vadd.f32 %v1459, %v1460
        %v1462 = vrot.slane %v1461, 2
        %v1463 = vadd.f32 %v1461, %v1462
        %v1464 = vrot.slane %v1463, 1
        %v1465 = vadd.f32 %v1463, %v1464
        %v1466 = vadd.f32 %v1136, %v1142
        %v1467 = vrot.slane %v1466, 4
        %v1468 = vadd.f32 %v1466, %v1467
        %v1469 = vrot.slane %v1468, 2
        %v1470 = vadd.f32 %v1468, %v1469
        %v1471 = vrot.slane %v1470, 1
        %v1472 = vadd.f32 %v1470, %v1471
        %v1473 = vadd.f32 %v1137, %v1143
        %v1474 = vrot.slane %v1473, 4
        %v1475 = vadd.f32 %v1473, %v1474
        %v1476 = vrot.slane %v1475, 2
        %v1477 = vadd.f32 %v1475, %v1476
        %v1478 = vrot.slane %v1477, 1
        %v1479 = vadd.f32 %v1477, %v1478
        %v1528 = vsel %vm975, %v1192, %v1150
        %v1529 = vsel %vm977, %v1234, %v1528
        %v1530 = vsel %vm979, %v1276, %v1529
        %v1531 = vsel %vm981, %v1318, %v1530
        %v1532 = vsel %vm983, %v1360, %v1531
        %v1533 = vsel %vm985, %v1402, %v1532
        %v1534 = vsel %vm987, %v1444, %v1533
        %v1535 = vsel %vm975, %v1199, %v1157
        %v1536 = vsel %vm977, %v1241, %v1535
        %v1537 = vsel %vm979, %v1283, %v1536
        %v1538 = vsel %vm981, %v1325, %v1537
        %v1539 = vsel %vm983, %v1367, %v1538
        %v1540 = vsel %vm985, %v1409, %v1539
        %v1541 = vsel %vm987, %v1451, %v1540
        %v1542 = vsel %vm975, %v1206, %v1164
        %v1543 = vsel %vm977, %v1248, %v1542
        %v1544 = vsel %vm979, %v1290, %v1543
        %v1545 = vsel %vm981, %v1332, %v1544
        %v1546 = vsel %vm983, %v1374, %v1545
        %v1547 = vsel %vm985, %v1416, %v1546
        %v1548 = vsel %vm987, %v1458, %v1547
        %v1549 = vsel %vm975, %v1213, %v1171
        %v1550 = vsel %vm977, %v1255, %v1549
        %v1551 = vsel %vm979, %v1297, %v1550
        %v1552 = vsel %vm981, %v1339, %v1551
        %v1553 = vsel %vm983, %v1381, %v1552
        %v1554 = vsel %vm985, %v1423, %v1553
        %v1555 = vsel %vm987, %v1465, %v1554
        %v1556 = vsel %vm975, %v1220, %v1178
        %v1557 = vsel %vm977, %v1262, %v1556
        %v1558 = vsel %vm979, %v1304, %v1557
        %v1559 = vsel %vm981, %v1346, %v1558
        %v1560 = vsel %vm983, %v1388, %v1559
        %v1561 = vsel %vm985, %v1430, %v1560
        %v1562 = vsel %vm987, %v1472, %v1561
        %v1563 = vsel %vm975, %v1227, %v1185
        %v1564 = vsel %vm977, %v1269, %v1563
        %v1565 = vsel %vm979, %v1311, %v1564
        %v1566 = vsel %vm981, %v1353, %v1565
        %v1567 = vsel %vm983, %v1395, %v1566
        %v1568 = vsel %vm985, %v1437, %v1567
        %v1569 = vsel %vm987, %v1479, %v1568
        %v1576 = vadd.f32 %v1042, %v1534
        %v1577 = vadd.f32 %v1043, %v1541
        %v1578 = vadd.f32 %v1044, %v1548
        %v1579 = vadd.f32 %v1045, %v1555
        %v1580 = vadd.f32 %v1046, %v1562
        %v1581 = vadd.f32 %v1047, %v1569
        %1582 = vst [vmem:[#allocation2 + $0x30] sm:$0xff] %v1576
        %1583 = vst [vmem:[#allocation2 + $0x38] sm:$0xff] %v1577
        %1584 = vst [vmem:[#allocation2 + $0x40] sm:$0xff] %v1578
        %1585 = vst [vmem:[#allocation2 + $0x48] sm:$0xff] %v1579
        %1586 = vst [vmem:[#allocation2 + $0x50] sm:$0xff] %v1580
        %1587 = vst [vmem:[#allocation2 + $0x58] sm:$0xff] %v1581
        // Predicated region
        $region89: #{tpu_custom_call.1} parent=51 // pred_check
          %p1588 = pneg %p473
        $region90: #{tpu_custom_call.1} parent=51 // pred_check_branch
          %1590 = sbr.rel (%p1588) target = $region92
        $region91: #{tpu_custom_call.1} parent=51 // pred_region
          %v1591 = vld [vmem:[#allocation2] sm:$0xff]
          %v1592 = vld [vmem:[#allocation2 + $0x8] sm:$0xff]
          %v1593 = vld [vmem:[#allocation2 + $0x10] sm:$0xff]
          %v1594 = vld [vmem:[#allocation2 + $0x18] sm:$0xff]
          %v1595 = vld [vmem:[#allocation2 + $0x20] sm:$0xff]
          %v1596 = vld [vmem:[#allocation2 + $0x28] sm:$0xff]
          %v1597 = vld [vmem:[#allocation2 + $0x30] sm:$0xff]
          %v1598 = vld [vmem:[#allocation2 + $0x38] sm:$0xff]
          %v1599 = vld [vmem:[#allocation2 + $0x40] sm:$0xff]
          %v1600 = vld [vmem:[#allocation2 + $0x48] sm:$0xff]
          %v1601 = vld [vmem:[#allocation2 + $0x50] sm:$0xff]
          %v1602 = vld [vmem:[#allocation2 + $0x58] sm:$0xff]
          %v1603 = vld [vmem:[#allocation7] sm:$0xff]
          %v1604 = vld [vmem:[#allocation7 + $0x8] sm:$0xff]
          %v1605 = vld [vmem:[#allocation7 + $0x10] sm:$0xff]
          %v1606 = vld [vmem:[#allocation7 + $0x18] sm:$0xff]
          %v1607 = vld [vmem:[#allocation7 + $0x20] sm:$0xff]
          %v1608 = vld [vmem:[#allocation7 + $0x28] sm:$0xff]
          %v1609 = vld [vmem:[#allocation7 + $0x30] sm:$0xff]
          %v1610 = vld [vmem:[#allocation7 + $0x38] sm:$0xff]
          %v1611 = vld [vmem:[#allocation7 + $0x40] sm:$0xff]
          %v1612 = vld [vmem:[#allocation7 + $0x48] sm:$0xff]
          %v1613 = vld [vmem:[#allocation7 + $0x50] sm:$0xff]
          %v1614 = vld [vmem:[#allocation7 + $0x58] sm:$0xff]
          %v1615 = vld [vmem:[#allocation7 + $0x60] sm:$0xff]
          %v1616 = vld [vmem:[#allocation7 + $0x68] sm:$0xff]
          %v1617 = vld [vmem:[#allocation7 + $0x70] sm:$0xff]
          %v1618 = vld [vmem:[#allocation7 + $0x78] sm:$0xff]
          %v1619 = vld [vmem:[#allocation7 + $0x80] sm:$0xff]
          %v1620 = vld [vmem:[#allocation7 + $0x88] sm:$0xff]
          %v1621 = vld [vmem:[#allocation7 + $0x90] sm:$0xff]
          %v1622 = vld [vmem:[#allocation7 + $0x98] sm:$0xff]
          %v1623 = vld [vmem:[#allocation7 + $0xa0] sm:$0xff]
          %v1624 = vld [vmem:[#allocation7 + $0xa8] sm:$0xff]
          %v1625 = vld [vmem:[#allocation7 + $0xb0] sm:$0xff]
          %v1626 = vld [vmem:[#allocation7 + $0xb8] sm:$0xff]
          %v1627 = vld [vmem:[#allocation7 + $0xc0] sm:$0xff]
          %v1628 = vld [vmem:[#allocation7 + $0xc8] sm:$0xff]
          %v1629 = vld [vmem:[#allocation7 + $0xd0] sm:$0xff]
          %v1630 = vld [vmem:[#allocation7 + $0xd8] sm:$0xff]
          %v1631 = vld [vmem:[#allocation7 + $0xe0] sm:$0xff]
          %v1632 = vld [vmem:[#allocation7 + $0xe8] sm:$0xff]
          %v1633 = vld [vmem:[#allocation7 + $0xf0] sm:$0xff]
          %v1634 = vld [vmem:[#allocation7 + $0xf8] sm:$0xff]
          %v1635 = vld [vmem:[#allocation7 + $0x100] sm:$0xff]
          %v1636 = vld [vmem:[#allocation7 + $0x108] sm:$0xff]
          %v1637 = vld [vmem:[#allocation7 + $0x110] sm:$0xff]
          %v1638 = vld [vmem:[#allocation7 + $0x118] sm:$0xff]
          %v1639 = vld [vmem:[#allocation7 + $0x120] sm:$0xff]
          %v1640 = vld [vmem:[#allocation7 + $0x128] sm:$0xff]
          %v1641 = vld [vmem:[#allocation7 + $0x130] sm:$0xff]
          %v1642 = vld [vmem:[#allocation7 + $0x138] sm:$0xff]
          %v1643 = vld [vmem:[#allocation7 + $0x140] sm:$0xff]
          %v1644 = vld [vmem:[#allocation7 + $0x148] sm:$0xff]
          %v1645 = vld [vmem:[#allocation7 + $0x150] sm:$0xff]
          %v1646 = vld [vmem:[#allocation7 + $0x158] sm:$0xff]
          %v1647 = vld [vmem:[#allocation7 + $0x160] sm:$0xff]
          %v1648 = vld [vmem:[#allocation7 + $0x168] sm:$0xff]
          %v1649 = vld [vmem:[#allocation7 + $0x170] sm:$0xff]
          %v1650 = vld [vmem:[#allocation7 + $0x178] sm:$0xff]
          %v1651 = vld [vmem:[#allocation7 + $0x180] sm:$0xff]
          %v1652 = vld [vmem:[#allocation7 + $0x188] sm:$0xff]
          %v1653 = vld [vmem:[#allocation7 + $0x190] sm:$0xff]
          %v1654 = vld [vmem:[#allocation7 + $0x198] sm:$0xff]
          %v1655 = vld [vmem:[#allocation7 + $0x1a0] sm:$0xff]
          %v1656 = vld [vmem:[#allocation7 + $0x1a8] sm:$0xff]
          %v1657 = vld [vmem:[#allocation7 + $0x1b0] sm:$0xff]
          %v1658 = vld [vmem:[#allocation7 + $0x1b8] sm:$0xff]
          %v1659 = vld [vmem:[#allocation7 + $0x1c0] sm:$0xff]
          %v1660 = vld [vmem:[#allocation7 + $0x1c8] sm:$0xff]
          %v1661 = vld [vmem:[#allocation7 + $0x1d0] sm:$0xff]
          %v1662 = vld [vmem:[#allocation7 + $0x1d8] sm:$0xff]
          %v1663 = vld [vmem:[#allocation7 + $0x1e0] sm:$0xff]
          %v1664 = vld [vmem:[#allocation7 + $0x1e8] sm:$0xff]
          %v1665 = vld [vmem:[#allocation7 + $0x1f0] sm:$0xff]
          %v1666 = vld [vmem:[#allocation7 + $0x1f8] sm:$0xff]
          %v1667 = vld [vmem:[#allocation7 + $0x200] sm:$0xff]
          %v1668 = vld [vmem:[#allocation7 + $0x208] sm:$0xff]
          %v1669 = vld [vmem:[#allocation7 + $0x210] sm:$0xff]
          %v1670 = vld [vmem:[#allocation7 + $0x218] sm:$0xff]
          %v1671 = vld [vmem:[#allocation7 + $0x220] sm:$0xff]
          %v1672 = vld [vmem:[#allocation7 + $0x228] sm:$0xff]
          %v1673 = vld [vmem:[#allocation7 + $0x230] sm:$0xff]
          %v1674 = vld [vmem:[#allocation7 + $0x238] sm:$0xff]
          %v1675 = vld [vmem:[#allocation7 + $0x240] sm:$0xff]
          %v1676 = vld [vmem:[#allocation7 + $0x248] sm:$0xff]
          %v1677 = vld [vmem:[#allocation7 + $0x250] sm:$0xff]
          %v1678 = vld [vmem:[#allocation7 + $0x258] sm:$0xff]
          %v1679 = vld [vmem:[#allocation7 + $0x260] sm:$0xff]
          %v1680 = vld [vmem:[#allocation7 + $0x268] sm:$0xff]
          %v1681 = vld [vmem:[#allocation7 + $0x270] sm:$0xff]
          %v1682 = vld [vmem:[#allocation7 + $0x278] sm:$0xff]
          %v1683 = vld [vmem:[#allocation7 + $0x280] sm:$0xff]
          %v1684 = vld [vmem:[#allocation7 + $0x288] sm:$0xff]
          %v1685 = vld [vmem:[#allocation7 + $0x290] sm:$0xff]
          %v1686 = vld [vmem:[#allocation7 + $0x298] sm:$0xff]
          %v1687 = vld [vmem:[#allocation7 + $0x2a0] sm:$0xff]
          %v1688 = vld [vmem:[#allocation7 + $0x2a8] sm:$0xff]
          %v1689 = vld [vmem:[#allocation7 + $0x2b0] sm:$0xff]
          %v1690 = vld [vmem:[#allocation7 + $0x2b8] sm:$0xff]
          %v1691 = vld [vmem:[#allocation7 + $0x2c0] sm:$0xff]
          %v1692 = vld [vmem:[#allocation7 + $0x2c8] sm:$0xff]
          %v1693 = vld [vmem:[#allocation7 + $0x2d0] sm:$0xff]
          %v1694 = vld [vmem:[#allocation7 + $0x2d8] sm:$0xff]
          %v1695 = vld [vmem:[#allocation7 + $0x2e0] sm:$0xff]
          %v1696 = vld [vmem:[#allocation7 + $0x2e8] sm:$0xff]
          %v1697 = vld [vmem:[#allocation7 + $0x2f0] sm:$0xff]
          %v1698 = vld [vmem:[#allocation7 + $0x2f8] sm:$0xff]
          %v1699 = vld [vmem:[#allocation7 + $0x300] sm:$0xff]
          %v1700 = vld [vmem:[#allocation7 + $0x308] sm:$0xff]
          %v1701 = vld [vmem:[#allocation7 + $0x310] sm:$0xff]
          %v1702 = vld [vmem:[#allocation7 + $0x318] sm:$0xff]
          %v1703 = vld [vmem:[#allocation7 + $0x320] sm:$0xff]
          %v1704 = vld [vmem:[#allocation7 + $0x328] sm:$0xff]
          %v1705 = vld [vmem:[#allocation7 + $0x330] sm:$0xff]
          %v1706 = vld [vmem:[#allocation7 + $0x338] sm:$0xff]
          %v1707 = vld [vmem:[#allocation7 + $0x340] sm:$0xff]
          %v1708 = vld [vmem:[#allocation7 + $0x348] sm:$0xff]
          %v1709 = vld [vmem:[#allocation7 + $0x350] sm:$0xff]
          %v1710 = vld [vmem:[#allocation7 + $0x358] sm:$0xff]
          %v1711 = vld [vmem:[#allocation7 + $0x360] sm:$0xff]
          %v1712 = vld [vmem:[#allocation7 + $0x368] sm:$0xff]
          %v1713 = vld [vmem:[#allocation7 + $0x370] sm:$0xff]
          %v1714 = vld [vmem:[#allocation7 + $0x378] sm:$0xff]
          %v1715 = vld [vmem:[#allocation7 + $0x380] sm:$0xff]
          %v1716 = vld [vmem:[#allocation7 + $0x388] sm:$0xff]
          %v1717 = vld [vmem:[#allocation7 + $0x390] sm:$0xff]
          %v1718 = vld [vmem:[#allocation7 + $0x398] sm:$0xff]
          %v1719 = vld [vmem:[#allocation7 + $0x3a0] sm:$0xff]
          %v1720 = vld [vmem:[#allocation7 + $0x3a8] sm:$0xff]
          %v1721 = vld [vmem:[#allocation7 + $0x3b0] sm:$0xff]
          %v1722 = vld [vmem:[#allocation7 + $0x3b8] sm:$0xff]
          %v1723 = vld [vmem:[#allocation7 + $0x3c0] sm:$0xff]
          %v1724 = vld [vmem:[#allocation7 + $0x3c8] sm:$0xff]
          %v1725 = vld [vmem:[#allocation7 + $0x3d0] sm:$0xff]
          %v1726 = vld [vmem:[#allocation7 + $0x3d8] sm:$0xff]
          %v1727 = vld [vmem:[#allocation7 + $0x3e0] sm:$0xff]
          %v1728 = vld [vmem:[#allocation7 + $0x3e8] sm:$0xff]
          %v1729 = vld [vmem:[#allocation7 + $0x3f0] sm:$0xff]
          %v1730 = vld [vmem:[#allocation7 + $0x3f8] sm:$0xff]
          %v1731 = vld [vmem:[#allocation7 + $0x400] sm:$0xff]
          %v1732 = vld [vmem:[#allocation7 + $0x408] sm:$0xff]
          %v1733 = vld [vmem:[#allocation7 + $0x410] sm:$0xff]
          %v1734 = vld [vmem:[#allocation7 + $0x418] sm:$0xff]
          %v1735 = vld [vmem:[#allocation7 + $0x420] sm:$0xff]
          %v1736 = vld [vmem:[#allocation7 + $0x428] sm:$0xff]
          %v1737 = vld [vmem:[#allocation7 + $0x430] sm:$0xff]
          %v1738 = vld [vmem:[#allocation7 + $0x438] sm:$0xff]
          %v1739 = vld [vmem:[#allocation7 + $0x440] sm:$0xff]
          %v1740 = vld [vmem:[#allocation7 + $0x448] sm:$0xff]
          %v1741 = vld [vmem:[#allocation7 + $0x450] sm:$0xff]
          %v1742 = vld [vmem:[#allocation7 + $0x458] sm:$0xff]
          %v1743 = vld [vmem:[#allocation7 + $0x460] sm:$0xff]
          %v1744 = vld [vmem:[#allocation7 + $0x468] sm:$0xff]
          %v1745 = vld [vmem:[#allocation7 + $0x470] sm:$0xff]
          %v1746 = vld [vmem:[#allocation7 + $0x478] sm:$0xff]
          %v1747 = vld [vmem:[#allocation7 + $0x480] sm:$0xff]
          %v1748 = vld [vmem:[#allocation7 + $0x488] sm:$0xff]
          %v1749 = vld [vmem:[#allocation7 + $0x490] sm:$0xff]
          %v1750 = vld [vmem:[#allocation7 + $0x498] sm:$0xff]
          %v1751 = vld [vmem:[#allocation7 + $0x4a0] sm:$0xff]
          %v1752 = vld [vmem:[#allocation7 + $0x4a8] sm:$0xff]
          %v1753 = vld [vmem:[#allocation7 + $0x4b0] sm:$0xff]
          %v1754 = vld [vmem:[#allocation7 + $0x4b8] sm:$0xff]
          %v1755 = vld [vmem:[#allocation7 + $0x4c0] sm:$0xff]
          %v1756 = vld [vmem:[#allocation7 + $0x4c8] sm:$0xff]
          %v1757 = vld [vmem:[#allocation7 + $0x4d0] sm:$0xff]
          %v1758 = vld [vmem:[#allocation7 + $0x4d8] sm:$0xff]
          %v1759 = vld [vmem:[#allocation7 + $0x4e0] sm:$0xff]
          %v1760 = vld [vmem:[#allocation7 + $0x4e8] sm:$0xff]
          %v1761 = vld [vmem:[#allocation7 + $0x4f0] sm:$0xff]
          %v1762 = vld [vmem:[#allocation7 + $0x4f8] sm:$0xff]
          %v1763 = vld [vmem:[#allocation7 + $0x500] sm:$0xff]
          %v1764 = vld [vmem:[#allocation7 + $0x508] sm:$0xff]
          %v1765 = vld [vmem:[#allocation7 + $0x510] sm:$0xff]
          %v1766 = vld [vmem:[#allocation7 + $0x518] sm:$0xff]
          %v1767 = vld [vmem:[#allocation7 + $0x520] sm:$0xff]
          %v1768 = vld [vmem:[#allocation7 + $0x528] sm:$0xff]
          %v1769 = vld [vmem:[#allocation7 + $0x530] sm:$0xff]
          %v1770 = vld [vmem:[#allocation7 + $0x538] sm:$0xff]
          %v1771 = vld [vmem:[#allocation7 + $0x540] sm:$0xff]
          %v1772 = vld [vmem:[#allocation7 + $0x548] sm:$0xff]
          %v1773 = vld [vmem:[#allocation7 + $0x550] sm:$0xff]
          %v1774 = vld [vmem:[#allocation7 + $0x558] sm:$0xff]
          %v1775 = vld [vmem:[#allocation7 + $0x560] sm:$0xff]
          %v1776 = vld [vmem:[#allocation7 + $0x568] sm:$0xff]
          %v1777 = vld [vmem:[#allocation7 + $0x570] sm:$0xff]
          %v1778 = vld [vmem:[#allocation7 + $0x578] sm:$0xff]
          %v1779 = vld [vmem:[#allocation7 + $0x580] sm:$0xff]
          %v1780 = vld [vmem:[#allocation7 + $0x588] sm:$0xff]
          %v1781 = vld [vmem:[#allocation7 + $0x590] sm:$0xff]
          %v1782 = vld [vmem:[#allocation7 + $0x598] sm:$0xff]
          %v1783 = vld [vmem:[#allocation7 + $0x5a0] sm:$0xff]
          %v1784 = vld [vmem:[#allocation7 + $0x5a8] sm:$0xff]
          %v1785 = vld [vmem:[#allocation7 + $0x5b0] sm:$0xff]
          %v1786 = vld [vmem:[#allocation7 + $0x5b8] sm:$0xff]
          %v1787 = vld [vmem:[#allocation7 + $0x5c0] sm:$0xff]
          %v1788 = vld [vmem:[#allocation7 + $0x5c8] sm:$0xff]
          %v1789 = vld [vmem:[#allocation7 + $0x5d0] sm:$0xff]
          %v1790 = vld [vmem:[#allocation7 + $0x5d8] sm:$0xff]
          %v1791 = vld [vmem:[#allocation7 + $0x5e0] sm:$0xff]
          %v1792 = vld [vmem:[#allocation7 + $0x5e8] sm:$0xff]
          %v1793 = vld [vmem:[#allocation7 + $0x5f0] sm:$0xff]
          %v1794 = vld [vmem:[#allocation7 + $0x5f8] sm:$0xff]
          %v1795 = vld [vmem:[#allocation7 + $0x600] sm:$0xff]
          %v1796 = vld [vmem:[#allocation7 + $0x608] sm:$0xff]
          %v1797 = vld [vmem:[#allocation7 + $0x610] sm:$0xff]
          %v1798 = vld [vmem:[#allocation7 + $0x618] sm:$0xff]
          %v1799 = vld [vmem:[#allocation7 + $0x620] sm:$0xff]
          %v1800 = vld [vmem:[#allocation7 + $0x628] sm:$0xff]
          %v1801 = vld [vmem:[#allocation7 + $0x630] sm:$0xff]
          %v1802 = vld [vmem:[#allocation7 + $0x638] sm:$0xff]
          %v1803 = vld [vmem:[#allocation7 + $0x640] sm:$0xff]
          %v1804 = vld [vmem:[#allocation7 + $0x648] sm:$0xff]
          %v1805 = vld [vmem:[#allocation7 + $0x650] sm:$0xff]
          %v1806 = vld [vmem:[#allocation7 + $0x658] sm:$0xff]
          %v1807 = vld [vmem:[#allocation7 + $0x660] sm:$0xff]
          %v1808 = vld [vmem:[#allocation7 + $0x668] sm:$0xff]
          %v1809 = vld [vmem:[#allocation7 + $0x670] sm:$0xff]
          %v1810 = vld [vmem:[#allocation7 + $0x678] sm:$0xff]
          %v1811 = vld [vmem:[#allocation7 + $0x680] sm:$0xff]
          %v1812 = vld [vmem:[#allocation7 + $0x688] sm:$0xff]
          %v1813 = vld [vmem:[#allocation7 + $0x690] sm:$0xff]
          %v1814 = vld [vmem:[#allocation7 + $0x698] sm:$0xff]
          %v1815 = vld [vmem:[#allocation7 + $0x6a0] sm:$0xff]
          %v1816 = vld [vmem:[#allocation7 + $0x6a8] sm:$0xff]
          %v1817 = vld [vmem:[#allocation7 + $0x6b0] sm:$0xff]
          %v1818 = vld [vmem:[#allocation7 + $0x6b8] sm:$0xff]
          %v1819 = vld [vmem:[#allocation7 + $0x6c0] sm:$0xff]
          %v1820 = vld [vmem:[#allocation7 + $0x6c8] sm:$0xff]
          %v1821 = vld [vmem:[#allocation7 + $0x6d0] sm:$0xff]
          %v1822 = vld [vmem:[#allocation7 + $0x6d8] sm:$0xff]
          %v1823 = vld [vmem:[#allocation7 + $0x6e0] sm:$0xff]
          %v1824 = vld [vmem:[#allocation7 + $0x6e8] sm:$0xff]
          %v1825 = vld [vmem:[#allocation7 + $0x6f0] sm:$0xff]
          %v1826 = vld [vmem:[#allocation7 + $0x6f8] sm:$0xff]
          %v1827 = vld [vmem:[#allocation7 + $0x700] sm:$0xff]
          %v1828 = vld [vmem:[#allocation7 + $0x708] sm:$0xff]
          %v1829 = vld [vmem:[#allocation7 + $0x710] sm:$0xff]
          %v1830 = vld [vmem:[#allocation7 + $0x718] sm:$0xff]
          %v1831 = vld [vmem:[#allocation7 + $0x720] sm:$0xff]
          %v1832 = vld [vmem:[#allocation7 + $0x728] sm:$0xff]
          %v1833 = vld [vmem:[#allocation7 + $0x730] sm:$0xff]
          %v1834 = vld [vmem:[#allocation7 + $0x738] sm:$0xff]
          %v1835 = vld [vmem:[#allocation7 + $0x740] sm:$0xff]
          %v1836 = vld [vmem:[#allocation7 + $0x748] sm:$0xff]
          %v1837 = vld [vmem:[#allocation7 + $0x750] sm:$0xff]
          %v1838 = vld [vmem:[#allocation7 + $0x758] sm:$0xff]
          %v1839 = vld [vmem:[#allocation7 + $0x760] sm:$0xff]
          %v1840 = vld [vmem:[#allocation7 + $0x768] sm:$0xff]
          %v1841 = vld [vmem:[#allocation7 + $0x770] sm:$0xff]
          %v1842 = vld [vmem:[#allocation7 + $0x778] sm:$0xff]
          %v1843 = vld [vmem:[#allocation7 + $0x780] sm:$0xff]
          %v1844 = vld [vmem:[#allocation7 + $0x788] sm:$0xff]
          %v1845 = vld [vmem:[#allocation7 + $0x790] sm:$0xff]
          %v1846 = vld [vmem:[#allocation7 + $0x798] sm:$0xff]
          %v1847 = vld [vmem:[#allocation7 + $0x7a0] sm:$0xff]
          %v1848 = vld [vmem:[#allocation7 + $0x7a8] sm:$0xff]
          %v1849 = vld [vmem:[#allocation7 + $0x7b0] sm:$0xff]
          %v1850 = vld [vmem:[#allocation7 + $0x7b8] sm:$0xff]
          %v1851 = vld [vmem:[#allocation7 + $0x7c0] sm:$0xff]
          %v1852 = vld [vmem:[#allocation7 + $0x7c8] sm:$0xff]
          %v1853 = vld [vmem:[#allocation7 + $0x7d0] sm:$0xff]
          %v1854 = vld [vmem:[#allocation7 + $0x7d8] sm:$0xff]
          %v1855 = vld [vmem:[#allocation7 + $0x7e0] sm:$0xff]
          %v1856 = vld [vmem:[#allocation7 + $0x7e8] sm:$0xff]
          %v1857 = vld [vmem:[#allocation7 + $0x7f0] sm:$0xff]
          %v1858 = vld [vmem:[#allocation7 + $0x7f8] sm:$0xff]
          %v1859 = vld [vmem:[#allocation7 + $0x800] sm:$0xff]
          %v1860 = vld [vmem:[#allocation7 + $0x808] sm:$0xff]
          %v1861 = vld [vmem:[#allocation7 + $0x810] sm:$0xff]
          %v1862 = vld [vmem:[#allocation7 + $0x818] sm:$0xff]
          %v1863 = vld [vmem:[#allocation7 + $0x820] sm:$0xff]
          %v1864 = vld [vmem:[#allocation7 + $0x828] sm:$0xff]
          %v1865 = vld [vmem:[#allocation7 + $0x830] sm:$0xff]
          %v1866 = vld [vmem:[#allocation7 + $0x838] sm:$0xff]
          %v1867 = vld [vmem:[#allocation7 + $0x840] sm:$0xff]
          %v1868 = vld [vmem:[#allocation7 + $0x848] sm:$0xff]
          %v1869 = vld [vmem:[#allocation7 + $0x850] sm:$0xff]
          %v1870 = vld [vmem:[#allocation7 + $0x858] sm:$0xff]
          %v1871 = vld [vmem:[#allocation7 + $0x860] sm:$0xff]
          %v1872 = vld [vmem:[#allocation7 + $0x868] sm:$0xff]
          %v1873 = vld [vmem:[#allocation7 + $0x870] sm:$0xff]
          %v1874 = vld [vmem:[#allocation7 + $0x878] sm:$0xff]
          %v1875 = vld [vmem:[#allocation7 + $0x880] sm:$0xff]
          %v1876 = vld [vmem:[#allocation7 + $0x888] sm:$0xff]
          %v1877 = vld [vmem:[#allocation7 + $0x890] sm:$0xff]
          %v1878 = vld [vmem:[#allocation7 + $0x898] sm:$0xff]
          %v1879 = vld [vmem:[#allocation7 + $0x8a0] sm:$0xff]
          %v1880 = vld [vmem:[#allocation7 + $0x8a8] sm:$0xff]
          %v1881 = vld [vmem:[#allocation7 + $0x8b0] sm:$0xff]
          %v1882 = vld [vmem:[#allocation7 + $0x8b8] sm:$0xff]
          %v1883 = vld [vmem:[#allocation7 + $0x8c0] sm:$0xff]
          %v1884 = vld [vmem:[#allocation7 + $0x8c8] sm:$0xff]
          %v1885 = vld [vmem:[#allocation7 + $0x8d0] sm:$0xff]
          %v1886 = vld [vmem:[#allocation7 + $0x8d8] sm:$0xff]
          %v1887 = vld [vmem:[#allocation7 + $0x8e0] sm:$0xff]
          %v1888 = vld [vmem:[#allocation7 + $0x8e8] sm:$0xff]
          %v1889 = vld [vmem:[#allocation7 + $0x8f0] sm:$0xff]
          %v1890 = vld [vmem:[#allocation7 + $0x8f8] sm:$0xff]
          %v1891 = vld [vmem:[#allocation7 + $0x900] sm:$0xff]
          %v1892 = vld [vmem:[#allocation7 + $0x908] sm:$0xff]
          %v1893 = vld [vmem:[#allocation7 + $0x910] sm:$0xff]
          %v1894 = vld [vmem:[#allocation7 + $0x918] sm:$0xff]
          %v1895 = vld [vmem:[#allocation7 + $0x920] sm:$0xff]
          %v1896 = vld [vmem:[#allocation7 + $0x928] sm:$0xff]
          %v1897 = vld [vmem:[#allocation7 + $0x930] sm:$0xff]
          %v1898 = vld [vmem:[#allocation7 + $0x938] sm:$0xff]
          %v1899 = vld [vmem:[#allocation7 + $0x940] sm:$0xff]
          %v1900 = vld [vmem:[#allocation7 + $0x948] sm:$0xff]
          %v1901 = vld [vmem:[#allocation7 + $0x950] sm:$0xff]
          %v1902 = vld [vmem:[#allocation7 + $0x958] sm:$0xff]
          %v1903 = vld [vmem:[#allocation7 + $0x960] sm:$0xff]
          %v1904 = vld [vmem:[#allocation7 + $0x968] sm:$0xff]
          %v1905 = vld [vmem:[#allocation7 + $0x970] sm:$0xff]
          %v1906 = vld [vmem:[#allocation7 + $0x978] sm:$0xff]
          %v1907 = vld [vmem:[#allocation7 + $0x980] sm:$0xff]
          %v1908 = vld [vmem:[#allocation7 + $0x988] sm:$0xff]
          %v1909 = vld [vmem:[#allocation7 + $0x990] sm:$0xff]
          %v1910 = vld [vmem:[#allocation7 + $0x998] sm:$0xff]
          %v1911 = vld [vmem:[#allocation7 + $0x9a0] sm:$0xff]
          %v1912 = vld [vmem:[#allocation7 + $0x9a8] sm:$0xff]
          %v1913 = vld [vmem:[#allocation7 + $0x9b0] sm:$0xff]
          %v1914 = vld [vmem:[#allocation7 + $0x9b8] sm:$0xff]
          %v1915 = vld [vmem:[#allocation7 + $0x9c0] sm:$0xff]
          %v1916 = vld [vmem:[#allocation7 + $0x9c8] sm:$0xff]
          %v1917 = vld [vmem:[#allocation7 + $0x9d0] sm:$0xff]
          %v1918 = vld [vmem:[#allocation7 + $0x9d8] sm:$0xff]
          %v1919 = vld [vmem:[#allocation7 + $0x9e0] sm:$0xff]
          %v1920 = vld [vmem:[#allocation7 + $0x9e8] sm:$0xff]
          %v1921 = vld [vmem:[#allocation7 + $0x9f0] sm:$0xff]
          %v1922 = vld [vmem:[#allocation7 + $0x9f8] sm:$0xff]
          %v1923 = vld [vmem:[#allocation7 + $0xa00] sm:$0xff]
          %v1924 = vld [vmem:[#allocation7 + $0xa08] sm:$0xff]
          %v1925 = vld [vmem:[#allocation7 + $0xa10] sm:$0xff]
          %v1926 = vld [vmem:[#allocation7 + $0xa18] sm:$0xff]
          %v1927 = vld [vmem:[#allocation7 + $0xa20] sm:$0xff]
          %v1928 = vld [vmem:[#allocation7 + $0xa28] sm:$0xff]
          %v1929 = vld [vmem:[#allocation7 + $0xa30] sm:$0xff]
          %v1930 = vld [vmem:[#allocation7 + $0xa38] sm:$0xff]
          %v1931 = vld [vmem:[#allocation7 + $0xa40] sm:$0xff]
          %v1932 = vld [vmem:[#allocation7 + $0xa48] sm:$0xff]
          %v1933 = vld [vmem:[#allocation7 + $0xa50] sm:$0xff]
          %v1934 = vld [vmem:[#allocation7 + $0xa58] sm:$0xff]
          %v1935 = vld [vmem:[#allocation7 + $0xa60] sm:$0xff]
          %v1936 = vld [vmem:[#allocation7 + $0xa68] sm:$0xff]
          %v1937 = vld [vmem:[#allocation7 + $0xa70] sm:$0xff]
          %v1938 = vld [vmem:[#allocation7 + $0xa78] sm:$0xff]
          %v1939 = vld [vmem:[#allocation7 + $0xa80] sm:$0xff]
          %v1940 = vld [vmem:[#allocation7 + $0xa88] sm:$0xff]
          %v1941 = vld [vmem:[#allocation7 + $0xa90] sm:$0xff]
          %v1942 = vld [vmem:[#allocation7 + $0xa98] sm:$0xff]
          %v1943 = vld [vmem:[#allocation7 + $0xaa0] sm:$0xff]
          %v1944 = vld [vmem:[#allocation7 + $0xaa8] sm:$0xff]
          %v1945 = vld [vmem:[#allocation7 + $0xab0] sm:$0xff]
          %v1946 = vld [vmem:[#allocation7 + $0xab8] sm:$0xff]
          %v1947 = vld [vmem:[#allocation7 + $0xac0] sm:$0xff]
          %v1948 = vld [vmem:[#allocation7 + $0xac8] sm:$0xff]
          %v1949 = vld [vmem:[#allocation7 + $0xad0] sm:$0xff]
          %v1950 = vld [vmem:[#allocation7 + $0xad8] sm:$0xff]
          %v1951 = vld [vmem:[#allocation7 + $0xae0] sm:$0xff]
          %v1952 = vld [vmem:[#allocation7 + $0xae8] sm:$0xff]
          %v1953 = vld [vmem:[#allocation7 + $0xaf0] sm:$0xff]
          %v1954 = vld [vmem:[#allocation7 + $0xaf8] sm:$0xff]
          %v1955 = vld [vmem:[#allocation7 + $0xb00] sm:$0xff]
          %v1956 = vld [vmem:[#allocation7 + $0xb08] sm:$0xff]
          %v1957 = vld [vmem:[#allocation7 + $0xb10] sm:$0xff]
          %v1958 = vld [vmem:[#allocation7 + $0xb18] sm:$0xff]
          %v1959 = vld [vmem:[#allocation7 + $0xb20] sm:$0xff]
          %v1960 = vld [vmem:[#allocation7 + $0xb28] sm:$0xff]
          %v1961 = vld [vmem:[#allocation7 + $0xb30] sm:$0xff]
          %v1962 = vld [vmem:[#allocation7 + $0xb38] sm:$0xff]
          %v1963 = vld [vmem:[#allocation7 + $0xb40] sm:$0xff]
          %v1964 = vld [vmem:[#allocation7 + $0xb48] sm:$0xff]
          %v1965 = vld [vmem:[#allocation7 + $0xb50] sm:$0xff]
          %v1966 = vld [vmem:[#allocation7 + $0xb58] sm:$0xff]
          %v1967 = vld [vmem:[#allocation7 + $0xb60] sm:$0xff]
          %v1968 = vld [vmem:[#allocation7 + $0xb68] sm:$0xff]
          %v1969 = vld [vmem:[#allocation7 + $0xb70] sm:$0xff]
          %v1970 = vld [vmem:[#allocation7 + $0xb78] sm:$0xff]
          %v1971 = vld [vmem:[#allocation7 + $0xb80] sm:$0xff]
          %v1972 = vld [vmem:[#allocation7 + $0xb88] sm:$0xff]
          %v1973 = vld [vmem:[#allocation7 + $0xb90] sm:$0xff]
          %v1974 = vld [vmem:[#allocation7 + $0xb98] sm:$0xff]
          %v1975 = vld [vmem:[#allocation7 + $0xba0] sm:$0xff]
          %v1976 = vld [vmem:[#allocation7 + $0xba8] sm:$0xff]
          %v1977 = vld [vmem:[#allocation7 + $0xbb0] sm:$0xff]
          %v1978 = vld [vmem:[#allocation7 + $0xbb8] sm:$0xff]
          %v1979 = vld [vmem:[#allocation7 + $0xbc0] sm:$0xff]
          %v1980 = vld [vmem:[#allocation7 + $0xbc8] sm:$0xff]
          %v1981 = vld [vmem:[#allocation7 + $0xbd0] sm:$0xff]
          %v1982 = vld [vmem:[#allocation7 + $0xbd8] sm:$0xff]
          %v1983 = vld [vmem:[#allocation7 + $0xbe0] sm:$0xff]
          %v1984 = vld [vmem:[#allocation7 + $0xbe8] sm:$0xff]
          %v1985 = vld [vmem:[#allocation7 + $0xbf0] sm:$0xff]
          %v1986 = vld [vmem:[#allocation7 + $0xbf8] sm:$0xff]
          %v1987 = vld [vmem:[#allocation8] sm:$0xf]
          %v1989 = vlaneseq
          %v1990 = vshrl.u32 %v1989, 7
          %v1991 = vsub.s32 0, %v1990
          %v1992 = vrot.slane %v1987, %v1991
          %v1993 = vlaneseq
          %v1994 = vshrl.u32 %v1993, 7
          %v1995 = vsub.s32 1, %v1994
          %v1996 = vrot.slane %v1987, %v1995
          %v1997 = vlaneseq
          %v1998 = vshrl.u32 %v1997, 7
          %v1999 = vsub.s32 2, %v1998
          %v2000 = vrot.slane %v1987, %v1999
          %v2001 = vlaneseq
          %v2002 = vshrl.u32 %v2001, 7
          %v2003 = vsub.s32 3, %v2002
          %v2004 = vrot.slane %v1987, %v2003
          %2009 = vmatprep.subr.mxu0 %v1604
          %2010 = vmatpush1.msra.mxu0 %v1603
          %2011 = vmatprep.subr.mxu0 %v1608
          %2012 = vmatpush1.msra.mxu0 %v1607
          %2013 = vmatprep.subr.mxu0 %v1612
          %2014 = vmatpush1.msra.mxu0 %v1611
          %2015 = vmatprep.subr.mxu0 %v1616
          %2016 = vmatpush1.msra.mxu0 %v1615
          %2017 = vmatprep.subr.mxu0 %v1620
          %2018 = vmatpush1.msra.mxu0 %v1619
          %2019 = vmatprep.subr.mxu0 %v1624
          %2020 = vmatpush1.msra.mxu0 %v1623
          %2021 = vmatprep.subr.mxu0 %v1628
          %2022 = vmatpush1.msra.mxu0 %v1627
          %2023 = vmatprep.subr.mxu0 %v1632
          %2024 = vmatpush1.msra.mxu0 %v1631
          %2025 = vmatprep.subr.mxu0 %v1636
          %2026 = vmatpush1.msra.mxu0 %v1635
          %2027 = vmatprep.subr.mxu0 %v1640
          %2028 = vmatpush1.msra.mxu0 %v1639
          %2029 = vmatprep.subr.mxu0 %v1644
          %2030 = vmatpush1.msra.mxu0 %v1643
          %2031 = vmatprep.subr.mxu0 %v1648
          %2032 = vmatpush1.msra.mxu0 %v1647
          %2033 = vmatprep.subr.mxu0 %v1652
          %2034 = vmatpush1.msra.mxu0 %v1651
          %2035 = vmatprep.subr.mxu0 %v1656
          %2036 = vmatpush1.msra.mxu0 %v1655
          %2037 = vmatprep.subr.mxu0 %v1660
          %2038 = vmatpush1.msra.mxu0 %v1659
          %2039 = vmatprep.subr.mxu0 %v1664
          %2040 = vmatpush1.msra.mxu0 %v1663
          %2041 = vmatprep.subr.mxu0 %v1668
          %2042 = vmatpush1.msra.mxu0 %v1667
          %2043 = vmatprep.subr.mxu0 %v1672
          %2044 = vmatpush1.msra.mxu0 %v1671
          %2045 = vmatprep.subr.mxu0 %v1676
          %2046 = vmatpush1.msra.mxu0 %v1675
          %2047 = vmatprep.subr.mxu0 %v1680
          %2048 = vmatpush1.msra.mxu0 %v1679
          %2049 = vmatprep.subr.mxu0 %v1684
          %2050 = vmatpush1.msra.mxu0 %v1683
          %2051 = vmatprep.subr.mxu0 %v1688
          %2052 = vmatpush1.msra.mxu0 %v1687
          %2053 = vmatprep.subr.mxu0 %v1692
          %2054 = vmatpush1.msra.mxu0 %v1691
          %2055 = vmatprep.subr.mxu0 %v1696
          %2056 = vmatpush1.msra.mxu0 %v1695
          %2057 = vmatprep.subr.mxu0 %v1700
          %2058 = vmatpush1.msra.mxu0 %v1699
          %2059 = vmatprep.subr.mxu0 %v1704
          %2060 = vmatpush1.msra.mxu0 %v1703
          %2061 = vmatprep.subr.mxu0 %v1708
          %2062 = vmatpush1.msra.mxu0 %v1707
          %2063 = vmatprep.subr.mxu0 %v1712
          %2064 = vmatpush1.msra.mxu0 %v1711
          %2065 = vmatprep.subr.mxu0 %v1716
          %2066 = vmatpush1.msra.mxu0 %v1715
          %2067 = vmatprep.subr.mxu0 %v1720
          %2068 = vmatpush1.msra.mxu0 %v1719
          %2069 = vmatprep.subr.mxu0 %v1724
          %2070 = vmatpush1.msra.mxu0 %v1723
          %2071 = vmatprep.subr.mxu0 %v1728
          %2072 = vmatpush1.msra.mxu0 %v1727
          %2073 = vmatprep.mubr.f32.mxu0 %v1592
          %2074 = vmatmul.mubr.f32.gmra.mrb[0].mxu0 %v1591
          %v2075 = vpop.f32.mrb[0].mxu0
          %v2076 = vadd.f32 %v1992, %v2075
          %v2077 = vpop.f32.mrb[0].mxu0
          %v2078 = vadd.f32 %v1996, %v2077
          %2079 = vmatprep.mubr.f32.mxu0 %v1598
          %2080 = vmatmul.mubr.f32.gmra.mrb[0].mxu0 %v1597
          %v2081 = vpop.f32.mrb[0].mxu0
          %v2082 = vadd.f32 %v1992, %v2081
          %v2083 = vpop.f32.mrb[0].mxu0
          %v2084 = vadd.f32 %v1996, %v2083
          %2085 = vdwg.mxu0
          %2086 = vmatprep.subr.mxu0 %v1732
          %2087 = vmatpush1.msra.mxu0 %v1731
          %2088 = vmatprep.subr.mxu0 %v1736
          %2089 = vmatpush1.msra.mxu0 %v1735
          %2090 = vmatprep.subr.mxu0 %v1740
          %2091 = vmatpush1.msra.mxu0 %v1739
          %2092 = vmatprep.subr.mxu0 %v1744
          %2093 = vmatpush1.msra.mxu0 %v1743
          %2094 = vmatprep.subr.mxu0 %v1748
          %2095 = vmatpush1.msra.mxu0 %v1747
          %2096 = vmatprep.subr.mxu0 %v1752
          %2097 = vmatpush1.msra.mxu0 %v1751
          %2098 = vmatprep.subr.mxu0 %v1756
          %2099 = vmatpush1.msra.mxu0 %v1755
          %2100 = vmatprep.subr.mxu0 %v1760
          %2101 = vmatpush1.msra.mxu0 %v1759
          %2102 = vmatprep.subr.mxu0 %v1764
          %2103 = vmatpush1.msra.mxu0 %v1763
          %2104 = vmatprep.subr.mxu0 %v1768
          %2105 = vmatpush1.msra.mxu0 %v1767
          %2106 = vmatprep.subr.mxu0 %v1772
          %2107 = vmatpush1.msra.mxu0 %v1771
          %2108 = vmatprep.subr.mxu0 %v1776
          %2109 = vmatpush1.msra.mxu0 %v1775
          %2110 = vmatprep.subr.mxu0 %v1780
          %2111 = vmatpush1.msra.mxu0 %v1779
          %2112 = vmatprep.subr.mxu0 %v1784
          %2113 = vmatpush1.msra.mxu0 %v1783
          %2114 = vmatprep.subr.mxu0 %v1788
          %2115 = vmatpush1.msra.mxu0 %v1787
          %2116 = vmatprep.subr.mxu0 %v1792
          %2117 = vmatpush1.msra.mxu0 %v1791
          %2118 = vmatprep.subr.mxu0 %v1796
          %2119 = vmatpush1.msra.mxu0 %v1795
          %2120 = vmatprep.subr.mxu0 %v1800
          %2121 = vmatpush1.msra.mxu0 %v1799
          %2122 = vmatprep.subr.mxu0 %v1804
          %2123 = vmatpush1.msra.mxu0 %v1803
          %2124 = vmatprep.subr.mxu0 %v1808
          %2125 = vmatpush1.msra.mxu0 %v1807
          %2126 = vmatprep.subr.mxu0 %v1812
          %2127 = vmatpush1.msra.mxu0 %v1811
          %2128 = vmatprep.subr.mxu0 %v1816
          %2129 = vmatpush1.msra.mxu0 %v1815
          %2130 = vmatprep.subr.mxu0 %v1820
          %2131 = vmatpush1.msra.mxu0 %v1819
          %2132 = vmatprep.subr.mxu0 %v1824
          %2133 = vmatpush1.msra.mxu0 %v1823
          %2134 = vmatprep.subr.mxu0 %v1828
          %2135 = vmatpush1.msra.mxu0 %v1827
          %2136 = vmatprep.subr.mxu0 %v1832
          %2137 = vmatpush1.msra.mxu0 %v1831
          %2138 = vmatprep.subr.mxu0 %v1836
          %2139 = vmatpush1.msra.mxu0 %v1835
          %2140 = vmatprep.subr.mxu0 %v1840
          %2141 = vmatpush1.msra.mxu0 %v1839
          %2142 = vmatprep.subr.mxu0 %v1844
          %2143 = vmatpush1.msra.mxu0 %v1843
          %2144 = vmatprep.subr.mxu0 %v1848
          %2145 = vmatpush1.msra.mxu0 %v1847
          %2146 = vmatprep.subr.mxu0 %v1852
          %2147 = vmatpush1.msra.mxu0 %v1851
          %2148 = vmatprep.subr.mxu0 %v1856
          %2149 = vmatpush1.msra.mxu0 %v1855
          %2150 = vmatprep.mubr.f32.mxu0 %v1594
          %2151 = vmatmul.mubr.f32.gmra.mrb[0].mxu0 %v1593
          %v2152 = vpop.f32.mrb[0].mxu0
          %v2153 = vadd.f32 %v2076, %v2152
          %v2154 = vpop.f32.mrb[0].mxu0
          %v2155 = vadd.f32 %v2078, %v2154
          %2156 = vmatprep.mubr.f32.mxu0 %v1600
          %2157 = vmatmul.mubr.f32.gmra.mrb[0].mxu0 %v1599
          %v2158 = vpop.f32.mrb[0].mxu0
          %v2159 = vadd.f32 %v2082, %v2158
          %v2160 = vpop.f32.mrb[0].mxu0
          %v2161 = vadd.f32 %v2084, %v2160
          %2162 = vdwg.mxu0
          %2163 = vmatprep.subr.mxu0 %v1860
          %2164 = vmatpush1.msra.mxu0 %v1859
          %2165 = vmatprep.subr.mxu0 %v1864
          %2166 = vmatpush1.msra.mxu0 %v1863
          %2167 = vmatprep.subr.mxu0 %v1868
          %2168 = vmatpush1.msra.mxu0 %v1867
          %2169 = vmatprep.subr.mxu0 %v1872
          %2170 = vmatpush1.msra.mxu0 %v1871
          %2171 = vmatprep.subr.mxu0 %v1876
          %2172 = vmatpush1.msra.mxu0 %v1875
          %2173 = vmatprep.subr.mxu0 %v1880
          %2174 = vmatpush1.msra.mxu0 %v1879
          %2175 = vmatprep.subr.mxu0 %v1884
          %2176 = vmatpush1.msra.mxu0 %v1883
          %2177 = vmatprep.subr.mxu0 %v1888
          %2178 = vmatpush1.msra.mxu0 %v1887
          %2179 = vmatprep.subr.mxu0 %v1892
          %2180 = vmatpush1.msra.mxu0 %v1891
          %2181 = vmatprep.subr.mxu0 %v1896
          %2182 = vmatpush1.msra.mxu0 %v1895
          %2183 = vmatprep.subr.mxu0 %v1900
          %2184 = vmatpush1.msra.mxu0 %v1899
          %2185 = vmatprep.subr.mxu0 %v1904
          %2186 = vmatpush1.msra.mxu0 %v1903
          %2187 = vmatprep.subr.mxu0 %v1908
          %2188 = vmatpush1.msra.mxu0 %v1907
          %2189 = vmatprep.subr.mxu0 %v1912
          %2190 = vmatpush1.msra.mxu0 %v1911
          %2191 = vmatprep.subr.mxu0 %v1916
          %2192 = vmatpush1.msra.mxu0 %v1915
          %2193 = vmatprep.subr.mxu0 %v1920
          %2194 = vmatpush1.msra.mxu0 %v1919
          %2195 = vmatprep.subr.mxu0 %v1924
          %2196 = vmatpush1.msra.mxu0 %v1923
          %2197 = vmatprep.subr.mxu0 %v1928
          %2198 = vmatpush1.msra.mxu0 %v1927
          %2199 = vmatprep.subr.mxu0 %v1932
          %2200 = vmatpush1.msra.mxu0 %v1931
          %2201 = vmatprep.subr.mxu0 %v1936
          %2202 = vmatpush1.msra.mxu0 %v1935
          %2203 = vmatprep.subr.mxu0 %v1940
          %2204 = vmatpush1.msra.mxu0 %v1939
          %2205 = vmatprep.subr.mxu0 %v1944
          %2206 = vmatpush1.msra.mxu0 %v1943
          %2207 = vmatprep.subr.mxu0 %v1948
          %2208 = vmatpush1.msra.mxu0 %v1947
          %2209 = vmatprep.subr.mxu0 %v1952
          %2210 = vmatpush1.msra.mxu0 %v1951
          %2211 = vmatprep.subr.mxu0 %v1956
          %2212 = vmatpush1.msra.mxu0 %v1955
          %2213 = vmatprep.subr.mxu0 %v1960
          %2214 = vmatpush1.msra.mxu0 %v1959
          %2215 = vmatprep.subr.mxu0 %v1964
          %2216 = vmatpush1.msra.mxu0 %v1963
          %2217 = vmatprep.subr.mxu0 %v1968
          %2218 = vmatpush1.msra.mxu0 %v1967
          %2219 = vmatprep.subr.mxu0 %v1972
          %2220 = vmatpush1.msra.mxu0 %v1971
          %2221 = vmatprep.subr.mxu0 %v1976
          %2222 = vmatpush1.msra.mxu0 %v1975
          %2223 = vmatprep.subr.mxu0 %v1980
          %2224 = vmatpush1.msra.mxu0 %v1979
          %2225 = vmatprep.subr.mxu0 %v1984
          %2226 = vmatpush1.msra.mxu0 %v1983
          %2227 = vmatprep.mubr.f32.mxu0 %v1596
          %2228 = vmatmul.mubr.f32.gmra.mrb[0].mxu0 %v1595
          %v2229 = vpop.f32.mrb[0].mxu0
          %v2230 = vadd.f32 %v2153, %v2229
          %v2231 = vpop.f32.mrb[0].mxu0
          %v2232 = vadd.f32 %v2155, %v2231
          %2233 = vmatprep.mubr.f32.mxu0 %v1602
          %2234 = vmatmul.mubr.f32.gmra.mrb[0].mxu0 %v1601
          %v2235 = vpop.f32.mrb[0].mxu0
          %v2236 = vadd.f32 %v2159, %v2235
          %v2237 = vpop.f32.mrb[0].mxu0
          %v2238 = vadd.f32 %v2161, %v2237
          %2239 = vdwg.mxu0
          %2240 = vmatprep.subr.mxu0 %v1606
          %2241 = vmatpush1.msra.mxu0 %v1605
          %2242 = vmatprep.subr.mxu0 %v1610
          %2243 = vmatpush1.msra.mxu0 %v1609
          %2244 = vmatprep.subr.mxu0 %v1614
          %2245 = vmatpush1.msra.mxu0 %v1613
          %2246 = vmatprep.subr.mxu0 %v1618
          %2247 = vmatpush1.msra.mxu0 %v1617
          %2248 = vmatprep.subr.mxu0 %v1622
          %2249 = vmatpush1.msra.mxu0 %v1621
          %2250 = vmatprep.subr.mxu0 %v1626
          %2251 = vmatpush1.msra.mxu0 %v1625
          %2252 = vmatprep.subr.mxu0 %v1630
          %2253 = vmatpush1.msra.mxu0 %v1629
          %2254 = vmatprep.subr.mxu0 %v1634
          %2255 = vmatpush1.msra.mxu0 %v1633
          %2256 = vmatprep.subr.mxu0 %v1638
          %2257 = vmatpush1.msra.mxu0 %v1637
          %2258 = vmatprep.subr.mxu0 %v1642
          %2259 = vmatpush1.msra.mxu0 %v1641
          %2260 = vmatprep.subr.mxu0 %v1646
          %2261 = vmatpush1.msra.mxu0 %v1645
          %2262 = vmatprep.subr.mxu0 %v1650
          %2263 = vmatpush1.msra.mxu0 %v1649
          %2264 = vmatprep.subr.mxu0 %v1654
          %2265 = vmatpush1.msra.mxu0 %v1653
          %2266 = vmatprep.subr.mxu0 %v1658
          %2267 = vmatpush1.msra.mxu0 %v1657
          %2268 = vmatprep.subr.mxu0 %v1662
          %2269 = vmatpush1.msra.mxu0 %v1661
          %2270 = vmatprep.subr.mxu0 %v1666
          %2271 = vmatpush1.msra.mxu0 %v1665
          %2272 = vmatprep.subr.mxu0 %v1670
          %2273 = vmatpush1.msra.mxu0 %v1669
          %2274 = vmatprep.subr.mxu0 %v1674
          %2275 = vmatpush1.msra.mxu0 %v1673
          %2276 = vmatprep.subr.mxu0 %v1678
          %2277 = vmatpush1.msra.mxu0 %v1677
          %2278 = vmatprep.subr.mxu0 %v1682
          %2279 = vmatpush1.msra.mxu0 %v1681
          %2280 = vmatprep.subr.mxu0 %v1686
          %2281 = vmatpush1.msra.mxu0 %v1685
          %2282 = vmatprep.subr.mxu0 %v1690
          %2283 = vmatpush1.msra.mxu0 %v1689
          %2284 = vmatprep.subr.mxu0 %v1694
          %2285 = vmatpush1.msra.mxu0 %v1693
          %2286 = vmatprep.subr.mxu0 %v1698
          %2287 = vmatpush1.msra.mxu0 %v1697
          %2288 = vmatprep.subr.mxu0 %v1702
          %2289 = vmatpush1.msra.mxu0 %v1701
          %2290 = vmatprep.subr.mxu0 %v1706
          %2291 = vmatpush1.msra.mxu0 %v1705
          %2292 = vmatprep.subr.mxu0 %v1710
          %2293 = vmatpush1.msra.mxu0 %v1709
          %2294 = vmatprep.subr.mxu0 %v1714
          %2295 = vmatpush1.msra.mxu0 %v1713
          %2296 = vmatprep.subr.mxu0 %v1718
          %2297 = vmatpush1.msra.mxu0 %v1717
          %2298 = vmatprep.subr.mxu0 %v1722
          %2299 = vmatpush1.msra.mxu0 %v1721
          %2300 = vmatprep.subr.mxu0 %v1726
          %2301 = vmatpush1.msra.mxu0 %v1725
          %2302 = vmatprep.subr.mxu0 %v1730
          %2303 = vmatpush1.msra.mxu0 %v1729
          %2304 = vmatprep.mubr.f32.mxu0 %v1592
          %2305 = vmatmul.mubr.f32.gmra.mrb[0].mxu0 %v1591
          %v2306 = vpop.f32.mrb[0].mxu0
          %v2307 = vadd.f32 %v2000, %v2306
          %v2308 = vpop.f32.mrb[0].mxu0
          %v2309 = vadd.f32 %v2004, %v2308
          %2310 = vmatprep.mubr.f32.mxu0 %v1598
          %2311 = vmatmul.mubr.f32.gmra.mrb[0].mxu0 %v1597
          %v2312 = vpop.f32.mrb[0].mxu0
          %v2313 = vadd.f32 %v2000, %v2312
          %v2314 = vpop.f32.mrb[0].mxu0
          %v2315 = vadd.f32 %v2004, %v2314
          %2316 = vdwg.mxu0
          %2317 = vmatprep.subr.mxu0 %v1734
          %2318 = vmatpush1.msra.mxu0 %v1733
          %2319 = vmatprep.subr.mxu0 %v1738
          %2320 = vmatpush1.msra.mxu0 %v1737
          %2321 = vmatprep.subr.mxu0 %v1742
          %2322 = vmatpush1.msra.mxu0 %v1741
          %2323 = vmatprep.subr.mxu0 %v1746
          %2324 = vmatpush1.msra.mxu0 %v1745
          %2325 = vmatprep.subr.mxu0 %v1750
          %2326 = vmatpush1.msra.mxu0 %v1749
          %2327 = vmatprep.subr.mxu0 %v1754
          %2328 = vmatpush1.msra.mxu0 %v1753
          %2329 = vmatprep.subr.mxu0 %v1758
          %2330 = vmatpush1.msra.mxu0 %v1757
          %2331 = vmatprep.subr.mxu0 %v1762
          %2332 = vmatpush1.msra.mxu0 %v1761
          %2333 = vmatprep.subr.mxu0 %v1766
          %2334 = vmatpush1.msra.mxu0 %v1765
          %2335 = vmatprep.subr.mxu0 %v1770
          %2336 = vmatpush1.msra.mxu0 %v1769
          %2337 = vmatprep.subr.mxu0 %v1774
          %2338 = vmatpush1.msra.mxu0 %v1773
          %2339 = vmatprep.subr.mxu0 %v1778
          %2340 = vmatpush1.msra.mxu0 %v1777
          %2341 = vmatprep.subr.mxu0 %v1782
          %2342 = vmatpush1.msra.mxu0 %v1781
          %2343 = vmatprep.subr.mxu0 %v1786
          %2344 = vmatpush1.msra.mxu0 %v1785
          %2345 = vmatprep.subr.mxu0 %v1790
          %2346 = vmatpush1.msra.mxu0 %v1789
          %2347 = vmatprep.subr.mxu0 %v1794
          %2348 = vmatpush1.msra.mxu0 %v1793
          %2349 = vmatprep.subr.mxu0 %v1798
          %2350 = vmatpush1.msra.mxu0 %v1797
          %2351 = vmatprep.subr.mxu0 %v1802
          %2352 = vmatpush1.msra.mxu0 %v1801
          %2353 = vmatprep.subr.mxu0 %v1806
          %2354 = vmatpush1.msra.mxu0 %v1805
          %2355 = vmatprep.subr.mxu0 %v1810
          %2356 = vmatpush1.msra.mxu0 %v1809
          %2357 = vmatprep.subr.mxu0 %v1814
          %2358 = vmatpush1.msra.mxu0 %v1813
          %2359 = vmatprep.subr.mxu0 %v1818
          %2360 = vmatpush1.msra.mxu0 %v1817
          %2361 = vmatprep.subr.mxu0 %v1822
          %2362 = vmatpush1.msra.mxu0 %v1821
          %2363 = vmatprep.subr.mxu0 %v1826
          %2364 = vmatpush1.msra.mxu0 %v1825
          %2365 = vmatprep.subr.mxu0 %v1830
          %2366 = vmatpush1.msra.mxu0 %v1829
          %2367 = vmatprep.subr.mxu0 %v1834
          %2368 = vmatpush1.msra.mxu0 %v1833
          %2369 = vmatprep.subr.mxu0 %v1838
          %2370 = vmatpush1.msra.mxu0 %v1837
          %2371 = vmatprep.subr.mxu0 %v1842
          %2372 = vmatpush1.msra.mxu0 %v1841
          %2373 = vmatprep.subr.mxu0 %v1846
          %2374 = vmatpush1.msra.mxu0 %v1845
          %2375 = vmatprep.subr.mxu0 %v1850
          %2376 = vmatpush1.msra.mxu0 %v1849
          %2377 = vmatprep.subr.mxu0 %v1854
          %2378 = vmatpush1.msra.mxu0 %v1853
          %2379 = vmatprep.subr.mxu0 %v1858
          %2380 = vmatpush1.msra.mxu0 %v1857
          %2381 = vmatprep.mubr.f32.mxu0 %v1594
          %2382 = vmatmul.mubr.f32.gmra.mrb[0].mxu0 %v1593
          %v2383 = vpop.f32.mrb[0].mxu0
          %v2384 = vadd.f32 %v2307, %v2383
          %v2385 = vpop.f32.mrb[0].mxu0
          %v2386 = vadd.f32 %v2309, %v2385
          %2387 = vmatprep.mubr.f32.mxu0 %v1600
          %2388 = vmatmul.mubr.f32.gmra.mrb[0].mxu0 %v1599
          %v2389 = vpop.f32.mrb[0].mxu0
          %v2390 = vadd.f32 %v2313, %v2389
          %v2391 = vpop.f32.mrb[0].mxu0
          %v2392 = vadd.f32 %v2315, %v2391
          %2393 = vdwg.mxu0
          %2394 = vmatprep.subr.mxu0 %v1862
          %2395 = vmatpush1.msra.mxu0 %v1861
          %2396 = vmatprep.subr.mxu0 %v1866
          %2397 = vmatpush1.msra.mxu0 %v1865
          %2398 = vmatprep.subr.mxu0 %v1870
          %2399 = vmatpush1.msra.mxu0 %v1869
          %2400 = vmatprep.subr.mxu0 %v1874
          %2401 = vmatpush1.msra.mxu0 %v1873
          %2402 = vmatprep.subr.mxu0 %v1878
          %2403 = vmatpush1.msra.mxu0 %v1877
          %2404 = vmatprep.subr.mxu0 %v1882
          %2405 = vmatpush1.msra.mxu0 %v1881
          %2406 = vmatprep.subr.mxu0 %v1886
          %2407 = vmatpush1.msra.mxu0 %v1885
          %2408 = vmatprep.subr.mxu0 %v1890
          %2409 = vmatpush1.msra.mxu0 %v1889
          %2410 = vmatprep.subr.mxu0 %v1894
          %2411 = vmatpush1.msra.mxu0 %v1893
          %2412 = vmatprep.subr.mxu0 %v1898
          %2413 = vmatpush1.msra.mxu0 %v1897
          %2414 = vmatprep.subr.mxu0 %v1902
          %2415 = vmatpush1.msra.mxu0 %v1901
          %2416 = vmatprep.subr.mxu0 %v1906
          %2417 = vmatpush1.msra.mxu0 %v1905
          %2418 = vmatprep.subr.mxu0 %v1910
          %2419 = vmatpush1.msra.mxu0 %v1909
          %2420 = vmatprep.subr.mxu0 %v1914
          %2421 = vmatpush1.msra.mxu0 %v1913
          %2422 = vmatprep.subr.mxu0 %v1918
          %2423 = vmatpush1.msra.mxu0 %v1917
          %2424 = vmatprep.subr.mxu0 %v1922
          %2425 = vmatpush1.msra.mxu0 %v1921
          %2426 = vmatprep.subr.mxu0 %v1926
          %2427 = vmatpush1.msra.mxu0 %v1925
          %2428 = vmatprep.subr.mxu0 %v1930
          %2429 = vmatpush1.msra.mxu0 %v1929
          %2430 = vmatprep.subr.mxu0 %v1934
          %2431 = vmatpush1.msra.mxu0 %v1933
          %2432 = vmatprep.subr.mxu0 %v1938
          %2433 = vmatpush1.msra.mxu0 %v1937
          %2434 = vmatprep.subr.mxu0 %v1942
          %2435 = vmatpush1.msra.mxu0 %v1941
          %2436 = vmatprep.subr.mxu0 %v1946
          %2437 = vmatpush1.msra.mxu0 %v1945
          %2438 = vmatprep.subr.mxu0 %v1950
          %2439 = vmatpush1.msra.mxu0 %v1949
          %2440 = vmatprep.subr.mxu0 %v1954
          %2441 = vmatpush1.msra.mxu0 %v1953
          %2442 = vmatprep.subr.mxu0 %v1958
          %2443 = vmatpush1.msra.mxu0 %v1957
          %2444 = vmatprep.subr.mxu0 %v1962
          %2445 = vmatpush1.msra.mxu0 %v1961
          %2446 = vmatprep.subr.mxu0 %v1966
          %2447 = vmatpush1.msra.mxu0 %v1965
          %2448 = vmatprep.subr.mxu0 %v1970
          %2449 = vmatpush1.msra.mxu0 %v1969
          %2450 = vmatprep.subr.mxu0 %v1974
          %2451 = vmatpush1.msra.mxu0 %v1973
          %2452 = vmatprep.subr.mxu0 %v1978
          %2453 = vmatpush1.msra.mxu0 %v1977
          %2454 = vmatprep.subr.mxu0 %v1982
          %2455 = vmatpush1.msra.mxu0 %v1981
          %2456 = vmatprep.subr.mxu0 %v1986
          %2457 = vmatpush1.msra.mxu0 %v1985
          %2458 = vmatprep.mubr.f32.mxu0 %v1596
          %2459 = vmatmul.mubr.f32.gmra.mrb[0].mxu0 %v1595
          %v2460 = vpop.f32.mrb[0].mxu0
          %v2461 = vadd.f32 %v2384, %v2460
          %v2462 = vpop.f32.mrb[0].mxu0
          %v2463 = vadd.f32 %v2386, %v2462
          %2464 = vmatprep.mubr.f32.mxu0 %v1602
          %2465 = vmatmul.mubr.f32.gmra.mrb[0].mxu0 %v1601
          %v2466 = vpop.f32.mrb[0].mxu0
          %v2467 = vadd.f32 %v2390, %v2466
          %v2468 = vpop.f32.mrb[0].mxu0
          %v2469 = vadd.f32 %v2392, %v2468
          %2470 = vdwg.mxu0
          %v2471 = vtanh.pop %v2230
          %v2472 = vtanh.pop %v2232
          %v2473 = vtanh.pop %v2461
          %v2474 = vtanh.pop %v2463
          %v2475 = vtanh.pop %v2236
          %v2476 = vtanh.pop %v2238
          %v2477 = vtanh.pop %v2467
          %v2478 = vtanh.pop %v2469
          %v2479 = vld [vmem:[#allocation10] sm:$0xff]
          %v2480 = vld [vmem:[#allocation10 + $0x8] sm:$0xff]
          %v2481 = vld [vmem:[#allocation10 + $0x10] sm:$0xff]
          %v2482 = vld [vmem:[#allocation10 + $0x18] sm:$0xff]
          %v2483 = vld [vmem:[#allocation10 + $0x20] sm:$0xff]
          %v2484 = vld [vmem:[#allocation10 + $0x28] sm:$0xff]
          %v2485 = vld [vmem:[#allocation10 + $0x30] sm:$0xff]
          %v2486 = vld [vmem:[#allocation10 + $0x38] sm:$0xff]
          %v2487 = vld [vmem:[#allocation10 + $0x40] sm:$0xff]
          %v2488 = vld [vmem:[#allocation10 + $0x48] sm:$0xff]
          %v2489 = vld [vmem:[#allocation10 + $0x50] sm:$0xff]
          %v2490 = vld [vmem:[#allocation10 + $0x58] sm:$0xff]
          %v2491 = vld [vmem:[#allocation10 + $0x60] sm:$0xff]
          %v2492 = vld [vmem:[#allocation10 + $0x68] sm:$0xff]
          %v2493 = vld [vmem:[#allocation10 + $0x70] sm:$0xff]
          %v2494 = vld [vmem:[#allocation10 + $0x78] sm:$0xff]
          %v2495 = vld [vmem:[#allocation10 + $0x80] sm:$0xff]
          %v2496 = vld [vmem:[#allocation10 + $0x88] sm:$0xff]
          %v2497 = vld [vmem:[#allocation10 + $0x90] sm:$0xff]
          %v2498 = vld [vmem:[#allocation10 + $0x98] sm:$0xff]
          %v2499 = vld [vmem:[#allocation10 + $0xa0] sm:$0xff]
          %v2500 = vld [vmem:[#allocation10 + $0xa8] sm:$0xff]
          %v2501 = vld [vmem:[#allocation10 + $0xb0] sm:$0xff]
          %v2502 = vld [vmem:[#allocation10 + $0xb8] sm:$0xff]
          %v2503 = vld [vmem:[#allocation10 + $0xc0] sm:$0xff]
          %v2504 = vld [vmem:[#allocation10 + $0xc8] sm:$0xff]
          %v2505 = vld [vmem:[#allocation10 + $0xd0] sm:$0xff]
          %v2506 = vld [vmem:[#allocation10 + $0xd8] sm:$0xff]
          %v2507 = vld [vmem:[#allocation10 + $0xe0] sm:$0xff]
          %v2508 = vld [vmem:[#allocation10 + $0xe8] sm:$0xff]
          %v2509 = vld [vmem:[#allocation10 + $0xf0] sm:$0xff]
          %v2510 = vld [vmem:[#allocation10 + $0xf8] sm:$0xff]
          %v2511 = vld [vmem:[#allocation10 + $0x100] sm:$0xff]
          %v2512 = vld [vmem:[#allocation10 + $0x108] sm:$0xff]
          %v2513 = vld [vmem:[#allocation10 + $0x110] sm:$0xff]
          %v2514 = vld [vmem:[#allocation10 + $0x118] sm:$0xff]
          %v2515 = vld [vmem:[#allocation10 + $0x120] sm:$0xff]
          %v2516 = vld [vmem:[#allocation10 + $0x128] sm:$0xff]
          %v2517 = vld [vmem:[#allocation10 + $0x130] sm:$0xff]
          %v2518 = vld [vmem:[#allocation10 + $0x138] sm:$0xff]
          %v2519 = vld [vmem:[#allocation10 + $0x140] sm:$0xff]
          %v2520 = vld [vmem:[#allocation10 + $0x148] sm:$0xff]
          %v2521 = vld [vmem:[#allocation10 + $0x150] sm:$0xff]
          %v2522 = vld [vmem:[#allocation10 + $0x158] sm:$0xff]
          %v2523 = vld [vmem:[#allocation10 + $0x160] sm:$0xff]
          %v2524 = vld [vmem:[#allocation10 + $0x168] sm:$0xff]
          %v2525 = vld [vmem:[#allocation10 + $0x170] sm:$0xff]
          %v2526 = vld [vmem:[#allocation10 + $0x178] sm:$0xff]
          %v2527 = vld [vmem:[#allocation10 + $0x180] sm:$0xff]
          %v2528 = vld [vmem:[#allocation10 + $0x188] sm:$0xff]
          %v2529 = vld [vmem:[#allocation10 + $0x190] sm:$0xff]
          %v2530 = vld [vmem:[#allocation10 + $0x198] sm:$0xff]
          %v2531 = vld [vmem:[#allocation10 + $0x1a0] sm:$0xff]
          %v2532 = vld [vmem:[#allocation10 + $0x1a8] sm:$0xff]
          %v2533 = vld [vmem:[#allocation10 + $0x1b0] sm:$0xff]
          %v2534 = vld [vmem:[#allocation10 + $0x1b8] sm:$0xff]
          %v2535 = vld [vmem:[#allocation10 + $0x1c0] sm:$0xff]
          %v2536 = vld [vmem:[#allocation10 + $0x1c8] sm:$0xff]
          %v2537 = vld [vmem:[#allocation10 + $0x1d0] sm:$0xff]
          %v2538 = vld [vmem:[#allocation10 + $0x1d8] sm:$0xff]
          %v2539 = vld [vmem:[#allocation10 + $0x1e0] sm:$0xff]
          %v2540 = vld [vmem:[#allocation10 + $0x1e8] sm:$0xff]
          %v2541 = vld [vmem:[#allocation10 + $0x1f0] sm:$0xff]
          %v2542 = vld [vmem:[#allocation10 + $0x1f8] sm:$0xff]
          %v2543 = vld [vmem:[#allocation10 + $0x200] sm:$0xff]
          %v2544 = vld [vmem:[#allocation10 + $0x208] sm:$0xff]
          %v2545 = vld [vmem:[#allocation10 + $0x210] sm:$0xff]
          %v2546 = vld [vmem:[#allocation10 + $0x218] sm:$0xff]
          %v2547 = vld [vmem:[#allocation10 + $0x220] sm:$0xff]
          %v2548 = vld [vmem:[#allocation10 + $0x228] sm:$0xff]
          %v2549 = vld [vmem:[#allocation10 + $0x230] sm:$0xff]
          %v2550 = vld [vmem:[#allocation10 + $0x238] sm:$0xff]
          %v2551 = vld [vmem:[#allocation10 + $0x240] sm:$0xff]
          %v2552 = vld [vmem:[#allocation10 + $0x248] sm:$0xff]
          %v2553 = vld [vmem:[#allocation10 + $0x250] sm:$0xff]
          %v2554 = vld [vmem:[#allocation10 + $0x258] sm:$0xff]
          %v2555 = vld [vmem:[#allocation10 + $0x260] sm:$0xff]
          %v2556 = vld [vmem:[#allocation10 + $0x268] sm:$0xff]
          %v2557 = vld [vmem:[#allocation10 + $0x270] sm:$0xff]
          %v2558 = vld [vmem:[#allocation10 + $0x278] sm:$0xff]
          %v2559 = vld [vmem:[#allocation10 + $0x280] sm:$0xff]
          %v2560 = vld [vmem:[#allocation10 + $0x288] sm:$0xff]
          %v2561 = vld [vmem:[#allocation10 + $0x290] sm:$0xff]
          %v2562 = vld [vmem:[#allocation10 + $0x298] sm:$0xff]
          %v2563 = vld [vmem:[#allocation10 + $0x2a0] sm:$0xff]
          %v2564 = vld [vmem:[#allocation10 + $0x2a8] sm:$0xff]
          %v2565 = vld [vmem:[#allocation10 + $0x2b0] sm:$0xff]
          %v2566 = vld [vmem:[#allocation10 + $0x2b8] sm:$0xff]
          %v2567 = vld [vmem:[#allocation10 + $0x2c0] sm:$0xff]
          %v2568 = vld [vmem:[#allocation10 + $0x2c8] sm:$0xff]
          %v2569 = vld [vmem:[#allocation10 + $0x2d0] sm:$0xff]
          %v2570 = vld [vmem:[#allocation10 + $0x2d8] sm:$0xff]
          %v2571 = vld [vmem:[#allocation10 + $0x2e0] sm:$0xff]
          %v2572 = vld [vmem:[#allocation10 + $0x2e8] sm:$0xff]
          %v2573 = vld [vmem:[#allocation10 + $0x2f0] sm:$0xff]
          %v2574 = vld [vmem:[#allocation10 + $0x2f8] sm:$0xff]
          %v2575 = vld [vmem:[#allocation10 + $0x300] sm:$0xff]
          %v2576 = vld [vmem:[#allocation10 + $0x308] sm:$0xff]
          %v2577 = vld [vmem:[#allocation10 + $0x310] sm:$0xff]
          %v2578 = vld [vmem:[#allocation10 + $0x318] sm:$0xff]
          %v2579 = vld [vmem:[#allocation10 + $0x320] sm:$0xff]
          %v2580 = vld [vmem:[#allocation10 + $0x328] sm:$0xff]
          %v2581 = vld [vmem:[#allocation10 + $0x330] sm:$0xff]
          %v2582 = vld [vmem:[#allocation10 + $0x338] sm:$0xff]
          %v2583 = vld [vmem:[#allocation10 + $0x340] sm:$0xff]
          %v2584 = vld [vmem:[#allocation10 + $0x348] sm:$0xff]
          %v2585 = vld [vmem:[#allocation10 + $0x350] sm:$0xff]
          %v2586 = vld [vmem:[#allocation10 + $0x358] sm:$0xff]
          %v2587 = vld [vmem:[#allocation10 + $0x360] sm:$0xff]
          %v2588 = vld [vmem:[#allocation10 + $0x368] sm:$0xff]
          %v2589 = vld [vmem:[#allocation10 + $0x370] sm:$0xff]
          %v2590 = vld [vmem:[#allocation10 + $0x378] sm:$0xff]
          %v2591 = vld [vmem:[#allocation10 + $0x380] sm:$0xff]
          %v2592 = vld [vmem:[#allocation10 + $0x388] sm:$0xff]
          %v2593 = vld [vmem:[#allocation10 + $0x390] sm:$0xff]
          %v2594 = vld [vmem:[#allocation10 + $0x398] sm:$0xff]
          %v2595 = vld [vmem:[#allocation10 + $0x3a0] sm:$0xff]
          %v2596 = vld [vmem:[#allocation10 + $0x3a8] sm:$0xff]
          %v2597 = vld [vmem:[#allocation10 + $0x3b0] sm:$0xff]
          %v2598 = vld [vmem:[#allocation10 + $0x3b8] sm:$0xff]
          %v2599 = vld [vmem:[#allocation10 + $0x3c0] sm:$0xff]
          %v2600 = vld [vmem:[#allocation10 + $0x3c8] sm:$0xff]
          %v2601 = vld [vmem:[#allocation10 + $0x3d0] sm:$0xff]
          %v2602 = vld [vmem:[#allocation10 + $0x3d8] sm:$0xff]
          %v2603 = vld [vmem:[#allocation10 + $0x3e0] sm:$0xff]
          %v2604 = vld [vmem:[#allocation10 + $0x3e8] sm:$0xff]
          %v2605 = vld [vmem:[#allocation10 + $0x3f0] sm:$0xff]
          %v2606 = vld [vmem:[#allocation10 + $0x3f8] sm:$0xff]
          %v2607 = vld [vmem:[#allocation11] sm:$0x3]
          %v2609 = vlaneseq
          %v2610 = vshrl.u32 %v2609, 7
          %v2611 = vsub.s32 0, %v2610
          %v2612 = vrot.slane %v2607, %v2611
          %v2613 = vlaneseq
          %v2614 = vshrl.u32 %v2613, 7
          %v2615 = vsub.s32 1, %v2614
          %v2616 = vrot.slane %v2607, %v2615
          %2619 = vmatprep.subr.mxu0 %v2480
          %2620 = vmatpush1.msra.mxu0 %v2479
          %2621 = vmatprep.subr.mxu0 %v2482
          %2622 = vmatpush1.msra.mxu0 %v2481
          %2623 = vmatprep.subr.mxu0 %v2484
          %2624 = vmatpush1.msra.mxu0 %v2483
          %2625 = vmatprep.subr.mxu0 %v2486
          %2626 = vmatpush1.msra.mxu0 %v2485
          %2627 = vmatprep.subr.mxu0 %v2488
          %2628 = vmatpush1.msra.mxu0 %v2487
          %2629 = vmatprep.subr.mxu0 %v2490
          %2630 = vmatpush1.msra.mxu0 %v2489
          %2631 = vmatprep.subr.mxu0 %v2492
          %2632 = vmatpush1.msra.mxu0 %v2491
          %2633 = vmatprep.subr.mxu0 %v2494
          %2634 = vmatpush1.msra.mxu0 %v2493
          %2635 = vmatprep.subr.mxu0 %v2496
          %2636 = vmatpush1.msra.mxu0 %v2495
          %2637 = vmatprep.subr.mxu0 %v2498
          %2638 = vmatpush1.msra.mxu0 %v2497
          %2639 = vmatprep.subr.mxu0 %v2500
          %2640 = vmatpush1.msra.mxu0 %v2499
          %2641 = vmatprep.subr.mxu0 %v2502
          %2642 = vmatpush1.msra.mxu0 %v2501
          %2643 = vmatprep.subr.mxu0 %v2504
          %2644 = vmatpush1.msra.mxu0 %v2503
          %2645 = vmatprep.subr.mxu0 %v2506
          %2646 = vmatpush1.msra.mxu0 %v2505
          %2647 = vmatprep.subr.mxu0 %v2508
          %2648 = vmatpush1.msra.mxu0 %v2507
          %2649 = vmatprep.subr.mxu0 %v2510
          %2650 = vmatpush1.msra.mxu0 %v2509
          %2651 = vmatprep.subr.mxu0 %v2512
          %2652 = vmatpush1.msra.mxu0 %v2511
          %2653 = vmatprep.subr.mxu0 %v2514
          %2654 = vmatpush1.msra.mxu0 %v2513
          %2655 = vmatprep.subr.mxu0 %v2516
          %2656 = vmatpush1.msra.mxu0 %v2515
          %2657 = vmatprep.subr.mxu0 %v2518
          %2658 = vmatpush1.msra.mxu0 %v2517
          %2659 = vmatprep.subr.mxu0 %v2520
          %2660 = vmatpush1.msra.mxu0 %v2519
          %2661 = vmatprep.subr.mxu0 %v2522
          %2662 = vmatpush1.msra.mxu0 %v2521
          %2663 = vmatprep.subr.mxu0 %v2524
          %2664 = vmatpush1.msra.mxu0 %v2523
          %2665 = vmatprep.subr.mxu0 %v2526
          %2666 = vmatpush1.msra.mxu0 %v2525
          %2667 = vmatprep.subr.mxu0 %v2528
          %2668 = vmatpush1.msra.mxu0 %v2527
          %2669 = vmatprep.subr.mxu0 %v2530
          %2670 = vmatpush1.msra.mxu0 %v2529
          %2671 = vmatprep.subr.mxu0 %v2532
          %2672 = vmatpush1.msra.mxu0 %v2531
          %2673 = vmatprep.subr.mxu0 %v2534
          %2674 = vmatpush1.msra.mxu0 %v2533
          %2675 = vmatprep.subr.mxu0 %v2536
          %2676 = vmatpush1.msra.mxu0 %v2535
          %2677 = vmatprep.subr.mxu0 %v2538
          %2678 = vmatpush1.msra.mxu0 %v2537
          %2679 = vmatprep.subr.mxu0 %v2540
          %2680 = vmatpush1.msra.mxu0 %v2539
          %2681 = vmatprep.subr.mxu0 %v2542
          %2682 = vmatpush1.msra.mxu0 %v2541
          %2683 = vmatprep.mubr.f32.mxu0 %v2472
          %2684 = vmatmul.mubr.f32.gmra.mrb[0].mxu0 %v2471
          %v2685 = vpop.f32.mrb[0].mxu0
          %v2686 = vadd.f32 %v2612, %v2685
          %v2687 = vpop.f32.mrb[0].mxu0
          %v2688 = vadd.f32 %v2616, %v2687
          %2689 = vmatprep.mubr.f32.mxu0 %v2476
          %2690 = vmatmul.mubr.f32.gmra.mrb[0].mxu0 %v2475
          %v2691 = vpop.f32.mrb[0].mxu0
          %v2692 = vadd.f32 %v2612, %v2691
          %v2693 = vpop.f32.mrb[0].mxu0
          %v2694 = vadd.f32 %v2616, %v2693
          %2695 = vdwg.mxu0
          %2696 = vmatprep.subr.mxu0 %v2544
          %2697 = vmatpush1.msra.mxu0 %v2543
          %2698 = vmatprep.subr.mxu0 %v2546
          %2699 = vmatpush1.msra.mxu0 %v2545
          %2700 = vmatprep.subr.mxu0 %v2548
          %2701 = vmatpush1.msra.mxu0 %v2547
          %2702 = vmatprep.subr.mxu0 %v2550
          %2703 = vmatpush1.msra.mxu0 %v2549
          %2704 = vmatprep.subr.mxu0 %v2552
          %2705 = vmatpush1.msra.mxu0 %v2551
          %2706 = vmatprep.subr.mxu0 %v2554
          %2707 = vmatpush1.msra.mxu0 %v2553
          %2708 = vmatprep.subr.mxu0 %v2556
          %2709 = vmatpush1.msra.mxu0 %v2555
          %2710 = vmatprep.subr.mxu0 %v2558
          %2711 = vmatpush1.msra.mxu0 %v2557
          %2712 = vmatprep.subr.mxu0 %v2560
          %2713 = vmatpush1.msra.mxu0 %v2559
          %2714 = vmatprep.subr.mxu0 %v2562
          %2715 = vmatpush1.msra.mxu0 %v2561
          %2716 = vmatprep.subr.mxu0 %v2564
          %2717 = vmatpush1.msra.mxu0 %v2563
          %2718 = vmatprep.subr.mxu0 %v2566
          %2719 = vmatpush1.msra.mxu0 %v2565
          %2720 = vmatprep.subr.mxu0 %v2568
          %2721 = vmatpush1.msra.mxu0 %v2567
          %2722 = vmatprep.subr.mxu0 %v2570
          %2723 = vmatpush1.msra.mxu0 %v2569
          %2724 = vmatprep.subr.mxu0 %v2572
          %2725 = vmatpush1.msra.mxu0 %v2571
          %2726 = vmatprep.subr.mxu0 %v2574
          %2727 = vmatpush1.msra.mxu0 %v2573
          %2728 = vmatprep.subr.mxu0 %v2576
          %2729 = vmatpush1.msra.mxu0 %v2575
          %2730 = vmatprep.subr.mxu0 %v2578
          %2731 = vmatpush1.msra.mxu0 %v2577
          %2732 = vmatprep.subr.mxu0 %v2580
          %2733 = vmatpush1.msra.mxu0 %v2579
          %2734 = vmatprep.subr.mxu0 %v2582
          %2735 = vmatpush1.msra.mxu0 %v2581
          %2736 = vmatprep.subr.mxu0 %v2584
          %2737 = vmatpush1.msra.mxu0 %v2583
          %2738 = vmatprep.subr.mxu0 %v2586
          %2739 = vmatpush1.msra.mxu0 %v2585
          %2740 = vmatprep.subr.mxu0 %v2588
          %2741 = vmatpush1.msra.mxu0 %v2587
          %2742 = vmatprep.subr.mxu0 %v2590
          %2743 = vmatpush1.msra.mxu0 %v2589
          %2744 = vmatprep.subr.mxu0 %v2592
          %2745 = vmatpush1.msra.mxu0 %v2591
          %2746 = vmatprep.subr.mxu0 %v2594
          %2747 = vmatpush1.msra.mxu0 %v2593
          %2748 = vmatprep.subr.mxu0 %v2596
          %2749 = vmatpush1.msra.mxu0 %v2595
          %2750 = vmatprep.subr.mxu0 %v2598
          %2751 = vmatpush1.msra.mxu0 %v2597
          %2752 = vmatprep.subr.mxu0 %v2600
          %2753 = vmatpush1.msra.mxu0 %v2599
          %2754 = vmatprep.subr.mxu0 %v2602
          %2755 = vmatpush1.msra.mxu0 %v2601
          %2756 = vmatprep.subr.mxu0 %v2604
          %2757 = vmatpush1.msra.mxu0 %v2603
          %2758 = vmatprep.subr.mxu0 %v2606
          %2759 = vmatpush1.msra.mxu0 %v2605
          %2760 = vmatprep.mubr.f32.mxu0 %v2474
          %2761 = vmatmul.mubr.f32.gmra.mrb[0].mxu0 %v2473
          %v2762 = vpop.f32.mrb[0].mxu0
          %v2763 = vadd.f32 %v2686, %v2762
          %v2764 = vpop.f32.mrb[0].mxu0
          %v2765 = vadd.f32 %v2688, %v2764
          %2766 = vmatprep.mubr.f32.mxu0 %v2478
          %2767 = vmatmul.mubr.f32.gmra.mrb[0].mxu0 %v2477
          %v2768 = vpop.f32.mrb[0].mxu0
          %v2769 = vadd.f32 %v2692, %v2768
          %v2770 = vpop.f32.mrb[0].mxu0
          %v2771 = vadd.f32 %v2694, %v2770
          %2772 = vdwg.mxu0
          %v2773 = vtanh.pop %v2763
          %v2774 = vtanh.pop %v2765
          %v2775 = vtanh.pop %v2769
          %v2776 = vtanh.pop %v2771
          %v2777 = vld [vmem:[#allocation13] sm:$0xff]
          %v2778 = vld [vmem:[#allocation13 + $0x8] sm:$0xff]
          %v2779 = vld [vmem:[#allocation13 + $0x10] sm:$0xff]
          %v2780 = vld [vmem:[#allocation13 + $0x18] sm:$0xff]
          %v2781 = vld [vmem:[#allocation13 + $0x20] sm:$0xff]
          %v2782 = vld [vmem:[#allocation13 + $0x28] sm:$0xff]
          %v2783 = vld [vmem:[#allocation13 + $0x30] sm:$0xff]
          %v2784 = vld [vmem:[#allocation13 + $0x38] sm:$0xff]
          %v2785 = vld [vmem:[#allocation13 + $0x40] sm:$0xff]
          %v2786 = vld [vmem:[#allocation13 + $0x48] sm:$0xff]
          %v2787 = vld [vmem:[#allocation13 + $0x50] sm:$0xff]
          %v2788 = vld [vmem:[#allocation13 + $0x58] sm:$0xff]
          %v2789 = vld [vmem:[#allocation13 + $0x60] sm:$0xff]
          %v2790 = vld [vmem:[#allocation13 + $0x68] sm:$0xff]
          %v2791 = vld [vmem:[#allocation13 + $0x70] sm:$0xff]
          %v2792 = vld [vmem:[#allocation13 + $0x78] sm:$0xff]
          %v2793 = vld [vmem:[#allocation13 + $0x80] sm:$0xff]
          %v2794 = vld [vmem:[#allocation13 + $0x88] sm:$0xff]
          %v2795 = vld [vmem:[#allocation13 + $0x90] sm:$0xff]
          %v2796 = vld [vmem:[#allocation13 + $0x98] sm:$0xff]
          %v2797 = vld [vmem:[#allocation13 + $0xa0] sm:$0xff]
          %v2798 = vld [vmem:[#allocation13 + $0xa8] sm:$0xff]
          %v2799 = vld [vmem:[#allocation13 + $0xb0] sm:$0xff]
          %v2800 = vld [vmem:[#allocation13 + $0xb8] sm:$0xff]
          %v2801 = vld [vmem:[#allocation13 + $0xc0] sm:$0xff]
          %v2802 = vld [vmem:[#allocation13 + $0xc8] sm:$0xff]
          %v2803 = vld [vmem:[#allocation13 + $0xd0] sm:$0xff]
          %v2804 = vld [vmem:[#allocation13 + $0xd8] sm:$0xff]
          %v2805 = vld [vmem:[#allocation13 + $0xe0] sm:$0xff]
          %v2806 = vld [vmem:[#allocation13 + $0xe8] sm:$0xff]
          %v2807 = vld [vmem:[#allocation13 + $0xf0] sm:$0xff]
          %v2808 = vld [vmem:[#allocation13 + $0xf8] sm:$0xff]
          %v2809 = vld [vmem:[#allocation14] sm:$0x1]
          %v2811 = vlaneseq
          %v2812 = vshrl.u32 %v2811, 7
          %v2813 = vsub.s32 0, %v2812
          %v2814 = vrot.slane %v2809, %v2813
          %2816 = vmatprep.subr.mxu0 0.0
          %2817 = vmatpush1.msra.mxu0 %v2777
          %2818 = vmatprep.subr.mxu0 0.0
          %2819 = vmatpush1.msra.mxu0 %v2778
          %2820 = vmatprep.subr.mxu0 0.0
          %2821 = vmatpush1.msra.mxu0 %v2779
          %2822 = vmatprep.subr.mxu0 0.0
          %2823 = vmatpush1.msra.mxu0 %v2780
          %2824 = vmatprep.subr.mxu0 0.0
          %2825 = vmatpush1.msra.mxu0 %v2781
          %2826 = vmatprep.subr.mxu0 0.0
          %2827 = vmatpush1.msra.mxu0 %v2782
          %2828 = vmatprep.subr.mxu0 0.0
          %2829 = vmatpush1.msra.mxu0 %v2783
          %2830 = vmatprep.subr.mxu0 0.0
          %2831 = vmatpush1.msra.mxu0 %v2784
          %2832 = vmatprep.subr.mxu0 0.0
          %2833 = vmatpush1.msra.mxu0 %v2785
          %2834 = vmatprep.subr.mxu0 0.0
          %2835 = vmatpush1.msra.mxu0 %v2786
          %2836 = vmatprep.subr.mxu0 0.0
          %2837 = vmatpush1.msra.mxu0 %v2787
          %2838 = vmatprep.subr.mxu0 0.0
          %2839 = vmatpush1.msra.mxu0 %v2788
          %2840 = vmatprep.subr.mxu0 0.0
          %2841 = vmatpush1.msra.mxu0 %v2789
          %2842 = vmatprep.subr.mxu0 0.0
          %2843 = vmatpush1.msra.mxu0 %v2790
          %2844 = vmatprep.subr.mxu0 0.0
          %2845 = vmatpush1.msra.mxu0 %v2791
          %2846 = vmatprep.subr.mxu0 0.0
          %2847 = vmatpush1.msra.mxu0 %v2792
          %2848 = vmatprep.subr.mxu0 0.0
          %2849 = vmatpush1.msra.mxu0 %v2793
          %2850 = vmatprep.subr.mxu0 0.0
          %2851 = vmatpush1.msra.mxu0 %v2794
          %2852 = vmatprep.subr.mxu0 0.0
          %2853 = vmatpush1.msra.mxu0 %v2795
          %2854 = vmatprep.subr.mxu0 0.0
          %2855 = vmatpush1.msra.mxu0 %v2796
          %2856 = vmatprep.subr.mxu0 0.0
          %2857 = vmatpush1.msra.mxu0 %v2797
          %2858 = vmatprep.subr.mxu0 0.0
          %2859 = vmatpush1.msra.mxu0 %v2798
          %2860 = vmatprep.subr.mxu0 0.0
          %2861 = vmatpush1.msra.mxu0 %v2799
          %2862 = vmatprep.subr.mxu0 0.0
          %2863 = vmatpush1.msra.mxu0 %v2800
          %2864 = vmatprep.subr.mxu0 0.0
          %2865 = vmatpush1.msra.mxu0 %v2801
          %2866 = vmatprep.subr.mxu0 0.0
          %2867 = vmatpush1.msra.mxu0 %v2802
          %2868 = vmatprep.subr.mxu0 0.0
          %2869 = vmatpush1.msra.mxu0 %v2803
          %2870 = vmatprep.subr.mxu0 0.0
          %2871 = vmatpush1.msra.mxu0 %v2804
          %2872 = vmatprep.subr.mxu0 0.0
          %2873 = vmatpush1.msra.mxu0 %v2805
          %2874 = vmatprep.subr.mxu0 0.0
          %2875 = vmatpush1.msra.mxu0 %v2806
          %2876 = vmatprep.subr.mxu0 0.0
          %2877 = vmatpush1.msra.mxu0 %v2807
          %2878 = vmatprep.subr.mxu0 0.0
          %2879 = vmatpush1.msra.mxu0 %v2808
          %2880 = vmatprep.mubr.f32.mxu0 %v2774
          %2881 = vmatmul.mubr.f32.gmra.mrb[0].mxu0 %v2773
          %v2882 = vpop.f32.mrb[0].mxu0
          %v2883 = vadd.f32 %v2814, %v2882
          %v2884 = vpop.f32.mrb[0].mxu0
          %2885 = vmatprep.mubr.f32.mxu0 %v2776
          %2886 = vmatmul.mubr.f32.gmra.mrb[0].mxu0 %v2775
          %v2887 = vpop.f32.mrb[0].mxu0
          %v2888 = vadd.f32 %v2814, %v2887
          %v2889 = vpop.f32.mrb[0].mxu0
          %2890 = vdwg.mxu0
          %v2891 = vtanh.pop %v2883
          %v2892 = vtanh.pop %v2888
          %v2893 = vmul.f32 %v2891, %v2892
          %2894 = vadd.xlane.f32.xlu0 %v2893
          %v2895 = vpop.xlane.xlu0 %2894
          %v2896 = vmul.f32 %v2891, %v2891
          %2897 = vadd.xlane.f32.xlu0 %v2896
          %v2898 = vpop.xlane.xlu0 %2897
          %v2899 = vmul.f32 %v2892, %v2892
          %2900 = vadd.xlane.f32.xlu0 %v2899
          %v2901 = vpop.xlane.xlu0 %2900
          %v2902 = vmax.f32 %v2898, 1e-16
          %v2903 = vrsqrt.pop %v2902
          %v2904 = vmul.f32 %v2895, %v2903
          %v2905 = vmax.f32 %v2901, 1e-16
          %v2906 = vrsqrt.pop %v2905
          %v2907 = vmul.f32 %v2904, %v2906
          %v2908 = vmax.f32 %v2907, 0.0
          %vm2909 = vcmask 7168
          %2910 = vst.msk [vmem:[%s472] sm:$0xff] %vm2909, %v2908
        $region92: #{tpu_custom_call.1} parent=51 // pred_fallthru
          _
        %p2911 = scmp.lt.s32.totalorder %s32, 1
        %s2912 = scalar_select %p2911, %s32, 1
        %s2913 = smul.addr %s2912, 8
        %s2914 = scalar_lea.vmem %s8, %s2913
        // Predicated region
        $region93: #{tpu_custom_call.1} parent=51 // pred_check
          %p2915 = pneg %p240
        $region94: #{tpu_custom_call.1} parent=51 // pred_check_branch
          %2917 = sbr.rel (%p2915) target = $region96
        $region95: #{tpu_custom_call.1} parent=51 // pred_region
          _
        $region96: #{tpu_custom_call.1} parent=51 // pred_fallthru
          _
      $region52: #{tpu_custom_call.1} parent=5 // pred_fallthru
        _
      %p2918 = scmp.le.s32.totalorder 2, %s23
      // Predicated region
      $region97: #{tpu_custom_call.1} parent=5 // pred_check
        %p2919 = pneg %p2918
      $region98: #{tpu_custom_call.1} parent=5 // pred_check_branch
        %2921 = sbr.rel (%p2919) target = $region100
      $region99: #{tpu_custom_call.1} parent=5 // pred_region
        %s2922 = ssub.s32 %s23, 2
        // Predicated region
        $region101: #{tpu_custom_call.1} parent=99 // pred_check
          %p2923 = pneg %p246
        $region102: #{tpu_custom_call.1} parent=99 // pred_check_branch
          %2925 = sbr.rel (%p2923) target = $region104
        $region103: #{tpu_custom_call.1} parent=99 // pred_region
          %p2926 = scmp.lt.s32.totalorder %s34, 1
          %s2927 = scalar_select %p2926, %s34, 1
          %s2928 = smul.addr %s2927, 8
          %s2929 = scalar_lea.vmem %s8, %s2928
        $region104: #{tpu_custom_call.1} parent=99 // pred_fallthru
          _
      $region100: #{tpu_custom_call.1} parent=5 // pred_fallthru
        _
    $region6: #{tpu_custom_call.1} parent=1 // loop_footer
      %s27 = sadd.s32 1, %s23
    $region7: #{tpu_custom_call.1} parent=1 // loop_footer_branch
      %22 = sbr.rel target = $region3
    $region8: #{tpu_custom_call.1} parent=1 // loop_exit
      _
    %2930 = vsyncpa [#allocation4], 1
    %s2931 = scalar_lea.sflag [#allocation4], 1
    %2932 = vsyncpa %s2931, 1
    %2933 = vsyncpa [#allocation6], 1
    %s2934 = scalar_lea.sflag [#allocation6], 1
    %2935 = vsyncpa %s2934, 1
    %2936 = vsyncpa [#allocation9], 1
    %2937 = vsyncpa [#allocation12], 1
    %2938 = vsyncpa [#allocation15], 1

</llo_original>
